<compile_context>
chip_gen: v7x
topology: tpu7x:2x2x1
jax: 0.10.0
libtpu: 0.0.40
codegen_flags: <defaults>
</compile_context>

<pallas_src>
import math
import functools

import jax
import jax.numpy as jnp
from jax import lax
from jax.experimental import pallas as pl
from jax.experimental.pallas import tpu as pltpu


# --------------------------------------------------------------------------
# 2D positional encoding (JAX port of the PyTorch helper; constant setup,
# computed once outside the kernel and added to x inside the kernel).
# --------------------------------------------------------------------------
def positional_encoding_2d(d_model, height, width, dtype=jnp.float32):
    if d_model % 4 != 0:
        raise ValueError(
            "Cannot use sin/cos positional encoding with odd dimension "
            f"(got dim={d_model})")
    half = d_model // 2
    n = half // 2
    div_term = jnp.exp(
        jnp.arange(0.0, half, 2.0, dtype=dtype) * -(math.log(10000.0) / half))
    pos_w = jnp.arange(0.0, width, dtype=dtype)[:, None]    # (W, 1)
    pos_h = jnp.arange(0.0, height, dtype=dtype)[:, None]   # (H, 1)

    sin_w = jnp.broadcast_to(jnp.sin(pos_w * div_term).T[:, None, :],
                             (n, height, width))
    cos_w = jnp.broadcast_to(jnp.cos(pos_w * div_term).T[:, None, :],
                             (n, height, width))
    sin_h = jnp.broadcast_to(jnp.sin(pos_h * div_term).T[:, :, None],
                             (n, height, width))
    cos_h = jnp.broadcast_to(jnp.cos(pos_h * div_term).T[:, :, None],
                             (n, height, width))

    pe = jnp.zeros((d_model, height, width), dtype)
    pe = pe.at[0:half:2].set(sin_w)
    pe = pe.at[1:half:2].set(cos_w)
    pe = pe.at[half::2].set(sin_h)
    pe = pe.at[half + 1::2].set(cos_h)
    return pe


def _single_tensorcore_chip():
    """True on chips with one TensorCore (v5e/v6e) -> fold batch into 1 step."""
    try:
        kind = jax.devices()[0].device_kind.lower()
        return ("lite" in kind) or ("v5e" in kind) or ("v6" in kind)
    except Exception:  # unknown platform: keep the verified grid=(B,) path
        return False


# --------------------------------------------------------------------------
# Pallas kernel: full MHSA block for `batch_per_step` batch elements,
# channels-major layout.
# --------------------------------------------------------------------------
def _make_mhsa_kernel(heads, d_model, d_k, batch_per_step, with_pe):
    scale = 1.0 / math.sqrt(d_k)
    bf16 = jnp.bfloat16

    def body(x_ref, pe_ref, wqkv_ref, bqkv_ref, wo_ref, bo_ref, o_ref,
             head_ref):
        # x_ref   : (batch_per_step, C, S)  channels-major tokens
        # pe_ref  : (C, S) or None          2D positional encoding (flattened)
        # wqkv_ref: (3C, C)  stacked [Wq; Wk; Wv] (PyTorch (out, in) layout)
        # bqkv_ref: (3C, 1)
        # wo_ref  : (C, C), bo_ref: (C, 1)
        # o_ref   : (batch_per_step, C, S)  lane-dense output
        # head_ref: (C, S) f32 VMEM scratch for the concatenated head outputs

        # Hoisted once: bf16 copies of the weights for the MXU.
        wqkv_bf = wqkv_ref[...].astype(bf16)
        wo_bf = wo_ref[...].astype(bf16)
        bqkv = bqkv_ref[...]
        bo = bo_ref[...]

        for b in range(batch_per_step):               # static unroll (small B)
            xt = x_ref[b]                                            # (C, S)
            if with_pe:
                xt = xt + pe_ref[...]

            # Fused Q/K/V projection: qkv[o,s] = sum_i W[o,i]*xt[i,s] + b[o]
            qkv = jnp.dot(wqkv_bf, xt.astype(bf16),
                          preferred_element_type=jnp.float32) + bqkv  # (3C,S)

            qT = qkv[:d_model] * scale                               # (C, S)
            k_rows = jnp.transpose(qkv[d_model:2 * d_model])         # (S, C)
            vT = qkv[2 * d_model:]                                   # (C, S)

            for hh in range(heads):                   # static unroll, heads=4
                lo, hi = hh * d_k, (hh + 1) * d_k
                kh = k_rows[:, lo:hi].astype(bf16)                   # (S, dk)
                qh = qT[lo:hi].astype(bf16)                          # (dk, S)
                vh = vT[lo:hi].astype(bf16)                          # (dk, S)

                # Key-major scores: sT[j, i] = sum_d k[j,d]*q[d,i] (pre-scaled)
                sT = jnp.dot(kh, qh,
                             preferred_element_type=jnp.float32)    # (S, S)
                # Softmax over keys (axis 0) with deferred normalization.
                m = jnp.max(sT, axis=0, keepdims=True)               # (1, S)
                p = jnp.exp(sT - m)                                  # (S, S)
                l = jnp.sum(p, axis=0, keepdims=True)                # (1, S)

                # oh[d, i] = sum_j v[d,j] * p[j,i]
                oh = jnp.dot(vh, p.astype(bf16),
                             preferred_element_type=jnp.float32)    # (dk, S)
                # Normalize the (dk, S) head output instead of the (S, S) P.
                head_ref[hh * d_k:(hh + 1) * d_k, :] = (
                    oh * pl.reciprocal(l, approx=True))

            # Output projection on the concatenated heads (channels-major).
            outT = jnp.dot(wo_bf, head_ref[...].astype(bf16),
                           preferred_element_type=jnp.float32) + bo  # (C, S)
            o_ref[b] = outT.astype(o_ref.dtype)

    if with_pe:
        def kernel(x_ref, pe_ref, wqkv_ref, bqkv_ref, wo_ref, bo_ref, o_ref,
                   head_ref):
            body(x_ref, pe_ref, wqkv_ref, bqkv_ref, wo_ref, bo_ref, o_ref,
                 head_ref)
    else:
        def kernel(x_ref, wqkv_ref, bqkv_ref, wo_ref, bo_ref, o_ref,
                   head_ref):
            body(x_ref, None, wqkv_ref, bqkv_ref, wo_ref, bo_ref, o_ref,
                 head_ref)
    return kernel


@functools.partial(jax.jit, static_argnames=("heads", "pos_enc"))
def mhsa_block_forward(x, params, *, heads, pos_enc=True):
    """MHSABlock forward.

    x      : (B, C, H, W) float32 (NCHW)
    params : dict with wq/wk/wv/wo (C, C) in PyTorch (out, in) layout and
             bq/bk/bv/bo (C,)
    returns: (B, C, H, W) float32
    """
    B, C, H, W = x.shape
    S = H * W
    assert C % heads == 0
    d_k = C // heads

    # --- glue: reshapes only (no data-moving transposes) -----------------
    x3d = x.reshape(B, C, S)

    wqkv = jnp.concatenate([params["wq"], params["wk"], params["wv"]], axis=0)
    bqkv = jnp.concatenate(
        [params["bq"], params["bk"], params["bv"]]).reshape(3 * C, 1)
    wo = params["wo"]
    bo = params["bo"].reshape(C, 1)

    # Single-TC chips: fold the whole (small) batch into one grid step to
    # remove per-step overhead; multi-TC chips keep grid=(B,) for sharding.
    batch_per_step = 1
    if _single_tensorcore_chip() and B * C * S * 4 <= (2 << 20):
        batch_per_step = B
    grid = (B // batch_per_step,)

    in_specs = [pl.BlockSpec((batch_per_step, C, S), lambda b: (b, 0, 0))]
    operands = [x3d]
    if pos_enc:
        pe2d = positional_encoding_2d(C, H, W).reshape(C, S)
        in_specs.append(pl.BlockSpec((C, S), lambda b: (0, 0)))
        operands.append(pe2d)
    in_specs += [
        pl.BlockSpec((3 * C, C), lambda b: (0, 0)),     # wqkv
        pl.BlockSpec((3 * C, 1), lambda b: (0, 0)),     # bqkv
        pl.BlockSpec((C, C), lambda b: (0, 0)),         # wo
        pl.BlockSpec((C, 1), lambda b: (0, 0)),         # bo
    ]
    operands += [wqkv, bqkv, wo, bo]

    flops = B * (2 * (3 * C) * C * S                 # QKV projection
                 + heads * (2 * S * S * d_k) * 2     # K^T Q and PV
                 + 2 * C * C * S)                    # output projection
    transcendentals = B * heads * S * S              # exp in softmax
    bytes_accessed = 4 * (x3d.size + wqkv.size + bqkv.size
                          + wo.size + bo.size + B * C * S
                          + (C * S if pos_enc else 0))

    out = pl.pallas_call(
        _make_mhsa_kernel(heads, C, d_k, batch_per_step, pos_enc),
        out_shape=jax.ShapeDtypeStruct((B, C, S), jnp.float32),
        grid_spec=pltpu.PrefetchScalarGridSpec(
            num_scalar_prefetch=0,
            grid=grid,
            in_specs=in_specs,
            out_specs=pl.BlockSpec((batch_per_step, C, S),
                                   lambda b: (b, 0, 0)),
            scratch_shapes=[pltpu.VMEM((C, S), jnp.float32)],
        ),
        compiler_params=pltpu.CompilerParams(
            dimension_semantics=("parallel",),
        ),
        cost_estimate=pl.CostEstimate(
            flops=int(flops),
            transcendentals=int(transcendentals),
            bytes_accessed=int(bytes_accessed)),
    )(*operands)

    return out.reshape(B, C, H, W)


# --------------------------------------------------------------------------
# Pure-JAX reference (mirrors the PyTorch module) for correctness checking.
# --------------------------------------------------------------------------
def _reference_mhsa_block(x, params, *, heads, pos_enc=True):
    B, C, H, W = x.shape
    S = H * W
    d_k = C // heads
    hp = lax.Precision.HIGHEST

    x2 = x + positional_encoding_2d(C, H, W)[None] if pos_enc else x
    x2 = x2.reshape(B, C, S).transpose(0, 2, 1)                  # (B, S, C)

    def linear(t, w, b):
        return jnp.einsum("bsi,oi->bso", t, w, precision=hp) + b

    def split_heads(t):
        return t.reshape(B, S, heads, d_k).transpose(0, 2, 1, 3)

    q = split_heads(linear(x2, params["wq"], params["bq"]))
    k = split_heads(linear(x2, params["wk"], params["bk"]))
    v = split_heads(linear(x2, params["wv"], params["bv"]))

    scores = jnp.einsum("bhqd,bhkd->bhqk", q, k, precision=hp) / math.sqrt(d_k)
    scores = jax.nn.softmax(scores, axis=-1)
    att = jnp.einsum("bhqk,bhkd->bhqd", scores, v, precision=hp)
    concat = att.transpose(0, 2, 1, 3).reshape(B, S, C)
    out = linear(concat, params["wo"], params["bo"])
    return out.transpose(0, 2, 1).reshape(B, C, H, W)


if __name__ == "__main__":
    key = jax.random.PRNGKey(0)
    keys = jax.random.split(key, 9)

    B, C, H, W = 2, 32, 16, 16      # d_model = C = 32, S = H*W = 256
    heads = 4                       # d_k = 8

    x = jax.random.normal(keys[0], (B, C, H, W), dtype=jnp.float32)

    bound = 1.0 / math.sqrt(C)      # PyTorch nn.Linear default init range

    def u(k, shape):
        return jax.random.uniform(k, shape, jnp.float32, -bound, bound)

    params = {
        "wq": u(keys[1], (C, C)), "bq": u(keys[2], (C,)),
        "wk": u(keys[3], (C, C)), "bk": u(keys[4], (C,)),
        "wv": u(keys[5], (C, C)), "bv": u(keys[6], (C,)),
        "wo": u(keys[7], (C, C)), "bo": u(keys[8], (C,)),
    }

    out = mhsa_block_forward(x, params, heads=heads)
    out = jax.block_until_ready(out)
    assert out.shape == (B, C, H, W), out.shape

    ref = _reference_mhsa_block(x, params, heads=heads)
    max_err = float(jnp.max(jnp.abs(out - ref)))
    # Tolerance accounts for bf16 MXU operands (f32 accumulation + f32 softmax
    # statistics keep the error well below this bound at these shapes).
    assert jnp.allclose(out, ref, atol=2e-2, rtol=2e-2), f"mismatch: {max_err}"

    print("KERNEL_OK")
</pallas_src>

<mosaic_0001>
module attributes {stable_mosaic.version = 11 : i64} {
  func.func @kernel(%arg0: i32, %arg1: memref<1x32x256xf32, #tpu.memory_space<vmem>>, %arg2: memref<32x256xf32, #tpu.memory_space<vmem>>, %arg3: memref<96x32xf32, #tpu.memory_space<vmem>>, %arg4: memref<96x1xf32, #tpu.memory_space<vmem>>, %arg5: memref<32x32xf32, #tpu.memory_space<vmem>>, %arg6: memref<32x1xf32, #tpu.memory_space<vmem>>, %arg7: memref<1x32x256xf32, #tpu.memory_space<vmem>>, %arg8: memref<32x256xf32, #tpu.memory_space<vmem>>) attributes {dimension_semantics = [#tpu.dimension_semantics<parallel>], iteration_bounds = array<i64: 2>, scalar_prefetch = 0 : i64, scratch_operands = 1 : i64, tpu.core_type = #tpu.core_type<tc>, window_params = [{transform_indices = @transform_0, window_bounds = array<i64: 1, 32, 256>}, {pipeline_mode = #tpu.pipeline_mode<synchronous>, transform_indices = @transform_1, window_bounds = array<i64: 32, 256>}, {pipeline_mode = #tpu.pipeline_mode<synchronous>, transform_indices = @transform_2, window_bounds = array<i64: 96, 32>}, {pipeline_mode = #tpu.pipeline_mode<synchronous>, transform_indices = @transform_3, window_bounds = array<i64: 96, 1>}, {pipeline_mode = #tpu.pipeline_mode<synchronous>, transform_indices = @transform_4, window_bounds = array<i64: 32, 32>}, {pipeline_mode = #tpu.pipeline_mode<synchronous>, transform_indices = @transform_5, window_bounds = array<i64: 32, 1>}, {transform_indices = @transform_6, window_bounds = array<i64: 1, 32, 256>}]} {
    %c0 = arith.constant 0 : index
    %c0_0 = arith.constant 0 : index
    %0 = vector.load %arg3[%c0, %c0_0] : memref<96x32xf32, #tpu.memory_space<vmem>>, vector<96x32xf32>
    %1 = arith.truncf %0 : vector<96x32xf32> to vector<96x32xbf16>
    %c0_1 = arith.constant 0 : index
    %c0_2 = arith.constant 0 : index
    %2 = vector.load %arg5[%c0_1, %c0_2] : memref<32x32xf32, #tpu.memory_space<vmem>>, vector<32x32xf32>
    %3 = arith.truncf %2 : vector<32x32xf32> to vector<32x32xbf16>
    %c0_3 = arith.constant 0 : index
    %c0_4 = arith.constant 0 : index
    %4 = vector.load %arg4[%c0_3, %c0_4] : memref<96x1xf32, #tpu.memory_space<vmem>>, vector<96x1xf32>
    %c0_5 = arith.constant 0 : index
    %c0_6 = arith.constant 0 : index
    %5 = vector.load %arg6[%c0_5, %c0_6] : memref<32x1xf32, #tpu.memory_space<vmem>>, vector<32x1xf32>
    %c0_7 = arith.constant 0 : index
    %c0_8 = arith.constant 0 : index
    %c0_9 = arith.constant 0 : index
    %6 = vector.load %arg1[%c0_7, %c0_8, %c0_9] : memref<1x32x256xf32, #tpu.memory_space<vmem>>, vector<1x32x256xf32>
    %7 = vector.shape_cast %6 : vector<1x32x256xf32> to vector<32x256xf32>
    %c0_10 = arith.constant 0 : index
    %c0_11 = arith.constant 0 : index
    %8 = vector.load %arg2[%c0_10, %c0_11] : memref<32x256xf32, #tpu.memory_space<vmem>>, vector<32x256xf32>
    %9 = arith.addf %7, %8 : vector<32x256xf32>
    %10 = arith.truncf %9 : vector<32x256xf32> to vector<32x256xbf16>
    %cst = arith.constant dense<0.000000e+00> : vector<96x256xf32>
    %11 = tpu.matmul %1, %10, %cst {dimension_numbers = #tpu.dot_dimension_numbers<[1], [0], [0], [1], [0, 0, 1, 1], [], []>} : vector<96x32xbf16>, vector<32x256xbf16>, vector<96x256xf32> -> vector<96x256xf32>
    %12 = vector.broadcast %4 : vector<96x1xf32> to vector<96x256xf32>
    %13 = arith.addf %11, %12 : vector<96x256xf32>
    %14 = vector.extract_strided_slice %13 {offsets = [0, 0], sizes = [32, 256], strides = [1, 1]} : vector<96x256xf32> to vector<32x256xf32>
    %cst_12 = arith.constant 0.353553385 : f32
    %15 = vector.broadcast %cst_12 : f32 to vector<32x256xf32>
    %16 = arith.mulf %14, %15 : vector<32x256xf32>
    %17 = vector.extract_strided_slice %13 {offsets = [32, 0], sizes = [32, 256], strides = [1, 1]} : vector<96x256xf32> to vector<32x256xf32>
    %18 = tpu.transpose %17, [1, 0] : vector<32x256xf32> -> vector<256x32xf32>
    %19 = vector.extract_strided_slice %13 {offsets = [64, 0], sizes = [32, 256], strides = [1, 1]} : vector<96x256xf32> to vector<32x256xf32>
    %20 = vector.extract_strided_slice %18 {offsets = [0, 0], sizes = [256, 8], strides = [1, 1]} : vector<256x32xf32> to vector<256x8xf32>
    %21 = arith.truncf %20 : vector<256x8xf32> to vector<256x8xbf16>
    %22 = vector.extract_strided_slice %16 {offsets = [0, 0], sizes = [8, 256], strides = [1, 1]} : vector<32x256xf32> to vector<8x256xf32>
    %23 = arith.truncf %22 : vector<8x256xf32> to vector<8x256xbf16>
    %24 = vector.extract_strided_slice %19 {offsets = [0, 0], sizes = [8, 256], strides = [1, 1]} : vector<32x256xf32> to vector<8x256xf32>
    %25 = arith.truncf %24 : vector<8x256xf32> to vector<8x256xbf16>
    %cst_13 = arith.constant dense<0.000000e+00> : vector<256x256xf32>
    %26 = tpu.matmul %21, %23, %cst_13 {dimension_numbers = #tpu.dot_dimension_numbers<[1], [0], [0], [1], [0, 0, 1, 1], [], []>} : vector<256x8xbf16>, vector<8x256xbf16>, vector<256x256xf32> -> vector<256x256xf32>
    %cst_14 = arith.constant dense<0xFF800000> : vector<256xf32>
    %27 = vector.multi_reduction <maximumf>, %26, %cst_14 [0] : vector<256x256xf32> to vector<256xf32>
    %28 = vector.shape_cast %27 : vector<256xf32> to vector<1x256xf32>
    %29 = vector.broadcast %28 : vector<1x256xf32> to vector<256x256xf32>
    %30 = arith.subf %26, %29 : vector<256x256xf32>
    %31 = math.exp %30 : vector<256x256xf32>
    %cst_15 = arith.constant dense<0.000000e+00> : vector<256xf32>
    %32 = vector.multi_reduction <add>, %31, %cst_15 [0] : vector<256x256xf32> to vector<256xf32>
    %33 = vector.shape_cast %32 : vector<256xf32> to vector<1x256xf32>
    %34 = arith.truncf %31 : vector<256x256xf32> to vector<256x256xbf16>
    %cst_16 = arith.constant dense<0.000000e+00> : vector<8x256xf32>
    %35 = tpu.matmul %25, %34, %cst_16 {dimension_numbers = #tpu.dot_dimension_numbers<[1], [0], [0], [1], [0, 0, 1, 1], [], []>} : vector<8x256xbf16>, vector<256x256xbf16>, vector<8x256xf32> -> vector<8x256xf32>
    %36 = tpu.reciprocal %33 {approx = true} : vector<1x256xf32> -> vector<1x256xf32>
    %37 = vector.broadcast %36 : vector<1x256xf32> to vector<8x256xf32>
    %38 = arith.mulf %35, %37 : vector<8x256xf32>
    %c0_17 = arith.constant 0 : index
    %c0_18 = arith.constant 0 : index
    %39 = vector.load %arg8[%c0_17, %c0_18] : memref<32x256xf32, #tpu.memory_space<vmem>>, vector<8x256xf32>
    tpu.vector_store %arg8[%c0_17, %c0_18], %38 {strides = array<i32>} : memref<32x256xf32, #tpu.memory_space<vmem>>, vector<8x256xf32>,
    %40 = vector.extract_strided_slice %18 {offsets = [0, 8], sizes = [256, 8], strides = [1, 1]} : vector<256x32xf32> to vector<256x8xf32>
    %41 = arith.truncf %40 : vector<256x8xf32> to vector<256x8xbf16>
    %42 = vector.extract_strided_slice %16 {offsets = [8, 0], sizes = [8, 256], strides = [1, 1]} : vector<32x256xf32> to vector<8x256xf32>
    %43 = arith.truncf %42 : vector<8x256xf32> to vector<8x256xbf16>
    %44 = vector.extract_strided_slice %19 {offsets = [8, 0], sizes = [8, 256], strides = [1, 1]} : vector<32x256xf32> to vector<8x256xf32>
    %45 = arith.truncf %44 : vector<8x256xf32> to vector<8x256xbf16>
    %cst_19 = arith.constant dense<0.000000e+00> : vector<256x256xf32>
    %46 = tpu.matmul %41, %43, %cst_19 {dimension_numbers = #tpu.dot_dimension_numbers<[1], [0], [0], [1], [0, 0, 1, 1], [], []>} : vector<256x8xbf16>, vector<8x256xbf16>, vector<256x256xf32> -> vector<256x256xf32>
    %cst_20 = arith.constant dense<0xFF800000> : vector<256xf32>
    %47 = vector.multi_reduction <maximumf>, %46, %cst_20 [0] : vector<256x256xf32> to vector<256xf32>
    %48 = vector.shape_cast %47 : vector<256xf32> to vector<1x256xf32>
    %49 = vector.broadcast %48 : vector<1x256xf32> to vector<256x256xf32>
    %50 = arith.subf %46, %49 : vector<256x256xf32>
    %51 = math.exp %50 : vector<256x256xf32>
    %cst_21 = arith.constant dense<0.000000e+00> : vector<256xf32>
    %52 = vector.multi_reduction <add>, %51, %cst_21 [0] : vector<256x256xf32> to vector<256xf32>
    %53 = vector.shape_cast %52 : vector<256xf32> to vector<1x256xf32>
    %54 = arith.truncf %51 : vector<256x256xf32> to vector<256x256xbf16>
    %cst_22 = arith.constant dense<0.000000e+00> : vector<8x256xf32>
    %55 = tpu.matmul %45, %54, %cst_22 {dimension_numbers = #tpu.dot_dimension_numbers<[1], [0], [0], [1], [0, 0, 1, 1], [], []>} : vector<8x256xbf16>, vector<256x256xbf16>, vector<8x256xf32> -> vector<8x256xf32>
    %56 = tpu.reciprocal %53 {approx = true} : vector<1x256xf32> -> vector<1x256xf32>
    %57 = vector.broadcast %56 : vector<1x256xf32> to vector<8x256xf32>
    %58 = arith.mulf %55, %57 : vector<8x256xf32>
    %c8 = arith.constant 8 : index
    %c0_23 = arith.constant 0 : index
    %59 = vector.load %arg8[%c8, %c0_23] : memref<32x256xf32, #tpu.memory_space<vmem>>, vector<8x256xf32>
    tpu.vector_store %arg8[%c8, %c0_23], %58 {strides = array<i32>} : memref<32x256xf32, #tpu.memory_space<vmem>>, vector<8x256xf32>,
    %60 = vector.extract_strided_slice %18 {offsets = [0, 16], sizes = [256, 8], strides = [1, 1]} : vector<256x32xf32> to vector<256x8xf32>
    %61 = arith.truncf %60 : vector<256x8xf32> to vector<256x8xbf16>
    %62 = vector.extract_strided_slice %16 {offsets = [16, 0], sizes = [8, 256], strides = [1, 1]} : vector<32x256xf32> to vector<8x256xf32>
    %63 = arith.truncf %62 : vector<8x256xf32> to vector<8x256xbf16>
    %64 = vector.extract_strided_slice %19 {offsets = [16, 0], sizes = [8, 256], strides = [1, 1]} : vector<32x256xf32> to vector<8x256xf32>
    %65 = arith.truncf %64 : vector<8x256xf32> to vector<8x256xbf16>
    %cst_24 = arith.constant dense<0.000000e+00> : vector<256x256xf32>
    %66 = tpu.matmul %61, %63, %cst_24 {dimension_numbers = #tpu.dot_dimension_numbers<[1], [0], [0], [1], [0, 0, 1, 1], [], []>} : vector<256x8xbf16>, vector<8x256xbf16>, vector<256x256xf32> -> vector<256x256xf32>
    %cst_25 = arith.constant dense<0xFF800000> : vector<256xf32>
    %67 = vector.multi_reduction <maximumf>, %66, %cst_25 [0] : vector<256x256xf32> to vector<256xf32>
    %68 = vector.shape_cast %67 : vector<256xf32> to vector<1x256xf32>
    %69 = vector.broadcast %68 : vector<1x256xf32> to vector<256x256xf32>
    %70 = arith.subf %66, %69 : vector<256x256xf32>
    %71 = math.exp %70 : vector<256x256xf32>
    %cst_26 = arith.constant dense<0.000000e+00> : vector<256xf32>
    %72 = vector.multi_reduction <add>, %71, %cst_26 [0] : vector<256x256xf32> to vector<256xf32>
    %73 = vector.shape_cast %72 : vector<256xf32> to vector<1x256xf32>
    %74 = arith.truncf %71 : vector<256x256xf32> to vector<256x256xbf16>
    %cst_27 = arith.constant dense<0.000000e+00> : vector<8x256xf32>
    %75 = tpu.matmul %65, %74, %cst_27 {dimension_numbers = #tpu.dot_dimension_numbers<[1], [0], [0], [1], [0, 0, 1, 1], [], []>} : vector<8x256xbf16>, vector<256x256xbf16>, vector<8x256xf32> -> vector<8x256xf32>
    %76 = tpu.reciprocal %73 {approx = true} : vector<1x256xf32> -> vector<1x256xf32>
    %77 = vector.broadcast %76 : vector<1x256xf32> to vector<8x256xf32>
    %78 = arith.mulf %75, %77 : vector<8x256xf32>
    %c16 = arith.constant 16 : index
    %c0_28 = arith.constant 0 : index
    %79 = vector.load %arg8[%c16, %c0_28] : memref<32x256xf32, #tpu.memory_space<vmem>>, vector<8x256xf32>
    tpu.vector_store %arg8[%c16, %c0_28], %78 {strides = array<i32>} : memref<32x256xf32, #tpu.memory_space<vmem>>, vector<8x256xf32>,
    %80 = vector.extract_strided_slice %18 {offsets = [0, 24], sizes = [256, 8], strides = [1, 1]} : vector<256x32xf32> to vector<256x8xf32>
    %81 = arith.truncf %80 : vector<256x8xf32> to vector<256x8xbf16>
    %82 = vector.extract_strided_slice %16 {offsets = [24, 0], sizes = [8, 256], strides = [1, 1]} : vector<32x256xf32> to vector<8x256xf32>
    %83 = arith.truncf %82 : vector<8x256xf32> to vector<8x256xbf16>
    %84 = vector.extract_strided_slice %19 {offsets = [24, 0], sizes = [8, 256], strides = [1, 1]} : vector<32x256xf32> to vector<8x256xf32>
    %85 = arith.truncf %84 : vector<8x256xf32> to vector<8x256xbf16>
    %cst_29 = arith.constant dense<0.000000e+00> : vector<256x256xf32>
    %86 = tpu.matmul %81, %83, %cst_29 {dimension_numbers = #tpu.dot_dimension_numbers<[1], [0], [0], [1], [0, 0, 1, 1], [], []>} : vector<256x8xbf16>, vector<8x256xbf16>, vector<256x256xf32> -> vector<256x256xf32>
    %cst_30 = arith.constant dense<0xFF800000> : vector<256xf32>
    %87 = vector.multi_reduction <maximumf>, %86, %cst_30 [0] : vector<256x256xf32> to vector<256xf32>
    %88 = vector.shape_cast %87 : vector<256xf32> to vector<1x256xf32>
    %89 = vector.broadcast %88 : vector<1x256xf32> to vector<256x256xf32>
    %90 = arith.subf %86, %89 : vector<256x256xf32>
    %91 = math.exp %90 : vector<256x256xf32>
    %cst_31 = arith.constant dense<0.000000e+00> : vector<256xf32>
    %92 = vector.multi_reduction <add>, %91, %cst_31 [0] : vector<256x256xf32> to vector<256xf32>
    %93 = vector.shape_cast %92 : vector<256xf32> to vector<1x256xf32>
    %94 = arith.truncf %91 : vector<256x256xf32> to vector<256x256xbf16>
    %cst_32 = arith.constant dense<0.000000e+00> : vector<8x256xf32>
    %95 = tpu.matmul %85, %94, %cst_32 {dimension_numbers = #tpu.dot_dimension_numbers<[1], [0], [0], [1], [0, 0, 1, 1], [], []>} : vector<8x256xbf16>, vector<256x256xbf16>, vector<8x256xf32> -> vector<8x256xf32>
    %96 = tpu.reciprocal %93 {approx = true} : vector<1x256xf32> -> vector<1x256xf32>
    %97 = vector.broadcast %96 : vector<1x256xf32> to vector<8x256xf32>
    %98 = arith.mulf %95, %97 : vector<8x256xf32>
    %c24 = arith.constant 24 : index
    %c0_33 = arith.constant 0 : index
    %99 = vector.load %arg8[%c24, %c0_33] : memref<32x256xf32, #tpu.memory_space<vmem>>, vector<8x256xf32>
    tpu.vector_store %arg8[%c24, %c0_33], %98 {strides = array<i32>} : memref<32x256xf32, #tpu.memory_space<vmem>>, vector<8x256xf32>,
    %c0_34 = arith.constant 0 : index
    %c0_35 = arith.constant 0 : index
    %100 = vector.load %arg8[%c0_34, %c0_35] : memref<32x256xf32, #tpu.memory_space<vmem>>, vector<32x256xf32>
    %101 = arith.truncf %100 : vector<32x256xf32> to vector<32x256xbf16>
    %cst_36 = arith.constant dense<0.000000e+00> : vector<32x256xf32>
    %102 = tpu.matmul %3, %101, %cst_36 {dimension_numbers = #tpu.dot_dimension_numbers<[1], [0], [0], [1], [0, 0, 1, 1], [], []>} : vector<32x32xbf16>, vector<32x256xbf16>, vector<32x256xf32> -> vector<32x256xf32>
    %103 = vector.broadcast %5 : vector<32x1xf32> to vector<32x256xf32>
    %104 = arith.addf %102, %103 : vector<32x256xf32>
    %c0_37 = arith.constant 0 : index
    %c0_38 = arith.constant 0 : index
    %c0_39 = arith.constant 0 : index
    %105 = vector.load %arg7[%c0_37, %c0_38, %c0_39] : memref<1x32x256xf32, #tpu.memory_space<vmem>>, vector<1x32x256xf32>
    %106 = vector.shape_cast %105 : vector<1x32x256xf32> to vector<32x256xf32>
    %107 = vector.shape_cast %104 : vector<32x256xf32> to vector<1x32x256xf32>
    tpu.vector_store %arg7[%c0_37, %c0_38, %c0_39], %107 {strides = array<i32>} : memref<1x32x256xf32, #tpu.memory_space<vmem>>, vector<1x32x256xf32>,
    return
  }
  func.func @transform_0(%arg0: i32) -> (i32, i32, i32) {
    %c0_i32 = arith.constant 0 : i32
    %c0_i32_0 = arith.constant 0 : i32
    %c0_i32_1 = arith.constant 0 : i32
    return %arg0, %c0_i32, %c0_i32_0 : i32, i32, i32
  }
  func.func @transform_1(%arg0: i32) -> (i32, i32) {
    %c0_i32 = arith.constant 0 : i32
    %c0_i32_0 = arith.constant 0 : i32
    %c0_i32_1 = arith.constant 0 : i32
    return %c0_i32, %c0_i32_0 : i32, i32
  }
  func.func @transform_2(%arg0: i32) -> (i32, i32) {
    %c0_i32 = arith.constant 0 : i32
    %c0_i32_0 = arith.constant 0 : i32
    %c0_i32_1 = arith.constant 0 : i32
    return %c0_i32, %c0_i32_0 : i32, i32
  }
  func.func @transform_3(%arg0: i32) -> (i32, i32) {
    %c0_i32 = arith.constant 0 : i32
    %c0_i32_0 = arith.constant 0 : i32
    %c0_i32_1 = arith.constant 0 : i32
    return %c0_i32, %c0_i32_0 : i32, i32
  }
  func.func @transform_4(%arg0: i32) -> (i32, i32) {
    %c0_i32 = arith.constant 0 : i32
    %c0_i32_0 = arith.constant 0 : i32
    %c0_i32_1 = arith.constant 0 : i32
    return %c0_i32, %c0_i32_0 : i32, i32
  }
  func.func @transform_5(%arg0: i32) -> (i32, i32) {
    %c0_i32 = arith.constant 0 : i32
    %c0_i32_0 = arith.constant 0 : i32
    %c0_i32_1 = arith.constant 0 : i32
    return %c0_i32, %c0_i32_0 : i32, i32
  }
  func.func @transform_6(%arg0: i32) -> (i32, i32, i32) {
    %c0_i32 = arith.constant 0 : i32
    %c0_i32_0 = arith.constant 0 : i32
    %c0_i32_1 = arith.constant 0 : i32
    return %arg0, %c0_i32, %c0_i32_0 : i32, i32, i32
  }
}

</mosaic_0001>

<llo_original>
// kernel: mhsa_block_forward.1
$region0: #{mhsa_block_forward.1}
  #allocation0 [shape = 'u32[]', space=smem, size = 0x4, offset = 0x4, fixed_abs, tag = 'smem constant byte address 0x4 - core index']
  #allocation1 [shape = 'u32[144,128]{1,0:T(1,128)}', space=vmem, size = 0x12000, scoped, tag = 'internal scratch']
  #allocation2 [shape = 'f32[32,256]{1,0:T(8,128)}', space=vmem, size = 0x8000, scoped, tag = 'scratch operand']
  %s0 = inlined_call_operand.vmem [shape: f32[2,32,256], index: 0, kind: input, shape index: {}]
  %s1 = inlined_call_operand.vmem [shape: f32[32,256], index: 1, kind: input, shape index: {}]
  %s2 = inlined_call_operand.vmem [shape: f32[96,32], index: 2, kind: input, shape index: {}]
  %s3 = inlined_call_operand.vmem [shape: f32[96,1], index: 3, kind: input, shape index: {}]
  %s4 = inlined_call_operand.vmem [shape: f32[32,32], index: 4, kind: input, shape index: {}]
  %s5 = inlined_call_operand.vmem [shape: f32[32,1], index: 5, kind: input, shape index: {}]
  %s6 = inlined_call_operand.vmem [shape: f32[2,32,256], index: 6, kind: output, shape index: {}]
  %s7 = sld [smem:[#allocation0]]
  $region57: #{mhsa_block_forward.1} parent=0
    _
  %s9 = ssub.s32 1, %s7
  %s10 = scalar_select 0, %s9, %s7
  loop: start=0, step=1, limit=4
  $region2: #{mhsa_block_forward.1} parent=0 // loop_pre_header
    _
  $region3: #{mhsa_block_forward.1} parent=0 // loop_header
    %s12 = sphi 0, %s16
    %p13 = scmp.ge.s32.totalorder %s12, 4
    %s22 = sphi 0, %s24
    %s25 = sphi 0, %s22
    %s26 = sphi 0, %s25
    %s42 = sphi 0, %s26
    %s46 = sphi 0, %s46
    %s48 = sphi 0, %s46
    %s49 = sphi 0, %s48
    %s63 = sphi 0, %s49
    %s67 = sphi 0, %s67
    %s69 = sphi 0, %s67
    %s70 = sphi 0, %s69
    %s84 = sphi 0, %s70
    %s88 = sphi 0, %s88
    %s90 = sphi 0, %s88
    %s91 = sphi 0, %s90
    %s105 = sphi 0, %s91
    %s109 = sphi 0, %s109
    %s111 = sphi 0, %s109
    %s112 = sphi 0, %s111
    %s126 = sphi 0, %s112
    %s130 = sphi 0, %s130
    %s132 = sphi 0, %s130
    %s133 = sphi 0, %s132
    %s147 = sphi 0, %s133
    %s153 = sphi 0, %s155
    %s156 = sphi 0, %s153
    %s157 = sphi 0, %s156
    %s173 = sphi 0, %s157
  $region4: #{mhsa_block_forward.1} parent=0 // loop_header_branch
    %15 = sbr.rel (%p13) target = $region8
  $region5: #{mhsa_block_forward.1} parent=0 // loop_body
    %s17 = ssub.s32 %s12, 1
    %s18 = ssub.s32 %s12, 2
    %s19 = sadd.s32 %s12, 1
    %s20 = ssub.s32 %s12, %s19
    %p21 = scmp.eq.s32.totalorder %s20, 0
    %s23 = sadd.s32 %s22, 1
    %s24 = scalar_select %p21, %s22, %s23
    %p27 = pneg %p21
    %p28 = scmp.eq.s32.totalorder %s12, 1
    %p29 = por %p27, %p28
    %p30 = scmp.ne.s32.totalorder %s22, %s25
    %p31 = scmp.eq.s32.totalorder %s12, 0
    %p32 = por %p30, %p31
    %p33 = scmp.ne.s32.totalorder %s22, %s25
    %p34 = scmp.eq.s32.totalorder %s17, 1
    %p35 = por %p33, %p34
    %p36 = scmp.ne.s32.totalorder %s25, %s26
    %p37 = scmp.eq.s32.totalorder %s17, 0
    %p38 = por %p36, %p37
    %p39 = scmp.ne.s32.totalorder %s25, %s26
    %p40 = scmp.eq.s32.totalorder %s18, 1
    %p41 = por %p39, %p40
    %p43 = scmp.ne.s32.totalorder %s26, %s42
    %p44 = scmp.eq.s32.totalorder %s18, 0
    %p45 = por %p43, %p44
    %s47 = sadd.s32 %s46, 1
    %p50 = scmp.eq.s32.totalorder %s12, 1
    %p51 = scmp.ne.s32.totalorder %s46, %s48
    %p52 = scmp.eq.s32.totalorder %s12, 0
    %p53 = por %p51, %p52
    %p54 = scmp.ne.s32.totalorder %s46, %s48
    %p55 = scmp.eq.s32.totalorder %s17, 1
    %p56 = por %p54, %p55
    %p57 = scmp.ne.s32.totalorder %s48, %s49
    %p58 = scmp.eq.s32.totalorder %s17, 0
    %p59 = por %p57, %p58
    %p60 = scmp.ne.s32.totalorder %s48, %s49
    %p61 = scmp.eq.s32.totalorder %s18, 1
    %p62 = por %p60, %p61
    %p64 = scmp.ne.s32.totalorder %s49, %s63
    %p65 = scmp.eq.s32.totalorder %s18, 0
    %p66 = por %p64, %p65
    %s68 = sadd.s32 %s67, 1
    %p71 = scmp.eq.s32.totalorder %s12, 1
    %p72 = scmp.ne.s32.totalorder %s67, %s69
    %p73 = scmp.eq.s32.totalorder %s12, 0
    %p74 = por %p72, %p73
    %p75 = scmp.ne.s32.totalorder %s67, %s69
    %p76 = scmp.eq.s32.totalorder %s17, 1
    %p77 = por %p75, %p76
    %p78 = scmp.ne.s32.totalorder %s69, %s70
    %p79 = scmp.eq.s32.totalorder %s17, 0
    %p80 = por %p78, %p79
    %p81 = scmp.ne.s32.totalorder %s69, %s70
    %p82 = scmp.eq.s32.totalorder %s18, 1
    %p83 = por %p81, %p82
    %p85 = scmp.ne.s32.totalorder %s70, %s84
    %p86 = scmp.eq.s32.totalorder %s18, 0
    %p87 = por %p85, %p86
    %s89 = sadd.s32 %s88, 1
    %p92 = scmp.eq.s32.totalorder %s12, 1
    %p93 = scmp.ne.s32.totalorder %s88, %s90
    %p94 = scmp.eq.s32.totalorder %s12, 0
    %p95 = por %p93, %p94
    %p96 = scmp.ne.s32.totalorder %s88, %s90
    %p97 = scmp.eq.s32.totalorder %s17, 1
    %p98 = por %p96, %p97
    %p99 = scmp.ne.s32.totalorder %s90, %s91
    %p100 = scmp.eq.s32.totalorder %s17, 0
    %p101 = por %p99, %p100
    %p102 = scmp.ne.s32.totalorder %s90, %s91
    %p103 = scmp.eq.s32.totalorder %s18, 1
    %p104 = por %p102, %p103
    %p106 = scmp.ne.s32.totalorder %s91, %s105
    %p107 = scmp.eq.s32.totalorder %s18, 0
    %p108 = por %p106, %p107
    %s110 = sadd.s32 %s109, 1
    %p113 = scmp.eq.s32.totalorder %s12, 1
    %p114 = scmp.ne.s32.totalorder %s109, %s111
    %p115 = scmp.eq.s32.totalorder %s12, 0
    %p116 = por %p114, %p115
    %p117 = scmp.ne.s32.totalorder %s109, %s111
    %p118 = scmp.eq.s32.totalorder %s17, 1
    %p119 = por %p117, %p118
    %p120 = scmp.ne.s32.totalorder %s111, %s112
    %p121 = scmp.eq.s32.totalorder %s17, 0
    %p122 = por %p120, %p121
    %p123 = scmp.ne.s32.totalorder %s111, %s112
    %p124 = scmp.eq.s32.totalorder %s18, 1
    %p125 = por %p123, %p124
    %p127 = scmp.ne.s32.totalorder %s112, %s126
    %p128 = scmp.eq.s32.totalorder %s18, 0
    %p129 = por %p127, %p128
    %s131 = sadd.s32 %s130, 1
    %p134 = scmp.eq.s32.totalorder %s12, 1
    %p135 = scmp.ne.s32.totalorder %s130, %s132
    %p136 = scmp.eq.s32.totalorder %s12, 0
    %p137 = por %p135, %p136
    %p138 = scmp.ne.s32.totalorder %s130, %s132
    %p139 = scmp.eq.s32.totalorder %s17, 1
    %p140 = por %p138, %p139
    %p141 = scmp.ne.s32.totalorder %s132, %s133
    %p142 = scmp.eq.s32.totalorder %s17, 0
    %p143 = por %p141, %p142
    %p144 = scmp.ne.s32.totalorder %s132, %s133
    %p145 = scmp.eq.s32.totalorder %s18, 1
    %p146 = por %p144, %p145
    %p148 = scmp.ne.s32.totalorder %s133, %s147
    %p149 = scmp.eq.s32.totalorder %s18, 0
    %p150 = por %p148, %p149
    %s151 = ssub.s32 %s12, %s19
    %p152 = scmp.eq.s32.totalorder %s151, 0
    %s154 = sadd.s32 %s153, 1
    %s155 = scalar_select %p152, %s153, %s154
    %p158 = pneg %p152
    %p159 = scmp.eq.s32.totalorder %s12, 1
    %p160 = por %p158, %p159
    %p161 = scmp.ne.s32.totalorder %s153, %s156
    %p162 = scmp.eq.s32.totalorder %s12, 0
    %p163 = por %p161, %p162
    %p164 = scmp.ne.s32.totalorder %s153, %s156
    %p165 = scmp.eq.s32.totalorder %s17, 1
    %p166 = por %p164, %p165
    %p167 = scmp.ne.s32.totalorder %s156, %s157
    %p168 = scmp.eq.s32.totalorder %s17, 0
    %p169 = por %p167, %p168
    %p170 = scmp.ne.s32.totalorder %s156, %s157
    %p171 = scmp.eq.s32.totalorder %s18, 1
    %p172 = por %p170, %p171
    %p174 = scmp.ne.s32.totalorder %s157, %s173
    %p175 = scmp.eq.s32.totalorder %s18, 0
    %p176 = por %p174, %p175
    %p177 = scmp.le.s32.totalorder 1, %s12
    %p178 = scmp.lt.s32.totalorder %s12, 3
    %p179 = pnand %p177, %p178
    %p180 = pneg %p179
    // Predicated region
    $region9: #{mhsa_block_forward.1} parent=5 // pred_check
      _
    $region10: #{mhsa_block_forward.1} parent=5 // pred_check_branch
      %182 = sbr.rel (%p179) target = $region12
    $region11: #{mhsa_block_forward.1} parent=5 // pred_region
      %s183 = ssub.s32 %s12, 1
      // Predicated region
      $region13: #{mhsa_block_forward.1} parent=11 // pred_check
        %p184 = pneg %p59
      $region14: #{mhsa_block_forward.1} parent=11 // pred_check_branch
        %186 = sbr.rel (%p184) target = $region16
      $region15: #{mhsa_block_forward.1} parent=11 // pred_region
        _
      $region16: #{mhsa_block_forward.1} parent=11 // pred_fallthru
        _
      // Predicated region
      $region17: #{mhsa_block_forward.1} parent=11 // pred_check
        %p187 = pneg %p80
      $region18: #{mhsa_block_forward.1} parent=11 // pred_check_branch
        %189 = sbr.rel (%p187) target = $region20
      $region19: #{mhsa_block_forward.1} parent=11 // pred_region
        _
      $region20: #{mhsa_block_forward.1} parent=11 // pred_fallthru
        _
      // Predicated region
      $region21: #{mhsa_block_forward.1} parent=11 // pred_check
        %p190 = pneg %p101
      $region22: #{mhsa_block_forward.1} parent=11 // pred_check_branch
        %192 = sbr.rel (%p190) target = $region24
      $region23: #{mhsa_block_forward.1} parent=11 // pred_region
        _
      $region24: #{mhsa_block_forward.1} parent=11 // pred_fallthru
        _
      // Predicated region
      $region25: #{mhsa_block_forward.1} parent=11 // pred_check
        %p193 = pneg %p122
      $region26: #{mhsa_block_forward.1} parent=11 // pred_check_branch
        %195 = sbr.rel (%p193) target = $region28
      $region27: #{mhsa_block_forward.1} parent=11 // pred_region
        _
      $region28: #{mhsa_block_forward.1} parent=11 // pred_fallthru
        _
      // Predicated region
      $region29: #{mhsa_block_forward.1} parent=11 // pred_check
        %p196 = pneg %p143
      $region30: #{mhsa_block_forward.1} parent=11 // pred_check_branch
        %198 = sbr.rel (%p196) target = $region32
      $region31: #{mhsa_block_forward.1} parent=11 // pred_region
        _
      $region32: #{mhsa_block_forward.1} parent=11 // pred_fallthru
        _
    $region12: #{mhsa_block_forward.1} parent=5 // pred_fallthru
      _
    %p199 = scmp.lt.s32.totalorder %s12, 2
    // Predicated region
    $region33: #{mhsa_block_forward.1} parent=5 // pred_check
      %p200 = pneg %p199
    $region34: #{mhsa_block_forward.1} parent=5 // pred_check_branch
      %202 = sbr.rel (%p200) target = $region36
    $region35: #{mhsa_block_forward.1} parent=5 // pred_region
      // Predicated region
      $region37: #{mhsa_block_forward.1} parent=35 // pred_check
        %p203 = pneg %p32
      $region38: #{mhsa_block_forward.1} parent=35 // pred_check_branch
        %205 = sbr.rel (%p203) target = $region40
      $region39: #{mhsa_block_forward.1} parent=35 // pred_region
        %p206 = scmp.lt.s32.totalorder %s12, 1
        %s207 = scalar_select %p206, %s12, 1
        %s208 = smul.addr %s207, 8
        %s209 = smul.addr %s208, 8
        %s210 = scalar_lea.vmem %s0, %s209
      $region40: #{mhsa_block_forward.1} parent=35 // pred_fallthru
        _
    $region36: #{mhsa_block_forward.1} parent=5 // pred_fallthru
      _
    %p211 = scmp.le.s32.totalorder 1, %s12
    %p212 = scmp.lt.s32.totalorder %s12, 3
    %p213 = pnand %p211, %p212
    %p214 = pneg %p213
    // Predicated region
    $region41: #{mhsa_block_forward.1} parent=5 // pred_check
      _
    $region42: #{mhsa_block_forward.1} parent=5 // pred_check_branch
      %216 = sbr.rel (%p213) target = $region44
    $region43: #{mhsa_block_forward.1} parent=5 // pred_region
      %s217 = ssub.s32 %s12, 1
      %p218 = scmp.lt.s32.totalorder %s17, 1
      %s219 = scalar_select %p218, %s17, 1
      %s220 = smul.addr %s219, 8
      %s221 = smul.addr %s220, 8
      %s222 = scalar_lea.vmem %s0, %s221
      %p223 = pneg %p38
      %p224 = pneg %p35
      %p225 = pneg %p59
      %p226 = pneg %p56
      %p227 = pneg %p80
      %p228 = pneg %p77
      %p229 = pneg %p101
      %p230 = pneg %p98
      %p231 = pneg %p122
      %p232 = pneg %p119
      %p233 = pneg %p143
      %p234 = pneg %p140
      %p235 = pneg %p169
      %p236 = pneg %p166
      %p237 = scmp.lt.s32.totalorder %s17, 1
      %s238 = scalar_select %p237, %s17, 1
      %s239 = smul.addr %s238, 8
      %s240 = smul.addr %s239, 8
      %s241 = scalar_lea.vmem %s6, %s240
      %p242 = scmp.lt.s32.totalorder %s17, 1
      %s243 = scalar_select %p242, %s17, 1
      %s244 = smul.addr %s243, 8
      %s245 = smul.addr %s244, 8
      %s246 = scalar_lea.vmem %s0, %s245
      %p247 = scmp.lt.s32.totalorder %s17, 1
      %s248 = scalar_select %p247, %s17, 1
      %s249 = smul.addr %s248, 8
      %s250 = smul.addr %s249, 8
      %s251 = scalar_lea.vmem %s6, %s250
      %v253 = vld [vmem:[%s2] sm:$0xff]
      %v254 = vld [vmem:[%s2 + $0x8] sm:$0xff]
      %v255 = vld [vmem:[%s2 + $0x10] sm:$0xff]
      %v256 = vld [vmem:[%s2 + $0x18] sm:$0xff]
      %v257 = vld [vmem:[%s2 + $0x20] sm:$0xff]
      %v258 = vld [vmem:[%s2 + $0x28] sm:$0xff]
      %v259 = vld [vmem:[%s2 + $0x30] sm:$0xff]
      %v260 = vld [vmem:[%s2 + $0x38] sm:$0xff]
      %v261 = vld [vmem:[%s2 + $0x40] sm:$0xff]
      %v262 = vld [vmem:[%s2 + $0x48] sm:$0xff]
      %v263 = vld [vmem:[%s2 + $0x50] sm:$0xff]
      %v264 = vld [vmem:[%s2 + $0x58] sm:$0xff]
      %v265 = vpack.c.bf16 %v254, %v253
      %v266 = vpack.c.bf16 %v256, %v255
      %v267 = vpack.c.bf16 %v258, %v257
      %v268 = vpack.c.bf16 %v260, %v259
      %v269 = vpack.c.bf16 %v262, %v261
      %v270 = vpack.c.bf16 %v264, %v263
      %v271 = vld [vmem:[%s4] sm:$0xff]
      %v272 = vld [vmem:[%s4 + $0x8] sm:$0xff]
      %v273 = vld [vmem:[%s4 + $0x10] sm:$0xff]
      %v274 = vld [vmem:[%s4 + $0x18] sm:$0xff]
      %v275 = vpack.c.bf16 %v272, %v271
      %v276 = vpack.c.bf16 %v274, %v273
      %v277 = vld [vmem:[%s3] sm:$0xff]
      %v278 = vld [vmem:[%s3 + $0x8] sm:$0xff]
      %v279 = vld [vmem:[%s3 + $0x10] sm:$0xff]
      %v280 = vld [vmem:[%s3 + $0x18] sm:$0xff]
      %v281 = vld [vmem:[%s3 + $0x20] sm:$0xff]
      %v282 = vld [vmem:[%s3 + $0x28] sm:$0xff]
      %v283 = vld [vmem:[%s3 + $0x30] sm:$0xff]
      %v284 = vld [vmem:[%s3 + $0x38] sm:$0xff]
      %v285 = vld [vmem:[%s3 + $0x40] sm:$0xff]
      %v286 = vld [vmem:[%s3 + $0x48] sm:$0xff]
      %v287 = vld [vmem:[%s3 + $0x50] sm:$0xff]
      %v288 = vld [vmem:[%s3 + $0x58] sm:$0xff]
      %v289 = vld [vmem:[%s5] sm:$0xff]
      %v290 = vld [vmem:[%s5 + $0x8] sm:$0xff]
      %v291 = vld [vmem:[%s5 + $0x10] sm:$0xff]
      %v292 = vld [vmem:[%s5 + $0x18] sm:$0xff]
      %v293 = vld [vmem:[%s246] sm:$0xff]
      %v294 = vld [vmem:[%s246 + $0x8] sm:$0xff]
      %v295 = vld [vmem:[%s246 + $0x10] sm:$0xff]
      %v296 = vld [vmem:[%s246 + $0x18] sm:$0xff]
      %v297 = vld [vmem:[%s246 + $0x20] sm:$0xff]
      %v298 = vld [vmem:[%s246 + $0x28] sm:$0xff]
      %v299 = vld [vmem:[%s246 + $0x30] sm:$0xff]
      %v300 = vld [vmem:[%s246 + $0x38] sm:$0xff]
      %v301 = vld [vmem:[%s1] sm:$0xff]
      %v302 = vld [vmem:[%s1 + $0x8] sm:$0xff]
      %v303 = vld [vmem:[%s1 + $0x10] sm:$0xff]
      %v304 = vld [vmem:[%s1 + $0x18] sm:$0xff]
      %v305 = vld [vmem:[%s1 + $0x20] sm:$0xff]
      %v306 = vld [vmem:[%s1 + $0x28] sm:$0xff]
      %v307 = vld [vmem:[%s1 + $0x30] sm:$0xff]
      %v308 = vld [vmem:[%s1 + $0x38] sm:$0xff]
      %v309 = vadd.f32 %v293, %v301
      %v310 = vadd.f32 %v294, %v302
      %v311 = vadd.f32 %v295, %v303
      %v312 = vadd.f32 %v296, %v304
      %v313 = vadd.f32 %v297, %v305
      %v314 = vadd.f32 %v298, %v306
      %v315 = vadd.f32 %v299, %v307
      %v316 = vadd.f32 %v300, %v308
      %v317 = vpack.c.bf16 %v311, %v309
      %v318 = vpack.c.bf16 %v312, %v310
      %v319 = vpack.c.bf16 %v315, %v313
      %v320 = vpack.c.bf16 %v316, %v314
      %322 = vset.pattern.permute.xlu0 0
      %323 = vperm.xlu0 %322, %v277
      %v324 = vpop.permute.xlu0 %323
      %327 = vset.pattern.permute.xlu0 0
      %328 = vperm.xlu0 %327, %v278
      %v329 = vpop.permute.xlu0 %328
      %332 = vset.pattern.permute.xlu0 0
      %333 = vperm.xlu0 %332, %v279
      %v334 = vpop.permute.xlu0 %333
      %337 = vset.pattern.permute.xlu0 0
      %338 = vperm.xlu0 %337, %v280
      %v339 = vpop.permute.xlu0 %338
      %342 = vset.pattern.permute.xlu0 0
      %343 = vperm.xlu0 %342, %v281
      %v344 = vpop.permute.xlu0 %343
      %347 = vset.pattern.permute.xlu0 0
      %348 = vperm.xlu0 %347, %v282
      %v349 = vpop.permute.xlu0 %348
      %352 = vset.pattern.permute.xlu0 0
      %353 = vperm.xlu0 %352, %v283
      %v354 = vpop.permute.xlu0 %353
      %357 = vset.pattern.permute.xlu0 0
      %358 = vperm.xlu0 %357, %v284
      %v359 = vpop.permute.xlu0 %358
      %362 = vset.pattern.permute.xlu0 0
      %363 = vperm.xlu0 %362, %v285
      %v364 = vpop.permute.xlu0 %363
      %367 = vset.pattern.permute.xlu0 0
      %368 = vperm.xlu0 %367, %v286
      %v369 = vpop.permute.xlu0 %368
      %372 = vset.pattern.permute.xlu0 0
      %373 = vperm.xlu0 %372, %v287
      %v374 = vpop.permute.xlu0 %373
      %377 = vset.pattern.permute.xlu0 0
      %378 = vperm.xlu0 %377, %v288
      %v379 = vpop.permute.xlu0 %378
      %vm381 = vcmask 261120
      %v383 = vsel %vm381, %v265, 0
      %v386 = vsel %vm381, %v266, 0
      %v389 = vsel %vm381, %v267, 0
      %v392 = vsel %vm381, %v268, 0
      %v395 = vsel %vm381, %v269, 0
      %v398 = vsel %vm381, %v270, 0
      %400 = vmatprep.subr.bf16.mxu0 %v318
      %401 = vmatpush1.bf16.msra.mxu0 %v317
      %402 = vmatprep.subr.bf16.mxu0 %v320
      %403 = vmatpush1.bf16.msra.mxu0 %v319
      %404 = vmatprep.subr.bf16.mxu0 0
      %405 = vmatpush1.bf16.msra.mxu0 0
      %406 = vmatprep.subr.bf16.mxu0 0
      %407 = vmatpush1.bf16.msra.mxu0 0
      %408 = vmatprep.subr.bf16.mxu0 0
      %409 = vmatpush1.bf16.msra.mxu0 0
      %410 = vmatprep.subr.bf16.mxu0 0
      %411 = vmatpush1.bf16.msra.mxu0 0
      %412 = vmatprep.subr.bf16.mxu0 0
      %413 = vmatpush1.bf16.msra.mxu0 0
      %414 = vmatprep.subr.bf16.mxu0 0
      %415 = vmatpush1.bf16.msra.mxu0 0
      %416 = vmatprep.subr.bf16.mxu0 0
      %417 = vmatpush1.bf16.msra.mxu0 0
      %418 = vmatprep.subr.bf16.mxu0 0
      %419 = vmatpush1.bf16.msra.mxu0 0
      %420 = vmatprep.subr.bf16.mxu0 0
      %421 = vmatpush1.bf16.msra.mxu0 0
      %422 = vmatprep.subr.bf16.mxu0 0
      %423 = vmatpush1.bf16.msra.mxu0 0
      %424 = vmatprep.subr.bf16.mxu0 0
      %425 = vmatpush1.bf16.msra.mxu0 0
      %426 = vmatprep.subr.bf16.mxu0 0
      %427 = vmatpush1.bf16.msra.mxu0 0
      %428 = vmatprep.subr.bf16.mxu0 0
      %429 = vmatpush1.bf16.msra.mxu0 0
      %430 = vmatprep.subr.bf16.mxu0 0
      %431 = vmatpush1.bf16.msra.mxu0 0
      %432 = vmatprep.mubr.bf16.mxu0 0
      %433 = vmatmul.mubr.bf16.gmra.mrb[0].mxu0 %v383
      %v434 = vpop.f32.mrb[0].mxu0
      %v435 = vadd.f32 %v324, %v434
      %v436 = vpop.f32.mrb[0].mxu0
      %v437 = vadd.f32 %v324, %v436
      %v438 = vpop.f32.mrb[0].mxu0
      %v439 = vadd.f32 %v329, %v438
      %v440 = vpop.f32.mrb[0].mxu0
      %v441 = vadd.f32 %v329, %v440
      %442 = vmatprep.mubr.bf16.mxu0 0
      %443 = vmatmul.mubr.bf16.gmra.mrb[0].mxu0 %v386
      %v444 = vpop.f32.mrb[0].mxu0
      %v445 = vadd.f32 %v334, %v444
      %v446 = vpop.f32.mrb[0].mxu0
      %v447 = vadd.f32 %v334, %v446
      %v448 = vpop.f32.mrb[0].mxu0
      %v449 = vadd.f32 %v339, %v448
      %v450 = vpop.f32.mrb[0].mxu0
      %v451 = vadd.f32 %v339, %v450
      %452 = vmatprep.mubr.bf16.mxu0 0
      %453 = vmatmul.mubr.bf16.gmra.mrb[0].mxu0 %v389
      %v454 = vpop.f32.mrb[0].mxu0
      %v455 = vadd.f32 %v344, %v454
      %v456 = vpop.f32.mrb[0].mxu0
      %v457 = vadd.f32 %v344, %v456
      %v458 = vpop.f32.mrb[0].mxu0
      %v459 = vadd.f32 %v349, %v458
      %v460 = vpop.f32.mrb[0].mxu0
      %v461 = vadd.f32 %v349, %v460
      %462 = vmatprep.mubr.bf16.mxu0 0
      %463 = vmatmul.mubr.bf16.gmra.mrb[0].mxu0 %v392
      %v464 = vpop.f32.mrb[0].mxu0
      %v465 = vadd.f32 %v354, %v464
      %v466 = vpop.f32.mrb[0].mxu0
      %v467 = vadd.f32 %v354, %v466
      %v468 = vpop.f32.mrb[0].mxu0
      %v469 = vadd.f32 %v359, %v468
      %v470 = vpop.f32.mrb[0].mxu0
      %v471 = vadd.f32 %v359, %v470
      %472 = vmatprep.mubr.bf16.mxu0 0
      %473 = vmatmul.mubr.bf16.gmra.mrb[0].mxu0 %v395
      %v474 = vpop.f32.mrb[0].mxu0
      %v475 = vadd.f32 %v364, %v474
      %v476 = vpop.f32.mrb[0].mxu0
      %v477 = vadd.f32 %v364, %v476
      %v478 = vpop.f32.mrb[0].mxu0
      %v479 = vadd.f32 %v369, %v478
      %v480 = vpop.f32.mrb[0].mxu0
      %v481 = vadd.f32 %v369, %v480
      %482 = vmatprep.mubr.bf16.mxu0 0
      %483 = vmatmul.mubr.bf16.gmra.mrb[0].mxu0 %v398
      %v484 = vpop.f32.mrb[0].mxu0
      %v485 = vadd.f32 %v374, %v484
      %v486 = vpop.f32.mrb[0].mxu0
      %v487 = vadd.f32 %v374, %v486
      %v488 = vpop.f32.mrb[0].mxu0
      %v489 = vadd.f32 %v379, %v488
      %v490 = vpop.f32.mrb[0].mxu0
      %v491 = vadd.f32 %v379, %v490
      %492 = vdwg.mxu0
      %v493 = vmul.f32 %v435, 0.35355338
      %v494 = vmul.f32 %v437, 0.35355338
      %v495 = vmul.f32 %v439, 0.35355338
      %v496 = vmul.f32 %v441, 0.35355338
      %v497 = vmul.f32 %v445, 0.35355338
      %v498 = vmul.f32 %v447, 0.35355338
      %v499 = vmul.f32 %v449, 0.35355338
      %v500 = vmul.f32 %v451, 0.35355338
      %501 = vxpose.xlu0.b32.start [1/16] %v455, 128
      %502 = vxpose.xlu0.b32.cont [2/16] %v459, 128
      %503 = vxpose.xlu0.b32.cont [3/16] %v465, 128
      %504 = vxpose.xlu0.b32.cont [4/16] %v469, 128
      %505 = vxpose.xlu0.b32.cont [5/16] 0.0, 128
      %506 = vxpose.xlu0.b32.cont [6/16] 0.0, 128
      %507 = vxpose.xlu0.b32.cont [7/16] 0.0, 128
      %508 = vxpose.xlu0.b32.cont [8/16] 0.0, 128
      %509 = vxpose.xlu0.b32.cont [9/16] 0.0, 128
      %510 = vxpose.xlu0.b32.cont [10/16] 0.0, 128
      %511 = vxpose.xlu0.b32.cont [11/16] 0.0, 128
      %512 = vxpose.xlu0.b32.cont [12/16] 0.0, 128
      %513 = vxpose.xlu0.b32.cont [13/16] 0.0, 128
      %514 = vxpose.xlu0.b32.cont [14/16] 0.0, 128
      %515 = vxpose.xlu0.b32.cont [15/16] 0.0, 128
      %516 = vxpose.xlu0.b32.end [16/16] 0.0, 128
      %v517 = vpop.trf.xlu0
      %v518 = vpop.trf.xlu0
      %v519 = vpop.trf.xlu0
      %v520 = vpop.trf.xlu0
      %v521 = vpop.trf.xlu0
      %v522 = vpop.trf.xlu0
      %v523 = vpop.trf.xlu0
      %v524 = vpop.trf.xlu0
      %v525 = vpop.trf.xlu0
      %v526 = vpop.trf.xlu0
      %v527 = vpop.trf.xlu0
      %v528 = vpop.trf.xlu0
      %v529 = vpop.trf.xlu0
      %v530 = vpop.trf.xlu0
      %v531 = vpop.trf.xlu0
      %v532 = vpop.trf.xlu0
      %533 = vxpose.xlu0.b32.start [1/16] %v457, 128
      %534 = vxpose.xlu0.b32.cont [2/16] %v461, 128
      %535 = vxpose.xlu0.b32.cont [3/16] %v467, 128
      %536 = vxpose.xlu0.b32.cont [4/16] %v471, 128
      %537 = vxpose.xlu0.b32.cont [5/16] 0.0, 128
      %538 = vxpose.xlu0.b32.cont [6/16] 0.0, 128
      %539 = vxpose.xlu0.b32.cont [7/16] 0.0, 128
      %540 = vxpose.xlu0.b32.cont [8/16] 0.0, 128
      %541 = vxpose.xlu0.b32.cont [9/16] 0.0, 128
      %542 = vxpose.xlu0.b32.cont [10/16] 0.0, 128
      %543 = vxpose.xlu0.b32.cont [11/16] 0.0, 128
      %544 = vxpose.xlu0.b32.cont [12/16] 0.0, 128
      %545 = vxpose.xlu0.b32.cont [13/16] 0.0, 128
      %546 = vxpose.xlu0.b32.cont [14/16] 0.0, 128
      %547 = vxpose.xlu0.b32.cont [15/16] 0.0, 128
      %548 = vxpose.xlu0.b32.end [16/16] 0.0, 128
      %v549 = vpop.trf.xlu0
      %v550 = vpop.trf.xlu0
      %v551 = vpop.trf.xlu0
      %v552 = vpop.trf.xlu0
      %v553 = vpop.trf.xlu0
      %v554 = vpop.trf.xlu0
      %v555 = vpop.trf.xlu0
      %v556 = vpop.trf.xlu0
      %v557 = vpop.trf.xlu0
      %v558 = vpop.trf.xlu0
      %v559 = vpop.trf.xlu0
      %v560 = vpop.trf.xlu0
      %v561 = vpop.trf.xlu0
      %v562 = vpop.trf.xlu0
      %v563 = vpop.trf.xlu0
      %v564 = vpop.trf.xlu0
      %v565 = vpack.c.bf16 %v518, %v517
      %v566 = vpack.c.bf16 %v520, %v519
      %v567 = vpack.c.bf16 %v522, %v521
      %v568 = vpack.c.bf16 %v524, %v523
      %v569 = vpack.c.bf16 %v526, %v525
      %v570 = vpack.c.bf16 %v528, %v527
      %v571 = vpack.c.bf16 %v530, %v529
      %v572 = vpack.c.bf16 %v532, %v531
      %v573 = vpack.c.bf16 %v550, %v549
      %v574 = vpack.c.bf16 %v552, %v551
      %v575 = vpack.c.bf16 %v554, %v553
      %v576 = vpack.c.bf16 %v556, %v555
      %v577 = vpack.c.bf16 %v558, %v557
      %v578 = vpack.c.bf16 %v560, %v559
      %v579 = vpack.c.bf16 %v562, %v561
      %v580 = vpack.c.bf16 %v564, %v563
      %v581 = vpack.c.bf16 %v493, %v493
      %v582 = vpack.c.bf16 %v494, %v494
      %v583 = vpack.c.bf16 %v475, %v475
      %v584 = vpack.c.bf16 %v477, %v477
      %vm585 = vcmask 64512
      %v587 = vsel %vm585, %v565, 0
      %v590 = vsel %vm585, %v566, 0
      %v593 = vsel %vm585, %v567, 0
      %v596 = vsel %vm585, %v568, 0
      %v599 = vsel %vm585, %v569, 0
      %v602 = vsel %vm585, %v570, 0
      %v605 = vsel %vm585, %v571, 0
      %v608 = vsel %vm585, %v572, 0
      %v611 = vsel %vm585, %v573, 0
      %v614 = vsel %vm585, %v574, 0
      %v617 = vsel %vm585, %v575, 0
      %v620 = vsel %vm585, %v576, 0
      %v623 = vsel %vm585, %v577, 0
      %v626 = vsel %vm585, %v578, 0
      %v629 = vsel %vm585, %v579, 0
      %v632 = vsel %vm585, %v580, 0
      %vm634 = vcmask 1043456
      %v636 = vsel %vm634, %v581, 0
      %v639 = vsel %vm634, %v582, 0
      %641 = vmatprep.subr.bf16.mxu0 %v639
      %642 = vmatpush1.bf16.msra.mxu0 %v636
      %643 = vmatprep.subr.bf16.mxu0 0
      %644 = vmatpush1.bf16.msra.mxu0 0
      %645 = vmatprep.subr.bf16.mxu0 0
      %646 = vmatpush1.bf16.msra.mxu0 0
      %647 = vmatprep.subr.bf16.mxu0 0
      %648 = vmatpush1.bf16.msra.mxu0 0
      %649 = vmatprep.subr.bf16.mxu0 0
      %650 = vmatpush1.bf16.msra.mxu0 0
      %651 = vmatprep.subr.bf16.mxu0 0
      %652 = vmatpush1.bf16.msra.mxu0 0
      %653 = vmatprep.subr.bf16.mxu0 0
      %654 = vmatpush1.bf16.msra.mxu0 0
      %655 = vmatprep.subr.bf16.mxu0 0
      %656 = vmatpush1.bf16.msra.mxu0 0
      %657 = vmatprep.subr.bf16.mxu0 0
      %658 = vmatpush1.bf16.msra.mxu0 0
      %659 = vmatprep.subr.bf16.mxu0 0
      %660 = vmatpush1.bf16.msra.mxu0 0
      %661 = vmatprep.subr.bf16.mxu0 0
      %662 = vmatpush1.bf16.msra.mxu0 0
      %663 = vmatprep.subr.bf16.mxu0 0
      %664 = vmatpush1.bf16.msra.mxu0 0
      %665 = vmatprep.subr.bf16.mxu0 0
      %666 = vmatpush1.bf16.msra.mxu0 0
      %667 = vmatprep.subr.bf16.mxu0 0
      %668 = vmatpush1.bf16.msra.mxu0 0
      %669 = vmatprep.subr.bf16.mxu0 0
      %670 = vmatpush1.bf16.msra.mxu0 0
      %671 = vmatprep.subr.bf16.mxu0 0
      %672 = vmatpush1.bf16.msra.mxu0 0
      %673 = vmatprep.mubr.bf16.mxu0 0
      %674 = vmatmul.mubr.bf16.gmra.mrb[0].mxu0 %v587
      %v675 = vpop.f32.mrb[0].mxu0
      %v676 = vadd.f32 0.0, %v675
      %v677 = vpop.f32.mrb[0].mxu0
      %v678 = vadd.f32 0.0, %v677
      %v679 = vpop.f32.mrb[0].mxu0
      %v680 = vadd.f32 0.0, %v679
      %v681 = vpop.f32.mrb[0].mxu0
      %v682 = vadd.f32 0.0, %v681
      %683 = vmatprep.mubr.bf16.mxu0 0
      %684 = vmatmul.mubr.bf16.gmra.mrb[0].mxu0 %v590
      %v685 = vpop.f32.mrb[0].mxu0
      %v686 = vadd.f32 0.0, %v685
      %v687 = vpop.f32.mrb[0].mxu0
      %v688 = vadd.f32 0.0, %v687
      %v689 = vpop.f32.mrb[0].mxu0
      %v690 = vadd.f32 0.0, %v689
      %v691 = vpop.f32.mrb[0].mxu0
      %v692 = vadd.f32 0.0, %v691
      %693 = vmatprep.mubr.bf16.mxu0 0
      %694 = vmatmul.mubr.bf16.gmra.mrb[0].mxu0 %v593
      %v695 = vpop.f32.mrb[0].mxu0
      %v696 = vadd.f32 0.0, %v695
      %v697 = vpop.f32.mrb[0].mxu0
      %v698 = vadd.f32 0.0, %v697
      %v699 = vpop.f32.mrb[0].mxu0
      %v700 = vadd.f32 0.0, %v699
      %v701 = vpop.f32.mrb[0].mxu0
      %v702 = vadd.f32 0.0, %v701
      %703 = vmatprep.mubr.bf16.mxu0 0
      %704 = vmatmul.mubr.bf16.gmra.mrb[0].mxu0 %v596
      %v705 = vpop.f32.mrb[0].mxu0
      %v706 = vadd.f32 0.0, %v705
      %v707 = vpop.f32.mrb[0].mxu0
      %v708 = vadd.f32 0.0, %v707
      %v709 = vpop.f32.mrb[0].mxu0
      %v710 = vadd.f32 0.0, %v709
      %v711 = vpop.f32.mrb[0].mxu0
      %v712 = vadd.f32 0.0, %v711
      %713 = vmatprep.mubr.bf16.mxu0 0
      %714 = vmatmul.mubr.bf16.gmra.mrb[0].mxu0 %v599
      %v715 = vpop.f32.mrb[0].mxu0
      %v716 = vadd.f32 0.0, %v715
      %v717 = vpop.f32.mrb[0].mxu0
      %v718 = vadd.f32 0.0, %v717
      %v719 = vpop.f32.mrb[0].mxu0
      %v720 = vadd.f32 0.0, %v719
      %v721 = vpop.f32.mrb[0].mxu0
      %v722 = vadd.f32 0.0, %v721
      %723 = vmatprep.mubr.bf16.mxu0 0
      %724 = vmatmul.mubr.bf16.gmra.mrb[0].mxu0 %v602
      %v725 = vpop.f32.mrb[0].mxu0
      %v726 = vadd.f32 0.0, %v725
      %v727 = vpop.f32.mrb[0].mxu0
      %v728 = vadd.f32 0.0, %v727
      %v729 = vpop.f32.mrb[0].mxu0
      %v730 = vadd.f32 0.0, %v729
      %v731 = vpop.f32.mrb[0].mxu0
      %v732 = vadd.f32 0.0, %v731
      %733 = vmatprep.mubr.bf16.mxu0 0
      %734 = vmatmul.mubr.bf16.gmra.mrb[0].mxu0 %v605
      %v735 = vpop.f32.mrb[0].mxu0
      %v736 = vadd.f32 0.0, %v735
      %v737 = vpop.f32.mrb[0].mxu0
      %v738 = vadd.f32 0.0, %v737
      %v739 = vpop.f32.mrb[0].mxu0
      %v740 = vadd.f32 0.0, %v739
      %v741 = vpop.f32.mrb[0].mxu0
      %v742 = vadd.f32 0.0, %v741
      %743 = vmatprep.mubr.bf16.mxu0 0
      %744 = vmatmul.mubr.bf16.gmra.mrb[0].mxu0 %v608
      %v745 = vpop.f32.mrb[0].mxu0
      %v746 = vadd.f32 0.0, %v745
      %v747 = vpop.f32.mrb[0].mxu0
      %v748 = vadd.f32 0.0, %v747
      %v749 = vpop.f32.mrb[0].mxu0
      %v750 = vadd.f32 0.0, %v749
      %v751 = vpop.f32.mrb[0].mxu0
      %v752 = vadd.f32 0.0, %v751
      %753 = vmatprep.mubr.bf16.mxu0 0
      %754 = vmatmul.mubr.bf16.gmra.mrb[0].mxu0 %v611
      %v755 = vpop.f32.mrb[0].mxu0
      %v756 = vadd.f32 0.0, %v755
      %v757 = vpop.f32.mrb[0].mxu0
      %v758 = vadd.f32 0.0, %v757
      %v759 = vpop.f32.mrb[0].mxu0
      %v760 = vadd.f32 0.0, %v759
      %v761 = vpop.f32.mrb[0].mxu0
      %v762 = vadd.f32 0.0, %v761
      %763 = vmatprep.mubr.bf16.mxu0 0
      %764 = vmatmul.mubr.bf16.gmra.mrb[0].mxu0 %v614
      %v765 = vpop.f32.mrb[0].mxu0
      %v766 = vadd.f32 0.0, %v765
      %v767 = vpop.f32.mrb[0].mxu0
      %v768 = vadd.f32 0.0, %v767
      %v769 = vpop.f32.mrb[0].mxu0
      %v770 = vadd.f32 0.0, %v769
      %v771 = vpop.f32.mrb[0].mxu0
      %v772 = vadd.f32 0.0, %v771
      %773 = vmatprep.mubr.bf16.mxu0 0
      %774 = vmatmul.mubr.bf16.gmra.mrb[0].mxu0 %v617
      %v775 = vpop.f32.mrb[0].mxu0
      %v776 = vadd.f32 0.0, %v775
      %v777 = vpop.f32.mrb[0].mxu0
      %v778 = vadd.f32 0.0, %v777
      %v779 = vpop.f32.mrb[0].mxu0
      %v780 = vadd.f32 0.0, %v779
      %v781 = vpop.f32.mrb[0].mxu0
      %v782 = vadd.f32 0.0, %v781
      %783 = vmatprep.mubr.bf16.mxu0 0
      %784 = vmatmul.mubr.bf16.gmra.mrb[0].mxu0 %v620
      %v785 = vpop.f32.mrb[0].mxu0
      %v786 = vadd.f32 0.0, %v785
      %v787 = vpop.f32.mrb[0].mxu0
      %v788 = vadd.f32 0.0, %v787
      %v789 = vpop.f32.mrb[0].mxu0
      %v790 = vadd.f32 0.0, %v789
      %v791 = vpop.f32.mrb[0].mxu0
      %v792 = vadd.f32 0.0, %v791
      %793 = vmatprep.mubr.bf16.mxu0 0
      %794 = vmatmul.mubr.bf16.gmra.mrb[0].mxu0 %v623
      %v795 = vpop.f32.mrb[0].mxu0
      %v796 = vadd.f32 0.0, %v795
      %v797 = vpop.f32.mrb[0].mxu0
      %v798 = vadd.f32 0.0, %v797
      %v799 = vpop.f32.mrb[0].mxu0
      %v800 = vadd.f32 0.0, %v799
      %v801 = vpop.f32.mrb[0].mxu0
      %v802 = vadd.f32 0.0, %v801
      %803 = vmatprep.mubr.bf16.mxu0 0
      %804 = vmatmul.mubr.bf16.gmra.mrb[0].mxu0 %v626
      %v805 = vpop.f32.mrb[0].mxu0
      %v806 = vadd.f32 0.0, %v805
      %v807 = vpop.f32.mrb[0].mxu0
      %v808 = vadd.f32 0.0, %v807
      %v809 = vpop.f32.mrb[0].mxu0
      %v810 = vadd.f32 0.0, %v809
      %v811 = vpop.f32.mrb[0].mxu0
      %v812 = vadd.f32 0.0, %v811
      %813 = vmatprep.mubr.bf16.mxu0 0
      %814 = vmatmul.mubr.bf16.gmra.mrb[0].mxu0 %v629
      %v815 = vpop.f32.mrb[0].mxu0
      %v816 = vadd.f32 0.0, %v815
      %v817 = vpop.f32.mrb[0].mxu0
      %v818 = vadd.f32 0.0, %v817
      %v819 = vpop.f32.mrb[0].mxu0
      %v820 = vadd.f32 0.0, %v819
      %v821 = vpop.f32.mrb[0].mxu0
      %v822 = vadd.f32 0.0, %v821
      %823 = vmatprep.mubr.bf16.mxu0 0
      %824 = vmatmul.mubr.bf16.gmra.mrb[0].mxu0 %v632
      %v825 = vpop.f32.mrb[0].mxu0
      %v826 = vadd.f32 0.0, %v825
      %v827 = vpop.f32.mrb[0].mxu0
      %v828 = vadd.f32 0.0, %v827
      %v829 = vpop.f32.mrb[0].mxu0
      %v830 = vadd.f32 0.0, %v829
      %v831 = vpop.f32.mrb[0].mxu0
      %v832 = vadd.f32 0.0, %v831
      %833 = vdwg.mxu0
      %v834 = vmax.f32 %v676, %v686
      %v835 = vmax.f32 %v680, %v690
      %v836 = vmax.f32 %v834, %v696
      %v837 = vmax.f32 %v835, %v700
      %v838 = vmax.f32 %v836, %v706
      %v839 = vmax.f32 %v837, %v710
      %v840 = vmax.f32 %v838, %v716
      %v841 = vmax.f32 %v839, %v720
      %v842 = vmax.f32 %v840, %v726
      %v843 = vmax.f32 %v841, %v730
      %v844 = vmax.f32 %v842, %v736
      %v845 = vmax.f32 %v843, %v740
      %v846 = vmax.f32 %v844, %v746
      %v847 = vmax.f32 %v845, %v750
      %v848 = vmax.f32 %v846, %v756
      %v849 = vmax.f32 %v847, %v760
      %v850 = vmax.f32 %v848, %v766
      %v851 = vmax.f32 %v849, %v770
      %v852 = vmax.f32 %v850, %v776
      %v853 = vmax.f32 %v851, %v780
      %v854 = vmax.f32 %v852, %v786
      %v855 = vmax.f32 %v853, %v790
      %v856 = vmax.f32 %v854, %v796
      %v857 = vmax.f32 %v855, %v800
      %v858 = vmax.f32 %v856, %v806
      %v859 = vmax.f32 %v857, %v810
      %v860 = vmax.f32 %v858, %v816
      %v861 = vmax.f32 %v859, %v820
      %v862 = vmax.f32 %v860, %v826
      %v863 = vmax.f32 %v861, %v830
      %v864 = vmax.f32 %v862, %v863
      %v865 = vrot.slane %v864, 4
      %v866 = vmax.f32 %v864, %v865
      %v867 = vrot.slane %v866, 2
      %v868 = vmax.f32 %v866, %v867
      %v869 = vrot.slane %v868, 1
      %v870 = vmax.f32 %v868, %v869
      %v871 = vmax.f32 %v678, %v688
      %v872 = vmax.f32 %v682, %v692
      %v873 = vmax.f32 %v871, %v698
      %v874 = vmax.f32 %v872, %v702
      %v875 = vmax.f32 %v873, %v708
      %v876 = vmax.f32 %v874, %v712
      %v877 = vmax.f32 %v875, %v718
      %v878 = vmax.f32 %v876, %v722
      %v879 = vmax.f32 %v877, %v728
      %v880 = vmax.f32 %v878, %v732
      %v881 = vmax.f32 %v879, %v738
      %v882 = vmax.f32 %v880, %v742
      %v883 = vmax.f32 %v881, %v748
      %v884 = vmax.f32 %v882, %v752
      %v885 = vmax.f32 %v883, %v758
      %v886 = vmax.f32 %v884, %v762
      %v887 = vmax.f32 %v885, %v768
      %v888 = vmax.f32 %v886, %v772
      %v889 = vmax.f32 %v887, %v778
      %v890 = vmax.f32 %v888, %v782
      %v891 = vmax.f32 %v889, %v788
      %v892 = vmax.f32 %v890, %v792
      %v893 = vmax.f32 %v891, %v798
      %v894 = vmax.f32 %v892, %v802
      %v895 = vmax.f32 %v893, %v808
      %v896 = vmax.f32 %v894, %v812
      %v897 = vmax.f32 %v895, %v818
      %v898 = vmax.f32 %v896, %v822
      %v899 = vmax.f32 %v897, %v828
      %v900 = vmax.f32 %v898, %v832
      %v901 = vmax.f32 %v899, %v900
      %v902 = vrot.slane %v901, 4
      %v903 = vmax.f32 %v901, %v902
      %v904 = vrot.slane %v903, 2
      %v905 = vmax.f32 %v903, %v904
      %v906 = vrot.slane %v905, 1
      %v907 = vmax.f32 %v905, %v906
      %v908 = vsub.f32 %v676, %v870
      %v909 = vsub.f32 %v678, %v907
      %v910 = vsub.f32 %v680, %v870
      %v911 = vsub.f32 %v682, %v907
      %v912 = vsub.f32 %v686, %v870
      %v913 = vsub.f32 %v688, %v907
      %v914 = vsub.f32 %v690, %v870
      %v915 = vsub.f32 %v692, %v907
      %v916 = vsub.f32 %v696, %v870
      %v917 = vsub.f32 %v698, %v907
      %v918 = vsub.f32 %v700, %v870
      %v919 = vsub.f32 %v702, %v907
      %v920 = vsub.f32 %v706, %v870
      %v921 = vsub.f32 %v708, %v907
      %v922 = vsub.f32 %v710, %v870
      %v923 = vsub.f32 %v712, %v907
      %v924 = vsub.f32 %v716, %v870
      %v925 = vsub.f32 %v718, %v907
      %v926 = vsub.f32 %v720, %v870
      %v927 = vsub.f32 %v722, %v907
      %v928 = vsub.f32 %v726, %v870
      %v929 = vsub.f32 %v728, %v907
      %v930 = vsub.f32 %v730, %v870
      %v931 = vsub.f32 %v732, %v907
      %v932 = vsub.f32 %v736, %v870
      %v933 = vsub.f32 %v738, %v907
      %v934 = vsub.f32 %v740, %v870
      %v935 = vsub.f32 %v742, %v907
      %v936 = vsub.f32 %v746, %v870
      %v937 = vsub.f32 %v748, %v907
      %v938 = vsub.f32 %v750, %v870
      %v939 = vsub.f32 %v752, %v907
      %v940 = vsub.f32 %v756, %v870
      %v941 = vsub.f32 %v758, %v907
      %v942 = vsub.f32 %v760, %v870
      %v943 = vsub.f32 %v762, %v907
      %v944 = vsub.f32 %v766, %v870
      %v945 = vsub.f32 %v768, %v907
      %v946 = vsub.f32 %v770, %v870
      %v947 = vsub.f32 %v772, %v907
      %v948 = vsub.f32 %v776, %v870
      %v949 = vsub.f32 %v778, %v907
      %v950 = vsub.f32 %v780, %v870
      %v951 = vsub.f32 %v782, %v907
      %v952 = vsub.f32 %v786, %v870
      %v953 = vsub.f32 %v788, %v907
      %v954 = vsub.f32 %v790, %v870
      %v955 = vsub.f32 %v792, %v907
      %v956 = vsub.f32 %v796, %v870
      %v957 = vsub.f32 %v798, %v907
      %v958 = vsub.f32 %v800, %v870
      %v959 = vsub.f32 %v802, %v907
      %v960 = vsub.f32 %v806, %v870
      %v961 = vsub.f32 %v808, %v907
      %v962 = vsub.f32 %v810, %v870
      %v963 = vsub.f32 %v812, %v907
      %v964 = vsub.f32 %v816, %v870
      %v965 = vsub.f32 %v818, %v907
      %v966 = vsub.f32 %v820, %v870
      %v967 = vsub.f32 %v822, %v907
      %v968 = vsub.f32 %v826, %v870
      %v969 = vsub.f32 %v828, %v907
      %v970 = vsub.f32 %v830, %v870
      %v971 = vsub.f32 %v832, %v907
      %v972 = vmul.f32 %v908, 1.442695
      %v973 = vpow.pop %v972
      %v974 = vmul.f32 %v909, 1.442695
      %v975 = vpow.pop %v974
      %v976 = vmul.f32 %v910, 1.442695
      %v977 = vpow.pop %v976
      %v978 = vmul.f32 %v911, 1.442695
      %v979 = vpow.pop %v978
      %v980 = vmul.f32 %v912, 1.442695
      %v981 = vpow.pop %v980
      %v982 = vmul.f32 %v913, 1.442695
      %v983 = vpow.pop %v982
      %v984 = vmul.f32 %v914, 1.442695
      %v985 = vpow.pop %v984
      %v986 = vmul.f32 %v915, 1.442695
      %v987 = vpow.pop %v986
      %v988 = vmul.f32 %v916, 1.442695
      %v989 = vpow.pop %v988
      %v990 = vmul.f32 %v917, 1.442695
      %v991 = vpow.pop %v990
      %v992 = vmul.f32 %v918, 1.442695
      %v993 = vpow.pop %v992
      %v994 = vmul.f32 %v919, 1.442695
      %v995 = vpow.pop %v994
      %v996 = vmul.f32 %v920, 1.442695
      %v997 = vpow.pop %v996
      %v998 = vmul.f32 %v921, 1.442695
      %v999 = vpow.pop %v998
      %v1000 = vmul.f32 %v922, 1.442695
      %v1001 = vpow.pop %v1000
      %v1002 = vmul.f32 %v923, 1.442695
      %v1003 = vpow.pop %v1002
      %v1004 = vmul.f32 %v924, 1.442695
      %v1005 = vpow.pop %v1004
      %v1006 = vmul.f32 %v925, 1.442695
      %v1007 = vpow.pop %v1006
      %v1008 = vmul.f32 %v926, 1.442695
      %v1009 = vpow.pop %v1008
      %v1010 = vmul.f32 %v927, 1.442695
      %v1011 = vpow.pop %v1010
      %v1012 = vmul.f32 %v928, 1.442695
      %v1013 = vpow.pop %v1012
      %v1014 = vmul.f32 %v929, 1.442695
      %v1015 = vpow.pop %v1014
      %v1016 = vmul.f32 %v930, 1.442695
      %v1017 = vpow.pop %v1016
      %v1018 = vmul.f32 %v931, 1.442695
      %v1019 = vpow.pop %v1018
      %v1020 = vmul.f32 %v932, 1.442695
      %v1021 = vpow.pop %v1020
      %v1022 = vmul.f32 %v933, 1.442695
      %v1023 = vpow.pop %v1022
      %v1024 = vmul.f32 %v934, 1.442695
      %v1025 = vpow.pop %v1024
      %v1026 = vmul.f32 %v935, 1.442695
      %v1027 = vpow.pop %v1026
      %v1028 = vmul.f32 %v936, 1.442695
      %v1029 = vpow.pop %v1028
      %v1030 = vmul.f32 %v937, 1.442695
      %v1031 = vpow.pop %v1030
      %v1032 = vmul.f32 %v938, 1.442695
      %v1033 = vpow.pop %v1032
      %v1034 = vmul.f32 %v939, 1.442695
      %v1035 = vpow.pop %v1034
      %v1036 = vmul.f32 %v940, 1.442695
      %v1037 = vpow.pop %v1036
      %v1038 = vmul.f32 %v941, 1.442695
      %v1039 = vpow.pop %v1038
      %v1040 = vmul.f32 %v942, 1.442695
      %v1041 = vpow.pop %v1040
      %v1042 = vmul.f32 %v943, 1.442695
      %v1043 = vpow.pop %v1042
      %v1044 = vmul.f32 %v944, 1.442695
      %v1045 = vpow.pop %v1044
      %v1046 = vmul.f32 %v945, 1.442695
      %v1047 = vpow.pop %v1046
      %v1048 = vmul.f32 %v946, 1.442695
      %v1049 = vpow.pop %v1048
      %v1050 = vmul.f32 %v947, 1.442695
      %v1051 = vpow.pop %v1050
      %v1052 = vmul.f32 %v948, 1.442695
      %v1053 = vpow.pop %v1052
      %v1054 = vmul.f32 %v949, 1.442695
      %v1055 = vpow.pop %v1054
      %v1056 = vmul.f32 %v950, 1.442695
      %v1057 = vpow.pop %v1056
      %v1058 = vmul.f32 %v951, 1.442695
      %v1059 = vpow.pop %v1058
      %v1060 = vmul.f32 %v952, 1.442695
      %v1061 = vpow.pop %v1060
      %v1062 = vmul.f32 %v953, 1.442695
      %v1063 = vpow.pop %v1062
      %v1064 = vmul.f32 %v954, 1.442695
      %v1065 = vpow.pop %v1064
      %v1066 = vmul.f32 %v955, 1.442695
      %v1067 = vpow.pop %v1066
      %v1068 = vmul.f32 %v956, 1.442695
      %v1069 = vpow.pop %v1068
      %v1070 = vmul.f32 %v957, 1.442695
      %v1071 = vpow.pop %v1070
      %v1072 = vmul.f32 %v958, 1.442695
      %v1073 = vpow.pop %v1072
      %v1074 = vmul.f32 %v959, 1.442695
      %v1075 = vpow.pop %v1074
      %v1076 = vmul.f32 %v960, 1.442695
      %v1077 = vpow.pop %v1076
      %v1078 = vmul.f32 %v961, 1.442695
      %v1079 = vpow.pop %v1078
      %v1080 = vmul.f32 %v962, 1.442695
      %v1081 = vpow.pop %v1080
      %v1082 = vmul.f32 %v963, 1.442695
      %v1083 = vpow.pop %v1082
      %v1084 = vmul.f32 %v964, 1.442695
      %v1085 = vpow.pop %v1084
      %v1086 = vmul.f32 %v965, 1.442695
      %v1087 = vpow.pop %v1086
      %v1088 = vmul.f32 %v966, 1.442695
      %v1089 = vpow.pop %v1088
      %v1090 = vmul.f32 %v967, 1.442695
      %v1091 = vpow.pop %v1090
      %v1092 = vmul.f32 %v968, 1.442695
      %v1093 = vpow.pop %v1092
      %v1094 = vmul.f32 %v969, 1.442695
      %v1095 = vpow.pop %v1094
      %v1096 = vmul.f32 %v970, 1.442695
      %v1097 = vpow.pop %v1096
      %v1098 = vmul.f32 %v971, 1.442695
      %v1099 = vpow.pop %v1098
      %v1100 = vadd.f32 %v973, %v977
      %v1101 = vadd.f32 %v1100, %v981
      %v1102 = vadd.f32 %v1101, %v985
      %v1103 = vadd.f32 %v1102, %v989
      %v1104 = vadd.f32 %v1103, %v993
      %v1105 = vadd.f32 %v1104, %v997
      %v1106 = vadd.f32 %v1105, %v1001
      %v1107 = vadd.f32 %v1106, %v1005
      %v1108 = vadd.f32 %v1107, %v1009
      %v1109 = vadd.f32 %v1108, %v1013
      %v1110 = vadd.f32 %v1109, %v1017
      %v1111 = vadd.f32 %v1110, %v1021
      %v1112 = vadd.f32 %v1111, %v1025
      %v1113 = vadd.f32 %v1112, %v1029
      %v1114 = vadd.f32 %v1113, %v1033
      %v1115 = vadd.f32 %v1114, %v1037
      %v1116 = vadd.f32 %v1115, %v1041
      %v1117 = vadd.f32 %v1116, %v1045
      %v1118 = vadd.f32 %v1117, %v1049
      %v1119 = vadd.f32 %v1118, %v1053
      %v1120 = vadd.f32 %v1119, %v1057
      %v1121 = vadd.f32 %v1120, %v1061
      %v1122 = vadd.f32 %v1121, %v1065
      %v1123 = vadd.f32 %v1122, %v1069
      %v1124 = vadd.f32 %v1123, %v1073
      %v1125 = vadd.f32 %v1124, %v1077
      %v1126 = vadd.f32 %v1125, %v1081
      %v1127 = vadd.f32 %v1126, %v1085
      %v1128 = vadd.f32 %v1127, %v1089
      %v1129 = vadd.f32 %v1128, %v1093
      %v1130 = vadd.f32 %v1129, %v1097
      %v1131 = vrot.slane %v1130, 4
      %v1132 = vadd.f32 %v1130, %v1131
      %v1133 = vrot.slane %v1132, 2
      %v1134 = vadd.f32 %v1132, %v1133
      %v1135 = vrot.slane %v1134, 1
      %v1136 = vadd.f32 %v1134, %v1135
      %v1137 = vadd.f32 %v975, %v979
      %v1138 = vadd.f32 %v1137, %v983
      %v1139 = vadd.f32 %v1138, %v987
      %v1140 = vadd.f32 %v1139, %v991
      %v1141 = vadd.f32 %v1140, %v995
      %v1142 = vadd.f32 %v1141, %v999
      %v1143 = vadd.f32 %v1142, %v1003
      %v1144 = vadd.f32 %v1143, %v1007
      %v1145 = vadd.f32 %v1144, %v1011
      %v1146 = vadd.f32 %v1145, %v1015
      %v1147 = vadd.f32 %v1146, %v1019
      %v1148 = vadd.f32 %v1147, %v1023
      %v1149 = vadd.f32 %v1148, %v1027
      %v1150 = vadd.f32 %v1149, %v1031
      %v1151 = vadd.f32 %v1150, %v1035
      %v1152 = vadd.f32 %v1151, %v1039
      %v1153 = vadd.f32 %v1152, %v1043
      %v1154 = vadd.f32 %v1153, %v1047
      %v1155 = vadd.f32 %v1154, %v1051
      %v1156 = vadd.f32 %v1155, %v1055
      %v1157 = vadd.f32 %v1156, %v1059
      %v1158 = vadd.f32 %v1157, %v1063
      %v1159 = vadd.f32 %v1158, %v1067
      %v1160 = vadd.f32 %v1159, %v1071
      %v1161 = vadd.f32 %v1160, %v1075
      %v1162 = vadd.f32 %v1161, %v1079
      %v1163 = vadd.f32 %v1162, %v1083
      %v1164 = vadd.f32 %v1163, %v1087
      %v1165 = vadd.f32 %v1164, %v1091
      %v1166 = vadd.f32 %v1165, %v1095
      %v1167 = vadd.f32 %v1166, %v1099
      %v1168 = vrot.slane %v1167, 4
      %v1169 = vadd.f32 %v1167, %v1168
      %v1170 = vrot.slane %v1169, 2
      %v1171 = vadd.f32 %v1169, %v1170
      %v1172 = vrot.slane %v1171, 1
      %v1173 = vadd.f32 %v1171, %v1172
      %v1174 = vpack.c.bf16 %v977, %v973
      %v1175 = vpack.c.bf16 %v979, %v975
      %v1176 = vpack.c.bf16 %v985, %v981
      %v1177 = vpack.c.bf16 %v987, %v983
      %v1178 = vpack.c.bf16 %v993, %v989
      %v1179 = vpack.c.bf16 %v995, %v991
      %v1180 = vpack.c.bf16 %v1001, %v997
      %v1181 = vpack.c.bf16 %v1003, %v999
      %v1182 = vpack.c.bf16 %v1009, %v1005
      %v1183 = vpack.c.bf16 %v1011, %v1007
      %v1184 = vpack.c.bf16 %v1017, %v1013
      %v1185 = vpack.c.bf16 %v1019, %v1015
      %v1186 = vpack.c.bf16 %v1025, %v1021
      %v1187 = vpack.c.bf16 %v1027, %v1023
      %v1188 = vpack.c.bf16 %v1033, %v1029
      %v1189 = vpack.c.bf16 %v1035, %v1031
      %v1190 = vpack.c.bf16 %v1041, %v1037
      %v1191 = vpack.c.bf16 %v1043, %v1039
      %v1192 = vpack.c.bf16 %v1049, %v1045
      %v1193 = vpack.c.bf16 %v1051, %v1047
      %v1194 = vpack.c.bf16 %v1057, %v1053
      %v1195 = vpack.c.bf16 %v1059, %v1055
      %v1196 = vpack.c.bf16 %v1065, %v1061
      %v1197 = vpack.c.bf16 %v1067, %v1063
      %v1198 = vpack.c.bf16 %v1073, %v1069
      %v1199 = vpack.c.bf16 %v1075, %v1071
      %v1200 = vpack.c.bf16 %v1081, %v1077
      %v1201 = vpack.c.bf16 %v1083, %v1079
      %v1202 = vpack.c.bf16 %v1089, %v1085
      %v1203 = vpack.c.bf16 %v1091, %v1087
      %v1204 = vpack.c.bf16 %v1097, %v1093
      %v1205 = vpack.c.bf16 %v1099, %v1095
      %1206 = vmatprep.subr.bf16.mxu0 %v1175
      %1207 = vmatpush1.bf16.msra.mxu0 %v1174
      %1208 = vmatprep.subr.bf16.mxu0 %v1177
      %1209 = vmatpush1.bf16.msra.mxu0 %v1176
      %1210 = vmatprep.subr.bf16.mxu0 %v1179
      %1211 = vmatpush1.bf16.msra.mxu0 %v1178
      %1212 = vmatprep.subr.bf16.mxu0 %v1181
      %1213 = vmatpush1.bf16.msra.mxu0 %v1180
      %1214 = vmatprep.subr.bf16.mxu0 %v1183
      %1215 = vmatpush1.bf16.msra.mxu0 %v1182
      %1216 = vmatprep.subr.bf16.mxu0 %v1185
      %1217 = vmatpush1.bf16.msra.mxu0 %v1184
      %1218 = vmatprep.subr.bf16.mxu0 %v1187
      %1219 = vmatpush1.bf16.msra.mxu0 %v1186
      %1220 = vmatprep.subr.bf16.mxu0 %v1189
      %1221 = vmatpush1.bf16.msra.mxu0 %v1188
      %1222 = vmatprep.subr.bf16.mxu0 %v1191
      %1223 = vmatpush1.bf16.msra.mxu0 %v1190
      %1224 = vmatprep.subr.bf16.mxu0 %v1193
      %1225 = vmatpush1.bf16.msra.mxu0 %v1192
      %1226 = vmatprep.subr.bf16.mxu0 %v1195
      %1227 = vmatpush1.bf16.msra.mxu0 %v1194
      %1228 = vmatprep.subr.bf16.mxu0 %v1197
      %1229 = vmatpush1.bf16.msra.mxu0 %v1196
      %1230 = vmatprep.subr.bf16.mxu0 %v1199
      %1231 = vmatpush1.bf16.msra.mxu0 %v1198
      %1232 = vmatprep.subr.bf16.mxu0 %v1201
      %1233 = vmatpush1.bf16.msra.mxu0 %v1200
      %1234 = vmatprep.subr.bf16.mxu0 %v1203
      %1235 = vmatpush1.bf16.msra.mxu0 %v1202
      %1236 = vmatprep.subr.bf16.mxu0 %v1205
      %1237 = vmatpush1.bf16.msra.mxu0 %v1204
      %1238 = vmatprep.mubr.bf16.mxu0 %v584
      %1239 = vmatmul.mubr.bf16.gmra.mrb[0].mxu0 %v583
      %v1240 = vpop.f32.mrb[0].mxu0
      %v1241 = vadd.f32 0.0, %v1240
      %v1242 = vpop.f32.mrb[0].mxu0
      %v1243 = vadd.f32 0.0, %v1242
      %v1244 = vpop.f32.mrb[0].mxu0
      %v1245 = vpop.f32.mrb[0].mxu0
      %1246 = vdwg.mxu0
      %v1247 = vrcp.pop %v1136
      %v1248 = vrcp.pop %v1173
      %v1249 = vmul.f32 %v1241, %v1247
      %v1250 = vmul.f32 %v1243, %v1248
      %1251 = vst [vmem:[#allocation2] sm:$0xff] %v1249
      %1252 = vst [vmem:[#allocation2 + $0x8] sm:$0xff] %v1250
      %v1253 = vpack.c.bf16 %v495, %v495
      %v1254 = vpack.c.bf16 %v496, %v496
      %v1255 = vpack.c.bf16 %v479, %v479
      %v1256 = vpack.c.bf16 %v481, %v481
      %1273 = vrot.lane.b32.xlu0 %v565, 120
      %v1274 = vpop.permute.xlu0 %1273
      %1275 = vrot.lane.b32.xlu0 %v566, 120
      %v1276 = vpop.permute.xlu0 %1275
      %1277 = vrot.lane.b32.xlu0 %v567, 120
      %v1278 = vpop.permute.xlu0 %1277
      %1279 = vrot.lane.b32.xlu0 %v568, 120
      %v1280 = vpop.permute.xlu0 %1279
      %1281 = vrot.lane.b32.xlu0 %v569, 120
      %v1282 = vpop.permute.xlu0 %1281
      %1283 = vrot.lane.b32.xlu0 %v570, 120
      %v1284 = vpop.permute.xlu0 %1283
      %1285 = vrot.lane.b32.xlu0 %v571, 120
      %v1286 = vpop.permute.xlu0 %1285
      %1287 = vrot.lane.b32.xlu0 %v572, 120
      %v1288 = vpop.permute.xlu0 %1287
      %1289 = vrot.lane.b32.xlu0 %v573, 120
      %v1290 = vpop.permute.xlu0 %1289
      %1291 = vrot.lane.b32.xlu0 %v574, 120
      %v1292 = vpop.permute.xlu0 %1291
      %1293 = vrot.lane.b32.xlu0 %v575, 120
      %v1294 = vpop.permute.xlu0 %1293
      %1295 = vrot.lane.b32.xlu0 %v576, 120
      %v1296 = vpop.permute.xlu0 %1295
      %1297 = vrot.lane.b32.xlu0 %v577, 120
      %v1298 = vpop.permute.xlu0 %1297
      %1299 = vrot.lane.b32.xlu0 %v578, 120
      %v1300 = vpop.permute.xlu0 %1299
      %1301 = vrot.lane.b32.xlu0 %v579, 120
      %v1302 = vpop.permute.xlu0 %1301
      %1303 = vrot.lane.b32.xlu0 %v580, 120
      %v1304 = vpop.permute.xlu0 %1303
      %v1306 = vsel %vm585, %v1274, 0
      %v1309 = vsel %vm585, %v1276, 0
      %v1312 = vsel %vm585, %v1278, 0
      %v1315 = vsel %vm585, %v1280, 0
      %v1318 = vsel %vm585, %v1282, 0
      %v1321 = vsel %vm585, %v1284, 0
      %v1324 = vsel %vm585, %v1286, 0
      %v1327 = vsel %vm585, %v1288, 0
      %v1330 = vsel %vm585, %v1290, 0
      %v1333 = vsel %vm585, %v1292, 0
      %v1336 = vsel %vm585, %v1294, 0
      %v1339 = vsel %vm585, %v1296, 0
      %v1342 = vsel %vm585, %v1298, 0
      %v1345 = vsel %vm585, %v1300, 0
      %v1348 = vsel %vm585, %v1302, 0
      %v1351 = vsel %vm585, %v1304, 0
      %v1354 = vsel %vm634, %v1253, 0
      %v1357 = vsel %vm634, %v1254, 0
      %1359 = vmatprep.subr.bf16.mxu0 %v1357
      %1360 = vmatpush1.bf16.msra.mxu0 %v1354
      %1361 = vmatprep.subr.bf16.mxu0 0
      %1362 = vmatpush1.bf16.msra.mxu0 0
      %1363 = vmatprep.subr.bf16.mxu0 0
      %1364 = vmatpush1.bf16.msra.mxu0 0
      %1365 = vmatprep.subr.bf16.mxu0 0
      %1366 = vmatpush1.bf16.msra.mxu0 0
      %1367 = vmatprep.subr.bf16.mxu0 0
      %1368 = vmatpush1.bf16.msra.mxu0 0
      %1369 = vmatprep.subr.bf16.mxu0 0
      %1370 = vmatpush1.bf16.msra.mxu0 0
      %1371 = vmatprep.subr.bf16.mxu0 0
      %1372 = vmatpush1.bf16.msra.mxu0 0
      %1373 = vmatprep.subr.bf16.mxu0 0
      %1374 = vmatpush1.bf16.msra.mxu0 0
      %1375 = vmatprep.subr.bf16.mxu0 0
      %1376 = vmatpush1.bf16.msra.mxu0 0
      %1377 = vmatprep.subr.bf16.mxu0 0
      %1378 = vmatpush1.bf16.msra.mxu0 0
      %1379 = vmatprep.subr.bf16.mxu0 0
      %1380 = vmatpush1.bf16.msra.mxu0 0
      %1381 = vmatprep.subr.bf16.mxu0 0
      %1382 = vmatpush1.bf16.msra.mxu0 0
      %1383 = vmatprep.subr.bf16.mxu0 0
      %1384 = vmatpush1.bf16.msra.mxu0 0
      %1385 = vmatprep.subr.bf16.mxu0 0
      %1386 = vmatpush1.bf16.msra.mxu0 0
      %1387 = vmatprep.subr.bf16.mxu0 0
      %1388 = vmatpush1.bf16.msra.mxu0 0
      %1389 = vmatprep.subr.bf16.mxu0 0
      %1390 = vmatpush1.bf16.msra.mxu0 0
      %1391 = vmatprep.mubr.bf16.mxu0 0
      %1392 = vmatmul.mubr.bf16.gmra.mrb[0].mxu0 %v1306
      %v1393 = vpop.f32.mrb[0].mxu0
      %v1394 = vadd.f32 0.0, %v1393
      %v1395 = vpop.f32.mrb[0].mxu0
      %v1396 = vadd.f32 0.0, %v1395
      %v1397 = vpop.f32.mrb[0].mxu0
      %v1398 = vadd.f32 0.0, %v1397
      %v1399 = vpop.f32.mrb[0].mxu0
      %v1400 = vadd.f32 0.0, %v1399
      %1401 = vmatprep.mubr.bf16.mxu0 0
      %1402 = vmatmul.mubr.bf16.gmra.mrb[0].mxu0 %v1309
      %v1403 = vpop.f32.mrb[0].mxu0
      %v1404 = vadd.f32 0.0, %v1403
      %v1405 = vpop.f32.mrb[0].mxu0
      %v1406 = vadd.f32 0.0, %v1405
      %v1407 = vpop.f32.mrb[0].mxu0
      %v1408 = vadd.f32 0.0, %v1407
      %v1409 = vpop.f32.mrb[0].mxu0
      %v1410 = vadd.f32 0.0, %v1409
      %1411 = vmatprep.mubr.bf16.mxu0 0
      %1412 = vmatmul.mubr.bf16.gmra.mrb[0].mxu0 %v1312
      %v1413 = vpop.f32.mrb[0].mxu0
      %v1414 = vadd.f32 0.0, %v1413
      %v1415 = vpop.f32.mrb[0].mxu0
      %v1416 = vadd.f32 0.0, %v1415
      %v1417 = vpop.f32.mrb[0].mxu0
      %v1418 = vadd.f32 0.0, %v1417
      %v1419 = vpop.f32.mrb[0].mxu0
      %v1420 = vadd.f32 0.0, %v1419
      %1421 = vmatprep.mubr.bf16.mxu0 0
      %1422 = vmatmul.mubr.bf16.gmra.mrb[0].mxu0 %v1315
      %v1423 = vpop.f32.mrb[0].mxu0
      %v1424 = vadd.f32 0.0, %v1423
      %v1425 = vpop.f32.mrb[0].mxu0
      %v1426 = vadd.f32 0.0, %v1425
      %v1427 = vpop.f32.mrb[0].mxu0
      %v1428 = vadd.f32 0.0, %v1427
      %v1429 = vpop.f32.mrb[0].mxu0
      %v1430 = vadd.f32 0.0, %v1429
      %1431 = vmatprep.mubr.bf16.mxu0 0
      %1432 = vmatmul.mubr.bf16.gmra.mrb[0].mxu0 %v1318
      %v1433 = vpop.f32.mrb[0].mxu0
      %v1434 = vadd.f32 0.0, %v1433
      %v1435 = vpop.f32.mrb[0].mxu0
      %v1436 = vadd.f32 0.0, %v1435
      %v1437 = vpop.f32.mrb[0].mxu0
      %v1438 = vadd.f32 0.0, %v1437
      %v1439 = vpop.f32.mrb[0].mxu0
      %v1440 = vadd.f32 0.0, %v1439
      %1441 = vmatprep.mubr.bf16.mxu0 0
      %1442 = vmatmul.mubr.bf16.gmra.mrb[0].mxu0 %v1321
      %v1443 = vpop.f32.mrb[0].mxu0
      %v1444 = vadd.f32 0.0, %v1443
      %v1445 = vpop.f32.mrb[0].mxu0
      %v1446 = vadd.f32 0.0, %v1445
      %v1447 = vpop.f32.mrb[0].mxu0
      %v1448 = vadd.f32 0.0, %v1447
      %v1449 = vpop.f32.mrb[0].mxu0
      %v1450 = vadd.f32 0.0, %v1449
      %1451 = vmatprep.mubr.bf16.mxu0 0
      %1452 = vmatmul.mubr.bf16.gmra.mrb[0].mxu0 %v1324
      %v1453 = vpop.f32.mrb[0].mxu0
      %v1454 = vadd.f32 0.0, %v1453
      %v1455 = vpop.f32.mrb[0].mxu0
      %v1456 = vadd.f32 0.0, %v1455
      %v1457 = vpop.f32.mrb[0].mxu0
      %v1458 = vadd.f32 0.0, %v1457
      %v1459 = vpop.f32.mrb[0].mxu0
      %v1460 = vadd.f32 0.0, %v1459
      %1461 = vmatprep.mubr.bf16.mxu0 0
      %1462 = vmatmul.mubr.bf16.gmra.mrb[0].mxu0 %v1327
      %v1463 = vpop.f32.mrb[0].mxu0
      %v1464 = vadd.f32 0.0, %v1463
      %v1465 = vpop.f32.mrb[0].mxu0
      %v1466 = vadd.f32 0.0, %v1465
      %v1467 = vpop.f32.mrb[0].mxu0
      %v1468 = vadd.f32 0.0, %v1467
      %v1469 = vpop.f32.mrb[0].mxu0
      %v1470 = vadd.f32 0.0, %v1469
      %1471 = vmatprep.mubr.bf16.mxu0 0
      %1472 = vmatmul.mubr.bf16.gmra.mrb[0].mxu0 %v1330
      %v1473 = vpop.f32.mrb[0].mxu0
      %v1474 = vadd.f32 0.0, %v1473
      %v1475 = vpop.f32.mrb[0].mxu0
      %v1476 = vadd.f32 0.0, %v1475
      %v1477 = vpop.f32.mrb[0].mxu0
      %v1478 = vadd.f32 0.0, %v1477
      %v1479 = vpop.f32.mrb[0].mxu0
      %v1480 = vadd.f32 0.0, %v1479
      %1481 = vmatprep.mubr.bf16.mxu0 0
      %1482 = vmatmul.mubr.bf16.gmra.mrb[0].mxu0 %v1333
      %v1483 = vpop.f32.mrb[0].mxu0
      %v1484 = vadd.f32 0.0, %v1483
      %v1485 = vpop.f32.mrb[0].mxu0
      %v1486 = vadd.f32 0.0, %v1485
      %v1487 = vpop.f32.mrb[0].mxu0
      %v1488 = vadd.f32 0.0, %v1487
      %v1489 = vpop.f32.mrb[0].mxu0
      %v1490 = vadd.f32 0.0, %v1489
      %1491 = vmatprep.mubr.bf16.mxu0 0
      %1492 = vmatmul.mubr.bf16.gmra.mrb[0].mxu0 %v1336
      %v1493 = vpop.f32.mrb[0].mxu0
      %v1494 = vadd.f32 0.0, %v1493
      %v1495 = vpop.f32.mrb[0].mxu0
      %v1496 = vadd.f32 0.0, %v1495
      %v1497 = vpop.f32.mrb[0].mxu0
      %v1498 = vadd.f32 0.0, %v1497
      %v1499 = vpop.f32.mrb[0].mxu0
      %v1500 = vadd.f32 0.0, %v1499
      %1501 = vmatprep.mubr.bf16.mxu0 0
      %1502 = vmatmul.mubr.bf16.gmra.mrb[0].mxu0 %v1339
      %v1503 = vpop.f32.mrb[0].mxu0
      %v1504 = vadd.f32 0.0, %v1503
      %v1505 = vpop.f32.mrb[0].mxu0
      %v1506 = vadd.f32 0.0, %v1505
      %v1507 = vpop.f32.mrb[0].mxu0
      %v1508 = vadd.f32 0.0, %v1507
      %v1509 = vpop.f32.mrb[0].mxu0
      %v1510 = vadd.f32 0.0, %v1509
      %1511 = vmatprep.mubr.bf16.mxu0 0
      %1512 = vmatmul.mubr.bf16.gmra.mrb[0].mxu0 %v1342
      %v1513 = vpop.f32.mrb[0].mxu0
      %v1514 = vadd.f32 0.0, %v1513
      %v1515 = vpop.f32.mrb[0].mxu0
      %v1516 = vadd.f32 0.0, %v1515
      %v1517 = vpop.f32.mrb[0].mxu0
      %v1518 = vadd.f32 0.0, %v1517
      %v1519 = vpop.f32.mrb[0].mxu0
      %v1520 = vadd.f32 0.0, %v1519
      %1521 = vmatprep.mubr.bf16.mxu0 0
      %1522 = vmatmul.mubr.bf16.gmra.mrb[0].mxu0 %v1345
      %v1523 = vpop.f32.mrb[0].mxu0
      %v1524 = vadd.f32 0.0, %v1523
      %v1525 = vpop.f32.mrb[0].mxu0
      %v1526 = vadd.f32 0.0, %v1525
      %v1527 = vpop.f32.mrb[0].mxu0
      %v1528 = vadd.f32 0.0, %v1527
      %v1529 = vpop.f32.mrb[0].mxu0
      %v1530 = vadd.f32 0.0, %v1529
      %1531 = vmatprep.mubr.bf16.mxu0 0
      %1532 = vmatmul.mubr.bf16.gmra.mrb[0].mxu0 %v1348
      %v1533 = vpop.f32.mrb[0].mxu0
      %v1534 = vadd.f32 0.0, %v1533
      %v1535 = vpop.f32.mrb[0].mxu0
      %v1536 = vadd.f32 0.0, %v1535
      %v1537 = vpop.f32.mrb[0].mxu0
      %v1538 = vadd.f32 0.0, %v1537
      %v1539 = vpop.f32.mrb[0].mxu0
      %v1540 = vadd.f32 0.0, %v1539
      %1541 = vmatprep.mubr.bf16.mxu0 0
      %1542 = vmatmul.mubr.bf16.gmra.mrb[0].mxu0 %v1351
      %v1543 = vpop.f32.mrb[0].mxu0
      %v1544 = vadd.f32 0.0, %v1543
      %v1545 = vpop.f32.mrb[0].mxu0
      %v1546 = vadd.f32 0.0, %v1545
      %v1547 = vpop.f32.mrb[0].mxu0
      %v1548 = vadd.f32 0.0, %v1547
      %v1549 = vpop.f32.mrb[0].mxu0
      %v1550 = vadd.f32 0.0, %v1549
      %1551 = vdwg.mxu0
      %v1552 = vmax.f32 %v1394, %v1404
      %v1553 = vmax.f32 %v1398, %v1408
      %v1554 = vmax.f32 %v1552, %v1414
      %v1555 = vmax.f32 %v1553, %v1418
      %v1556 = vmax.f32 %v1554, %v1424
      %v1557 = vmax.f32 %v1555, %v1428
      %v1558 = vmax.f32 %v1556, %v1434
      %v1559 = vmax.f32 %v1557, %v1438
      %v1560 = vmax.f32 %v1558, %v1444
      %v1561 = vmax.f32 %v1559, %v1448
      %v1562 = vmax.f32 %v1560, %v1454
      %v1563 = vmax.f32 %v1561, %v1458
      %v1564 = vmax.f32 %v1562, %v1464
      %v1565 = vmax.f32 %v1563, %v1468
      %v1566 = vmax.f32 %v1564, %v1474
      %v1567 = vmax.f32 %v1565, %v1478
      %v1568 = vmax.f32 %v1566, %v1484
      %v1569 = vmax.f32 %v1567, %v1488
      %v1570 = vmax.f32 %v1568, %v1494
      %v1571 = vmax.f32 %v1569, %v1498
      %v1572 = vmax.f32 %v1570, %v1504
      %v1573 = vmax.f32 %v1571, %v1508
      %v1574 = vmax.f32 %v1572, %v1514
      %v1575 = vmax.f32 %v1573, %v1518
      %v1576 = vmax.f32 %v1574, %v1524
      %v1577 = vmax.f32 %v1575, %v1528
      %v1578 = vmax.f32 %v1576, %v1534
      %v1579 = vmax.f32 %v1577, %v1538
      %v1580 = vmax.f32 %v1578, %v1544
      %v1581 = vmax.f32 %v1579, %v1548
      %v1582 = vmax.f32 %v1580, %v1581
      %v1583 = vrot.slane %v1582, 4
      %v1584 = vmax.f32 %v1582, %v1583
      %v1585 = vrot.slane %v1584, 2
      %v1586 = vmax.f32 %v1584, %v1585
      %v1587 = vrot.slane %v1586, 1
      %v1588 = vmax.f32 %v1586, %v1587
      %v1589 = vmax.f32 %v1396, %v1406
      %v1590 = vmax.f32 %v1400, %v1410
      %v1591 = vmax.f32 %v1589, %v1416
      %v1592 = vmax.f32 %v1590, %v1420
      %v1593 = vmax.f32 %v1591, %v1426
      %v1594 = vmax.f32 %v1592, %v1430
      %v1595 = vmax.f32 %v1593, %v1436
      %v1596 = vmax.f32 %v1594, %v1440
      %v1597 = vmax.f32 %v1595, %v1446
      %v1598 = vmax.f32 %v1596, %v1450
      %v1599 = vmax.f32 %v1597, %v1456
      %v1600 = vmax.f32 %v1598, %v1460
      %v1601 = vmax.f32 %v1599, %v1466
      %v1602 = vmax.f32 %v1600, %v1470
      %v1603 = vmax.f32 %v1601, %v1476
      %v1604 = vmax.f32 %v1602, %v1480
      %v1605 = vmax.f32 %v1603, %v1486
      %v1606 = vmax.f32 %v1604, %v1490
      %v1607 = vmax.f32 %v1605, %v1496
      %v1608 = vmax.f32 %v1606, %v1500
      %v1609 = vmax.f32 %v1607, %v1506
      %v1610 = vmax.f32 %v1608, %v1510
      %v1611 = vmax.f32 %v1609, %v1516
      %v1612 = vmax.f32 %v1610, %v1520
      %v1613 = vmax.f32 %v1611, %v1526
      %v1614 = vmax.f32 %v1612, %v1530
      %v1615 = vmax.f32 %v1613, %v1536
      %v1616 = vmax.f32 %v1614, %v1540
      %v1617 = vmax.f32 %v1615, %v1546
      %v1618 = vmax.f32 %v1616, %v1550
      %v1619 = vmax.f32 %v1617, %v1618
      %v1620 = vrot.slane %v1619, 4
      %v1621 = vmax.f32 %v1619, %v1620
      %v1622 = vrot.slane %v1621, 2
      %v1623 = vmax.f32 %v1621, %v1622
      %v1624 = vrot.slane %v1623, 1
      %v1625 = vmax.f32 %v1623, %v1624
      %v1626 = vsub.f32 %v1394, %v1588
      %v1627 = vsub.f32 %v1396, %v1625
      %v1628 = vsub.f32 %v1398, %v1588
      %v1629 = vsub.f32 %v1400, %v1625
      %v1630 = vsub.f32 %v1404, %v1588
      %v1631 = vsub.f32 %v1406, %v1625
      %v1632 = vsub.f32 %v1408, %v1588
      %v1633 = vsub.f32 %v1410, %v1625
      %v1634 = vsub.f32 %v1414, %v1588
      %v1635 = vsub.f32 %v1416, %v1625
      %v1636 = vsub.f32 %v1418, %v1588
      %v1637 = vsub.f32 %v1420, %v1625
      %v1638 = vsub.f32 %v1424, %v1588
      %v1639 = vsub.f32 %v1426, %v1625
      %v1640 = vsub.f32 %v1428, %v1588
      %v1641 = vsub.f32 %v1430, %v1625
      %v1642 = vsub.f32 %v1434, %v1588
      %v1643 = vsub.f32 %v1436, %v1625
      %v1644 = vsub.f32 %v1438, %v1588
      %v1645 = vsub.f32 %v1440, %v1625
      %v1646 = vsub.f32 %v1444, %v1588
      %v1647 = vsub.f32 %v1446, %v1625
      %v1648 = vsub.f32 %v1448, %v1588
      %v1649 = vsub.f32 %v1450, %v1625
      %v1650 = vsub.f32 %v1454, %v1588
      %v1651 = vsub.f32 %v1456, %v1625
      %v1652 = vsub.f32 %v1458, %v1588
      %v1653 = vsub.f32 %v1460, %v1625
      %v1654 = vsub.f32 %v1464, %v1588
      %v1655 = vsub.f32 %v1466, %v1625
      %v1656 = vsub.f32 %v1468, %v1588
      %v1657 = vsub.f32 %v1470, %v1625
      %v1658 = vsub.f32 %v1474, %v1588
      %v1659 = vsub.f32 %v1476, %v1625
      %v1660 = vsub.f32 %v1478, %v1588
      %v1661 = vsub.f32 %v1480, %v1625
      %v1662 = vsub.f32 %v1484, %v1588
      %v1663 = vsub.f32 %v1486, %v1625
      %v1664 = vsub.f32 %v1488, %v1588
      %v1665 = vsub.f32 %v1490, %v1625
      %v1666 = vsub.f32 %v1494, %v1588
      %v1667 = vsub.f32 %v1496, %v1625
      %v1668 = vsub.f32 %v1498, %v1588
      %v1669 = vsub.f32 %v1500, %v1625
      %v1670 = vsub.f32 %v1504, %v1588
      %v1671 = vsub.f32 %v1506, %v1625
      %v1672 = vsub.f32 %v1508, %v1588
      %v1673 = vsub.f32 %v1510, %v1625
      %v1674 = vsub.f32 %v1514, %v1588
      %v1675 = vsub.f32 %v1516, %v1625
      %v1676 = vsub.f32 %v1518, %v1588
      %v1677 = vsub.f32 %v1520, %v1625
      %v1678 = vsub.f32 %v1524, %v1588
      %v1679 = vsub.f32 %v1526, %v1625
      %v1680 = vsub.f32 %v1528, %v1588
      %v1681 = vsub.f32 %v1530, %v1625
      %v1682 = vsub.f32 %v1534, %v1588
      %v1683 = vsub.f32 %v1536, %v1625
      %v1684 = vsub.f32 %v1538, %v1588
      %v1685 = vsub.f32 %v1540, %v1625
      %v1686 = vsub.f32 %v1544, %v1588
      %v1687 = vsub.f32 %v1546, %v1625
      %v1688 = vsub.f32 %v1548, %v1588
      %v1689 = vsub.f32 %v1550, %v1625
      %v1690 = vmul.f32 %v1626, 1.442695
      %v1691 = vpow.pop %v1690
      %v1692 = vmul.f32 %v1627, 1.442695
      %v1693 = vpow.pop %v1692
      %v1694 = vmul.f32 %v1628, 1.442695
      %v1695 = vpow.pop %v1694
      %v1696 = vmul.f32 %v1629, 1.442695
      %v1697 = vpow.pop %v1696
      %v1698 = vmul.f32 %v1630, 1.442695
      %v1699 = vpow.pop %v1698
      %v1700 = vmul.f32 %v1631, 1.442695
      %v1701 = vpow.pop %v1700
      %v1702 = vmul.f32 %v1632, 1.442695
      %v1703 = vpow.pop %v1702
      %v1704 = vmul.f32 %v1633, 1.442695
      %v1705 = vpow.pop %v1704
      %v1706 = vmul.f32 %v1634, 1.442695
      %v1707 = vpow.pop %v1706
      %v1708 = vmul.f32 %v1635, 1.442695
      %v1709 = vpow.pop %v1708
      %v1710 = vmul.f32 %v1636, 1.442695
      %v1711 = vpow.pop %v1710
      %v1712 = vmul.f32 %v1637, 1.442695
      %v1713 = vpow.pop %v1712
      %v1714 = vmul.f32 %v1638, 1.442695
      %v1715 = vpow.pop %v1714
      %v1716 = vmul.f32 %v1639, 1.442695
      %v1717 = vpow.pop %v1716
      %v1718 = vmul.f32 %v1640, 1.442695
      %v1719 = vpow.pop %v1718
      %v1720 = vmul.f32 %v1641, 1.442695
      %v1721 = vpow.pop %v1720
      %v1722 = vmul.f32 %v1642, 1.442695
      %v1723 = vpow.pop %v1722
      %v1724 = vmul.f32 %v1643, 1.442695
      %v1725 = vpow.pop %v1724
      %v1726 = vmul.f32 %v1644, 1.442695
      %v1727 = vpow.pop %v1726
      %v1728 = vmul.f32 %v1645, 1.442695
      %v1729 = vpow.pop %v1728
      %v1730 = vmul.f32 %v1646, 1.442695
      %v1731 = vpow.pop %v1730
      %v1732 = vmul.f32 %v1647, 1.442695
      %v1733 = vpow.pop %v1732
      %v1734 = vmul.f32 %v1648, 1.442695
      %v1735 = vpow.pop %v1734
      %v1736 = vmul.f32 %v1649, 1.442695
      %v1737 = vpow.pop %v1736
      %v1738 = vmul.f32 %v1650, 1.442695
      %v1739 = vpow.pop %v1738
      %v1740 = vmul.f32 %v1651, 1.442695
      %v1741 = vpow.pop %v1740
      %v1742 = vmul.f32 %v1652, 1.442695
      %v1743 = vpow.pop %v1742
      %v1744 = vmul.f32 %v1653, 1.442695
      %v1745 = vpow.pop %v1744
      %v1746 = vmul.f32 %v1654, 1.442695
      %v1747 = vpow.pop %v1746
      %v1748 = vmul.f32 %v1655, 1.442695
      %v1749 = vpow.pop %v1748
      %v1750 = vmul.f32 %v1656, 1.442695
      %v1751 = vpow.pop %v1750
      %v1752 = vmul.f32 %v1657, 1.442695
      %v1753 = vpow.pop %v1752
      %v1754 = vmul.f32 %v1658, 1.442695
      %v1755 = vpow.pop %v1754
      %v1756 = vmul.f32 %v1659, 1.442695
      %v1757 = vpow.pop %v1756
      %v1758 = vmul.f32 %v1660, 1.442695
      %v1759 = vpow.pop %v1758
      %v1760 = vmul.f32 %v1661, 1.442695
      %v1761 = vpow.pop %v1760
      %v1762 = vmul.f32 %v1662, 1.442695
      %v1763 = vpow.pop %v1762
      %v1764 = vmul.f32 %v1663, 1.442695
      %v1765 = vpow.pop %v1764
      %v1766 = vmul.f32 %v1664, 1.442695
      %v1767 = vpow.pop %v1766
      %v1768 = vmul.f32 %v1665, 1.442695
      %v1769 = vpow.pop %v1768
      %v1770 = vmul.f32 %v1666, 1.442695
      %v1771 = vpow.pop %v1770
      %v1772 = vmul.f32 %v1667, 1.442695
      %v1773 = vpow.pop %v1772
      %v1774 = vmul.f32 %v1668, 1.442695
      %v1775 = vpow.pop %v1774
      %v1776 = vmul.f32 %v1669, 1.442695
      %v1777 = vpow.pop %v1776
      %v1778 = vmul.f32 %v1670, 1.442695
      %v1779 = vpow.pop %v1778
      %v1780 = vmul.f32 %v1671, 1.442695
      %v1781 = vpow.pop %v1780
      %v1782 = vmul.f32 %v1672, 1.442695
      %v1783 = vpow.pop %v1782
      %v1784 = vmul.f32 %v1673, 1.442695
      %v1785 = vpow.pop %v1784
      %v1786 = vmul.f32 %v1674, 1.442695
      %v1787 = vpow.pop %v1786
      %v1788 = vmul.f32 %v1675, 1.442695
      %v1789 = vpow.pop %v1788
      %v1790 = vmul.f32 %v1676, 1.442695
      %v1791 = vpow.pop %v1790
      %v1792 = vmul.f32 %v1677, 1.442695
      %v1793 = vpow.pop %v1792
      %v1794 = vmul.f32 %v1678, 1.442695
      %v1795 = vpow.pop %v1794
      %v1796 = vmul.f32 %v1679, 1.442695
      %v1797 = vpow.pop %v1796
      %v1798 = vmul.f32 %v1680, 1.442695
      %v1799 = vpow.pop %v1798
      %v1800 = vmul.f32 %v1681, 1.442695
      %v1801 = vpow.pop %v1800
      %v1802 = vmul.f32 %v1682, 1.442695
      %v1803 = vpow.pop %v1802
      %v1804 = vmul.f32 %v1683, 1.442695
      %v1805 = vpow.pop %v1804
      %v1806 = vmul.f32 %v1684, 1.442695
      %v1807 = vpow.pop %v1806
      %v1808 = vmul.f32 %v1685, 1.442695
      %v1809 = vpow.pop %v1808
      %v1810 = vmul.f32 %v1686, 1.442695
      %v1811 = vpow.pop %v1810
      %v1812 = vmul.f32 %v1687, 1.442695
      %v1813 = vpow.pop %v1812
      %v1814 = vmul.f32 %v1688, 1.442695
      %v1815 = vpow.pop %v1814
      %v1816 = vmul.f32 %v1689, 1.442695
      %v1817 = vpow.pop %v1816
      %v1818 = vadd.f32 %v1691, %v1695
      %v1819 = vadd.f32 %v1818, %v1699
      %v1820 = vadd.f32 %v1819, %v1703
      %v1821 = vadd.f32 %v1820, %v1707
      %v1822 = vadd.f32 %v1821, %v1711
      %v1823 = vadd.f32 %v1822, %v1715
      %v1824 = vadd.f32 %v1823, %v1719
      %v1825 = vadd.f32 %v1824, %v1723
      %v1826 = vadd.f32 %v1825, %v1727
      %v1827 = vadd.f32 %v1826, %v1731
      %v1828 = vadd.f32 %v1827, %v1735
      %v1829 = vadd.f32 %v1828, %v1739
      %v1830 = vadd.f32 %v1829, %v1743
      %v1831 = vadd.f32 %v1830, %v1747
      %v1832 = vadd.f32 %v1831, %v1751
      %v1833 = vadd.f32 %v1832, %v1755
      %v1834 = vadd.f32 %v1833, %v1759
      %v1835 = vadd.f32 %v1834, %v1763
      %v1836 = vadd.f32 %v1835, %v1767
      %v1837 = vadd.f32 %v1836, %v1771
      %v1838 = vadd.f32 %v1837, %v1775
      %v1839 = vadd.f32 %v1838, %v1779
      %v1840 = vadd.f32 %v1839, %v1783
      %v1841 = vadd.f32 %v1840, %v1787
      %v1842 = vadd.f32 %v1841, %v1791
      %v1843 = vadd.f32 %v1842, %v1795
      %v1844 = vadd.f32 %v1843, %v1799
      %v1845 = vadd.f32 %v1844, %v1803
      %v1846 = vadd.f32 %v1845, %v1807
      %v1847 = vadd.f32 %v1846, %v1811
      %v1848 = vadd.f32 %v1847, %v1815
      %v1849 = vrot.slane %v1848, 4
      %v1850 = vadd.f32 %v1848, %v1849
      %v1851 = vrot.slane %v1850, 2
      %v1852 = vadd.f32 %v1850, %v1851
      %v1853 = vrot.slane %v1852, 1
      %v1854 = vadd.f32 %v1852, %v1853
      %v1855 = vadd.f32 %v1693, %v1697
      %v1856 = vadd.f32 %v1855, %v1701
      %v1857 = vadd.f32 %v1856, %v1705
      %v1858 = vadd.f32 %v1857, %v1709
      %v1859 = vadd.f32 %v1858, %v1713
      %v1860 = vadd.f32 %v1859, %v1717
      %v1861 = vadd.f32 %v1860, %v1721
      %v1862 = vadd.f32 %v1861, %v1725
      %v1863 = vadd.f32 %v1862, %v1729
      %v1864 = vadd.f32 %v1863, %v1733
      %v1865 = vadd.f32 %v1864, %v1737
      %v1866 = vadd.f32 %v1865, %v1741
      %v1867 = vadd.f32 %v1866, %v1745
      %v1868 = vadd.f32 %v1867, %v1749
      %v1869 = vadd.f32 %v1868, %v1753
      %v1870 = vadd.f32 %v1869, %v1757
      %v1871 = vadd.f32 %v1870, %v1761
      %v1872 = vadd.f32 %v1871, %v1765
      %v1873 = vadd.f32 %v1872, %v1769
      %v1874 = vadd.f32 %v1873, %v1773
      %v1875 = vadd.f32 %v1874, %v1777
      %v1876 = vadd.f32 %v1875, %v1781
      %v1877 = vadd.f32 %v1876, %v1785
      %v1878 = vadd.f32 %v1877, %v1789
      %v1879 = vadd.f32 %v1878, %v1793
      %v1880 = vadd.f32 %v1879, %v1797
      %v1881 = vadd.f32 %v1880, %v1801
      %v1882 = vadd.f32 %v1881, %v1805
      %v1883 = vadd.f32 %v1882, %v1809
      %v1884 = vadd.f32 %v1883, %v1813
      %v1885 = vadd.f32 %v1884, %v1817
      %v1886 = vrot.slane %v1885, 4
      %v1887 = vadd.f32 %v1885, %v1886
      %v1888 = vrot.slane %v1887, 2
      %v1889 = vadd.f32 %v1887, %v1888
      %v1890 = vrot.slane %v1889, 1
      %v1891 = vadd.f32 %v1889, %v1890
      %v1892 = vpack.c.bf16 %v1695, %v1691
      %v1893 = vpack.c.bf16 %v1697, %v1693
      %v1894 = vpack.c.bf16 %v1703, %v1699
      %v1895 = vpack.c.bf16 %v1705, %v1701
      %v1896 = vpack.c.bf16 %v1711, %v1707
      %v1897 = vpack.c.bf16 %v1713, %v1709
      %v1898 = vpack.c.bf16 %v1719, %v1715
      %v1899 = vpack.c.bf16 %v1721, %v1717
      %v1900 = vpack.c.bf16 %v1727, %v1723
      %v1901 = vpack.c.bf16 %v1729, %v1725
      %v1902 = vpack.c.bf16 %v1735, %v1731
      %v1903 = vpack.c.bf16 %v1737, %v1733
      %v1904 = vpack.c.bf16 %v1743, %v1739
      %v1905 = vpack.c.bf16 %v1745, %v1741
      %v1906 = vpack.c.bf16 %v1751, %v1747
      %v1907 = vpack.c.bf16 %v1753, %v1749
      %v1908 = vpack.c.bf16 %v1759, %v1755
      %v1909 = vpack.c.bf16 %v1761, %v1757
      %v1910 = vpack.c.bf16 %v1767, %v1763
      %v1911 = vpack.c.bf16 %v1769, %v1765
      %v1912 = vpack.c.bf16 %v1775, %v1771
      %v1913 = vpack.c.bf16 %v1777, %v1773
      %v1914 = vpack.c.bf16 %v1783, %v1779
      %v1915 = vpack.c.bf16 %v1785, %v1781
      %v1916 = vpack.c.bf16 %v1791, %v1787
      %v1917 = vpack.c.bf16 %v1793, %v1789
      %v1918 = vpack.c.bf16 %v1799, %v1795
      %v1919 = vpack.c.bf16 %v1801, %v1797
      %v1920 = vpack.c.bf16 %v1807, %v1803
      %v1921 = vpack.c.bf16 %v1809, %v1805
      %v1922 = vpack.c.bf16 %v1815, %v1811
      %v1923 = vpack.c.bf16 %v1817, %v1813
      %1924 = vmatprep.subr.bf16.mxu0 %v1893
      %1925 = vmatpush1.bf16.msra.mxu0 %v1892
      %1926 = vmatprep.subr.bf16.mxu0 %v1895
      %1927 = vmatpush1.bf16.msra.mxu0 %v1894
      %1928 = vmatprep.subr.bf16.mxu0 %v1897
      %1929 = vmatpush1.bf16.msra.mxu0 %v1896
      %1930 = vmatprep.subr.bf16.mxu0 %v1899
      %1931 = vmatpush1.bf16.msra.mxu0 %v1898
      %1932 = vmatprep.subr.bf16.mxu0 %v1901
      %1933 = vmatpush1.bf16.msra.mxu0 %v1900
      %1934 = vmatprep.subr.bf16.mxu0 %v1903
      %1935 = vmatpush1.bf16.msra.mxu0 %v1902
      %1936 = vmatprep.subr.bf16.mxu0 %v1905
      %1937 = vmatpush1.bf16.msra.mxu0 %v1904
      %1938 = vmatprep.subr.bf16.mxu0 %v1907
      %1939 = vmatpush1.bf16.msra.mxu0 %v1906
      %1940 = vmatprep.subr.bf16.mxu0 %v1909
      %1941 = vmatpush1.bf16.msra.mxu0 %v1908
      %1942 = vmatprep.subr.bf16.mxu0 %v1911
      %1943 = vmatpush1.bf16.msra.mxu0 %v1910
      %1944 = vmatprep.subr.bf16.mxu0 %v1913
      %1945 = vmatpush1.bf16.msra.mxu0 %v1912
      %1946 = vmatprep.subr.bf16.mxu0 %v1915
      %1947 = vmatpush1.bf16.msra.mxu0 %v1914
      %1948 = vmatprep.subr.bf16.mxu0 %v1917
      %1949 = vmatpush1.bf16.msra.mxu0 %v1916
      %1950 = vmatprep.subr.bf16.mxu0 %v1919
      %1951 = vmatpush1.bf16.msra.mxu0 %v1918
      %1952 = vmatprep.subr.bf16.mxu0 %v1921
      %1953 = vmatpush1.bf16.msra.mxu0 %v1920
      %1954 = vmatprep.subr.bf16.mxu0 %v1923
      %1955 = vmatpush1.bf16.msra.mxu0 %v1922
      %1956 = vmatprep.mubr.bf16.mxu0 %v1256
      %1957 = vmatmul.mubr.bf16.gmra.mrb[0].mxu0 %v1255
      %v1958 = vpop.f32.mrb[0].mxu0
      %v1959 = vadd.f32 0.0, %v1958
      %v1960 = vpop.f32.mrb[0].mxu0
      %v1961 = vadd.f32 0.0, %v1960
      %v1962 = vpop.f32.mrb[0].mxu0
      %v1963 = vpop.f32.mrb[0].mxu0
      %1964 = vdwg.mxu0
      %v1965 = vrcp.pop %v1854
      %v1966 = vrcp.pop %v1891
      %v1967 = vmul.f32 %v1959, %v1965
      %v1968 = vmul.f32 %v1961, %v1966
      %1969 = vst [vmem:[#allocation2 + $0x10] sm:$0xff] %v1967
      %1970 = vst [vmem:[#allocation2 + $0x18] sm:$0xff] %v1968
      %v1971 = vpack.c.bf16 %v497, %v497
      %v1972 = vpack.c.bf16 %v498, %v498
      %v1973 = vpack.c.bf16 %v485, %v485
      %v1974 = vpack.c.bf16 %v487, %v487
      %1975 = vrot.lane.b32.xlu0 %v565, 112
      %v1976 = vpop.permute.xlu0 %1975
      %1977 = vrot.lane.b32.xlu0 %v566, 112
      %v1978 = vpop.permute.xlu0 %1977
      %1979 = vrot.lane.b32.xlu0 %v567, 112
      %v1980 = vpop.permute.xlu0 %1979
      %1981 = vrot.lane.b32.xlu0 %v568, 112
      %v1982 = vpop.permute.xlu0 %1981
      %1983 = vrot.lane.b32.xlu0 %v569, 112
      %v1984 = vpop.permute.xlu0 %1983
      %1985 = vrot.lane.b32.xlu0 %v570, 112
      %v1986 = vpop.permute.xlu0 %1985
      %1987 = vrot.lane.b32.xlu0 %v571, 112
      %v1988 = vpop.permute.xlu0 %1987
      %1989 = vrot.lane.b32.xlu0 %v572, 112
      %v1990 = vpop.permute.xlu0 %1989
      %1991 = vrot.lane.b32.xlu0 %v573, 112
      %v1992 = vpop.permute.xlu0 %1991
      %1993 = vrot.lane.b32.xlu0 %v574, 112
      %v1994 = vpop.permute.xlu0 %1993
      %1995 = vrot.lane.b32.xlu0 %v575, 112
      %v1996 = vpop.permute.xlu0 %1995
      %1997 = vrot.lane.b32.xlu0 %v576, 112
      %v1998 = vpop.permute.xlu0 %1997
      %1999 = vrot.lane.b32.xlu0 %v577, 112
      %v2000 = vpop.permute.xlu0 %1999
      %2001 = vrot.lane.b32.xlu0 %v578, 112
      %v2002 = vpop.permute.xlu0 %2001
      %2003 = vrot.lane.b32.xlu0 %v579, 112
      %v2004 = vpop.permute.xlu0 %2003
      %2005 = vrot.lane.b32.xlu0 %v580, 112
      %v2006 = vpop.permute.xlu0 %2005
      %v2008 = vsel %vm585, %v1976, 0
      %v2011 = vsel %vm585, %v1978, 0
      %v2014 = vsel %vm585, %v1980, 0
      %v2017 = vsel %vm585, %v1982, 0
      %v2020 = vsel %vm585, %v1984, 0
      %v2023 = vsel %vm585, %v1986, 0
      %v2026 = vsel %vm585, %v1988, 0
      %v2029 = vsel %vm585, %v1990, 0
      %v2032 = vsel %vm585, %v1992, 0
      %v2035 = vsel %vm585, %v1994, 0
      %v2038 = vsel %vm585, %v1996, 0
      %v2041 = vsel %vm585, %v1998, 0
      %v2044 = vsel %vm585, %v2000, 0
      %v2047 = vsel %vm585, %v2002, 0
      %v2050 = vsel %vm585, %v2004, 0
      %v2053 = vsel %vm585, %v2006, 0
      %v2056 = vsel %vm634, %v1971, 0
      %v2059 = vsel %vm634, %v1972, 0
      %2061 = vmatprep.subr.bf16.mxu0 %v2059
      %2062 = vmatpush1.bf16.msra.mxu0 %v2056
      %2063 = vmatprep.subr.bf16.mxu0 0
      %2064 = vmatpush1.bf16.msra.mxu0 0
      %2065 = vmatprep.subr.bf16.mxu0 0
      %2066 = vmatpush1.bf16.msra.mxu0 0
      %2067 = vmatprep.subr.bf16.mxu0 0
      %2068 = vmatpush1.bf16.msra.mxu0 0
      %2069 = vmatprep.subr.bf16.mxu0 0
      %2070 = vmatpush1.bf16.msra.mxu0 0
      %2071 = vmatprep.subr.bf16.mxu0 0
      %2072 = vmatpush1.bf16.msra.mxu0 0
      %2073 = vmatprep.subr.bf16.mxu0 0
      %2074 = vmatpush1.bf16.msra.mxu0 0
      %2075 = vmatprep.subr.bf16.mxu0 0
      %2076 = vmatpush1.bf16.msra.mxu0 0
      %2077 = vmatprep.subr.bf16.mxu0 0
      %2078 = vmatpush1.bf16.msra.mxu0 0
      %2079 = vmatprep.subr.bf16.mxu0 0
      %2080 = vmatpush1.bf16.msra.mxu0 0
      %2081 = vmatprep.subr.bf16.mxu0 0
      %2082 = vmatpush1.bf16.msra.mxu0 0
      %2083 = vmatprep.subr.bf16.mxu0 0
      %2084 = vmatpush1.bf16.msra.mxu0 0
      %2085 = vmatprep.subr.bf16.mxu0 0
      %2086 = vmatpush1.bf16.msra.mxu0 0
      %2087 = vmatprep.subr.bf16.mxu0 0
      %2088 = vmatpush1.bf16.msra.mxu0 0
      %2089 = vmatprep.subr.bf16.mxu0 0
      %2090 = vmatpush1.bf16.msra.mxu0 0
      %2091 = vmatprep.subr.bf16.mxu0 0
      %2092 = vmatpush1.bf16.msra.mxu0 0
      %2093 = vmatprep.mubr.bf16.mxu0 0
      %2094 = vmatmul.mubr.bf16.gmra.mrb[0].mxu0 %v2008
      %v2095 = vpop.f32.mrb[0].mxu0
      %v2096 = vadd.f32 0.0, %v2095
      %v2097 = vpop.f32.mrb[0].mxu0
      %v2098 = vadd.f32 0.0, %v2097
      %v2099 = vpop.f32.mrb[0].mxu0
      %v2100 = vadd.f32 0.0, %v2099
      %v2101 = vpop.f32.mrb[0].mxu0
      %v2102 = vadd.f32 0.0, %v2101
      %2103 = vmatprep.mubr.bf16.mxu0 0
      %2104 = vmatmul.mubr.bf16.gmra.mrb[0].mxu0 %v2011
      %v2105 = vpop.f32.mrb[0].mxu0
      %v2106 = vadd.f32 0.0, %v2105
      %v2107 = vpop.f32.mrb[0].mxu0
      %v2108 = vadd.f32 0.0, %v2107
      %v2109 = vpop.f32.mrb[0].mxu0
      %v2110 = vadd.f32 0.0, %v2109
      %v2111 = vpop.f32.mrb[0].mxu0
      %v2112 = vadd.f32 0.0, %v2111
      %2113 = vmatprep.mubr.bf16.mxu0 0
      %2114 = vmatmul.mubr.bf16.gmra.mrb[0].mxu0 %v2014
      %v2115 = vpop.f32.mrb[0].mxu0
      %v2116 = vadd.f32 0.0, %v2115
      %v2117 = vpop.f32.mrb[0].mxu0
      %v2118 = vadd.f32 0.0, %v2117
      %v2119 = vpop.f32.mrb[0].mxu0
      %v2120 = vadd.f32 0.0, %v2119
      %v2121 = vpop.f32.mrb[0].mxu0
      %v2122 = vadd.f32 0.0, %v2121
      %2123 = vmatprep.mubr.bf16.mxu0 0
      %2124 = vmatmul.mubr.bf16.gmra.mrb[0].mxu0 %v2017
      %v2125 = vpop.f32.mrb[0].mxu0
      %v2126 = vadd.f32 0.0, %v2125
      %v2127 = vpop.f32.mrb[0].mxu0
      %v2128 = vadd.f32 0.0, %v2127
      %v2129 = vpop.f32.mrb[0].mxu0
      %v2130 = vadd.f32 0.0, %v2129
      %v2131 = vpop.f32.mrb[0].mxu0
      %v2132 = vadd.f32 0.0, %v2131
      %2133 = vmatprep.mubr.bf16.mxu0 0
      %2134 = vmatmul.mubr.bf16.gmra.mrb[0].mxu0 %v2020
      %v2135 = vpop.f32.mrb[0].mxu0
      %v2136 = vadd.f32 0.0, %v2135
      %v2137 = vpop.f32.mrb[0].mxu0
      %v2138 = vadd.f32 0.0, %v2137
      %v2139 = vpop.f32.mrb[0].mxu0
      %v2140 = vadd.f32 0.0, %v2139
      %v2141 = vpop.f32.mrb[0].mxu0
      %v2142 = vadd.f32 0.0, %v2141
      %2143 = vmatprep.mubr.bf16.mxu0 0
      %2144 = vmatmul.mubr.bf16.gmra.mrb[0].mxu0 %v2023
      %v2145 = vpop.f32.mrb[0].mxu0
      %v2146 = vadd.f32 0.0, %v2145
      %v2147 = vpop.f32.mrb[0].mxu0
      %v2148 = vadd.f32 0.0, %v2147
      %v2149 = vpop.f32.mrb[0].mxu0
      %v2150 = vadd.f32 0.0, %v2149
      %v2151 = vpop.f32.mrb[0].mxu0
      %v2152 = vadd.f32 0.0, %v2151
      %2153 = vmatprep.mubr.bf16.mxu0 0
      %2154 = vmatmul.mubr.bf16.gmra.mrb[0].mxu0 %v2026
      %v2155 = vpop.f32.mrb[0].mxu0
      %v2156 = vadd.f32 0.0, %v2155
      %v2157 = vpop.f32.mrb[0].mxu0
      %v2158 = vadd.f32 0.0, %v2157
      %v2159 = vpop.f32.mrb[0].mxu0
      %v2160 = vadd.f32 0.0, %v2159
      %v2161 = vpop.f32.mrb[0].mxu0
      %v2162 = vadd.f32 0.0, %v2161
      %2163 = vmatprep.mubr.bf16.mxu0 0
      %2164 = vmatmul.mubr.bf16.gmra.mrb[0].mxu0 %v2029
      %v2165 = vpop.f32.mrb[0].mxu0
      %v2166 = vadd.f32 0.0, %v2165
      %v2167 = vpop.f32.mrb[0].mxu0
      %v2168 = vadd.f32 0.0, %v2167
      %v2169 = vpop.f32.mrb[0].mxu0
      %v2170 = vadd.f32 0.0, %v2169
      %v2171 = vpop.f32.mrb[0].mxu0
      %v2172 = vadd.f32 0.0, %v2171
      %2173 = vmatprep.mubr.bf16.mxu0 0
      %2174 = vmatmul.mubr.bf16.gmra.mrb[0].mxu0 %v2032
      %v2175 = vpop.f32.mrb[0].mxu0
      %v2176 = vadd.f32 0.0, %v2175
      %v2177 = vpop.f32.mrb[0].mxu0
      %v2178 = vadd.f32 0.0, %v2177
      %v2179 = vpop.f32.mrb[0].mxu0
      %v2180 = vadd.f32 0.0, %v2179
      %v2181 = vpop.f32.mrb[0].mxu0
      %v2182 = vadd.f32 0.0, %v2181
      %2183 = vmatprep.mubr.bf16.mxu0 0
      %2184 = vmatmul.mubr.bf16.gmra.mrb[0].mxu0 %v2035
      %v2185 = vpop.f32.mrb[0].mxu0
      %v2186 = vadd.f32 0.0, %v2185
      %v2187 = vpop.f32.mrb[0].mxu0
      %v2188 = vadd.f32 0.0, %v2187
      %v2189 = vpop.f32.mrb[0].mxu0
      %v2190 = vadd.f32 0.0, %v2189
      %v2191 = vpop.f32.mrb[0].mxu0
      %v2192 = vadd.f32 0.0, %v2191
      %2193 = vmatprep.mubr.bf16.mxu0 0
      %2194 = vmatmul.mubr.bf16.gmra.mrb[0].mxu0 %v2038
      %v2195 = vpop.f32.mrb[0].mxu0
      %v2196 = vadd.f32 0.0, %v2195
      %v2197 = vpop.f32.mrb[0].mxu0
      %v2198 = vadd.f32 0.0, %v2197
      %v2199 = vpop.f32.mrb[0].mxu0
      %v2200 = vadd.f32 0.0, %v2199
      %v2201 = vpop.f32.mrb[0].mxu0
      %v2202 = vadd.f32 0.0, %v2201
      %2203 = vmatprep.mubr.bf16.mxu0 0
      %2204 = vmatmul.mubr.bf16.gmra.mrb[0].mxu0 %v2041
      %v2205 = vpop.f32.mrb[0].mxu0
      %v2206 = vadd.f32 0.0, %v2205
      %v2207 = vpop.f32.mrb[0].mxu0
      %v2208 = vadd.f32 0.0, %v2207
      %v2209 = vpop.f32.mrb[0].mxu0
      %v2210 = vadd.f32 0.0, %v2209
      %v2211 = vpop.f32.mrb[0].mxu0
      %v2212 = vadd.f32 0.0, %v2211
      %2213 = vmatprep.mubr.bf16.mxu0 0
      %2214 = vmatmul.mubr.bf16.gmra.mrb[0].mxu0 %v2044
      %v2215 = vpop.f32.mrb[0].mxu0
      %v2216 = vadd.f32 0.0, %v2215
      %v2217 = vpop.f32.mrb[0].mxu0
      %v2218 = vadd.f32 0.0, %v2217
      %v2219 = vpop.f32.mrb[0].mxu0
      %v2220 = vadd.f32 0.0, %v2219
      %v2221 = vpop.f32.mrb[0].mxu0
      %v2222 = vadd.f32 0.0, %v2221
      %2223 = vmatprep.mubr.bf16.mxu0 0
      %2224 = vmatmul.mubr.bf16.gmra.mrb[0].mxu0 %v2047
      %v2225 = vpop.f32.mrb[0].mxu0
      %v2226 = vadd.f32 0.0, %v2225
      %v2227 = vpop.f32.mrb[0].mxu0
      %v2228 = vadd.f32 0.0, %v2227
      %v2229 = vpop.f32.mrb[0].mxu0
      %v2230 = vadd.f32 0.0, %v2229
      %v2231 = vpop.f32.mrb[0].mxu0
      %v2232 = vadd.f32 0.0, %v2231
      %2233 = vmatprep.mubr.bf16.mxu0 0
      %2234 = vmatmul.mubr.bf16.gmra.mrb[0].mxu0 %v2050
      %v2235 = vpop.f32.mrb[0].mxu0
      %v2236 = vadd.f32 0.0, %v2235
      %v2237 = vpop.f32.mrb[0].mxu0
      %v2238 = vadd.f32 0.0, %v2237
      %v2239 = vpop.f32.mrb[0].mxu0
      %v2240 = vadd.f32 0.0, %v2239
      %v2241 = vpop.f32.mrb[0].mxu0
      %v2242 = vadd.f32 0.0, %v2241
      %2243 = vmatprep.mubr.bf16.mxu0 0
      %2244 = vmatmul.mubr.bf16.gmra.mrb[0].mxu0 %v2053
      %v2245 = vpop.f32.mrb[0].mxu0
      %v2246 = vadd.f32 0.0, %v2245
      %v2247 = vpop.f32.mrb[0].mxu0
      %v2248 = vadd.f32 0.0, %v2247
      %v2249 = vpop.f32.mrb[0].mxu0
      %v2250 = vadd.f32 0.0, %v2249
      %v2251 = vpop.f32.mrb[0].mxu0
      %v2252 = vadd.f32 0.0, %v2251
      %2253 = vdwg.mxu0
      %v2254 = vmax.f32 %v2096, %v2106
      %v2255 = vmax.f32 %v2100, %v2110
      %v2256 = vmax.f32 %v2254, %v2116
      %v2257 = vmax.f32 %v2255, %v2120
      %v2258 = vmax.f32 %v2256, %v2126
      %v2259 = vmax.f32 %v2257, %v2130
      %v2260 = vmax.f32 %v2258, %v2136
      %v2261 = vmax.f32 %v2259, %v2140
      %v2262 = vmax.f32 %v2260, %v2146
      %v2263 = vmax.f32 %v2261, %v2150
      %v2264 = vmax.f32 %v2262, %v2156
      %v2265 = vmax.f32 %v2263, %v2160
      %v2266 = vmax.f32 %v2264, %v2166
      %v2267 = vmax.f32 %v2265, %v2170
      %v2268 = vmax.f32 %v2266, %v2176
      %v2269 = vmax.f32 %v2267, %v2180
      %v2270 = vmax.f32 %v2268, %v2186
      %v2271 = vmax.f32 %v2269, %v2190
      %v2272 = vmax.f32 %v2270, %v2196
      %v2273 = vmax.f32 %v2271, %v2200
      %v2274 = vmax.f32 %v2272, %v2206
      %v2275 = vmax.f32 %v2273, %v2210
      %v2276 = vmax.f32 %v2274, %v2216
      %v2277 = vmax.f32 %v2275, %v2220
      %v2278 = vmax.f32 %v2276, %v2226
      %v2279 = vmax.f32 %v2277, %v2230
      %v2280 = vmax.f32 %v2278, %v2236
      %v2281 = vmax.f32 %v2279, %v2240
      %v2282 = vmax.f32 %v2280, %v2246
      %v2283 = vmax.f32 %v2281, %v2250
      %v2284 = vmax.f32 %v2282, %v2283
      %v2285 = vrot.slane %v2284, 4
      %v2286 = vmax.f32 %v2284, %v2285
      %v2287 = vrot.slane %v2286, 2
      %v2288 = vmax.f32 %v2286, %v2287
      %v2289 = vrot.slane %v2288, 1
      %v2290 = vmax.f32 %v2288, %v2289
      %v2291 = vmax.f32 %v2098, %v2108
      %v2292 = vmax.f32 %v2102, %v2112
      %v2293 = vmax.f32 %v2291, %v2118
      %v2294 = vmax.f32 %v2292, %v2122
      %v2295 = vmax.f32 %v2293, %v2128
      %v2296 = vmax.f32 %v2294, %v2132
      %v2297 = vmax.f32 %v2295, %v2138
      %v2298 = vmax.f32 %v2296, %v2142
      %v2299 = vmax.f32 %v2297, %v2148
      %v2300 = vmax.f32 %v2298, %v2152
      %v2301 = vmax.f32 %v2299, %v2158
      %v2302 = vmax.f32 %v2300, %v2162
      %v2303 = vmax.f32 %v2301, %v2168
      %v2304 = vmax.f32 %v2302, %v2172
      %v2305 = vmax.f32 %v2303, %v2178
      %v2306 = vmax.f32 %v2304, %v2182
      %v2307 = vmax.f32 %v2305, %v2188
      %v2308 = vmax.f32 %v2306, %v2192
      %v2309 = vmax.f32 %v2307, %v2198
      %v2310 = vmax.f32 %v2308, %v2202
      %v2311 = vmax.f32 %v2309, %v2208
      %v2312 = vmax.f32 %v2310, %v2212
      %v2313 = vmax.f32 %v2311, %v2218
      %v2314 = vmax.f32 %v2312, %v2222
      %v2315 = vmax.f32 %v2313, %v2228
      %v2316 = vmax.f32 %v2314, %v2232
      %v2317 = vmax.f32 %v2315, %v2238
      %v2318 = vmax.f32 %v2316, %v2242
      %v2319 = vmax.f32 %v2317, %v2248
      %v2320 = vmax.f32 %v2318, %v2252
      %v2321 = vmax.f32 %v2319, %v2320
      %v2322 = vrot.slane %v2321, 4
      %v2323 = vmax.f32 %v2321, %v2322
      %v2324 = vrot.slane %v2323, 2
      %v2325 = vmax.f32 %v2323, %v2324
      %v2326 = vrot.slane %v2325, 1
      %v2327 = vmax.f32 %v2325, %v2326
      %v2328 = vsub.f32 %v2096, %v2290
      %v2329 = vsub.f32 %v2098, %v2327
      %v2330 = vsub.f32 %v2100, %v2290
      %v2331 = vsub.f32 %v2102, %v2327
      %v2332 = vsub.f32 %v2106, %v2290
      %v2333 = vsub.f32 %v2108, %v2327
      %v2334 = vsub.f32 %v2110, %v2290
      %v2335 = vsub.f32 %v2112, %v2327
      %v2336 = vsub.f32 %v2116, %v2290
      %v2337 = vsub.f32 %v2118, %v2327
      %v2338 = vsub.f32 %v2120, %v2290
      %v2339 = vsub.f32 %v2122, %v2327
      %v2340 = vsub.f32 %v2126, %v2290
      %v2341 = vsub.f32 %v2128, %v2327
      %v2342 = vsub.f32 %v2130, %v2290
      %v2343 = vsub.f32 %v2132, %v2327
      %v2344 = vsub.f32 %v2136, %v2290
      %v2345 = vsub.f32 %v2138, %v2327
      %v2346 = vsub.f32 %v2140, %v2290
      %v2347 = vsub.f32 %v2142, %v2327
      %v2348 = vsub.f32 %v2146, %v2290
      %v2349 = vsub.f32 %v2148, %v2327
      %v2350 = vsub.f32 %v2150, %v2290
      %v2351 = vsub.f32 %v2152, %v2327
      %v2352 = vsub.f32 %v2156, %v2290
      %v2353 = vsub.f32 %v2158, %v2327
      %v2354 = vsub.f32 %v2160, %v2290
      %v2355 = vsub.f32 %v2162, %v2327
      %v2356 = vsub.f32 %v2166, %v2290
      %v2357 = vsub.f32 %v2168, %v2327
      %v2358 = vsub.f32 %v2170, %v2290
      %v2359 = vsub.f32 %v2172, %v2327
      %v2360 = vsub.f32 %v2176, %v2290
      %v2361 = vsub.f32 %v2178, %v2327
      %v2362 = vsub.f32 %v2180, %v2290
      %v2363 = vsub.f32 %v2182, %v2327
      %v2364 = vsub.f32 %v2186, %v2290
      %v2365 = vsub.f32 %v2188, %v2327
      %v2366 = vsub.f32 %v2190, %v2290
      %v2367 = vsub.f32 %v2192, %v2327
      %v2368 = vsub.f32 %v2196, %v2290
      %v2369 = vsub.f32 %v2198, %v2327
      %v2370 = vsub.f32 %v2200, %v2290
      %v2371 = vsub.f32 %v2202, %v2327
      %v2372 = vsub.f32 %v2206, %v2290
      %v2373 = vsub.f32 %v2208, %v2327
      %v2374 = vsub.f32 %v2210, %v2290
      %v2375 = vsub.f32 %v2212, %v2327
      %v2376 = vsub.f32 %v2216, %v2290
      %v2377 = vsub.f32 %v2218, %v2327
      %v2378 = vsub.f32 %v2220, %v2290
      %v2379 = vsub.f32 %v2222, %v2327
      %v2380 = vsub.f32 %v2226, %v2290
      %v2381 = vsub.f32 %v2228, %v2327
      %v2382 = vsub.f32 %v2230, %v2290
      %v2383 = vsub.f32 %v2232, %v2327
      %v2384 = vsub.f32 %v2236, %v2290
      %v2385 = vsub.f32 %v2238, %v2327
      %v2386 = vsub.f32 %v2240, %v2290
      %v2387 = vsub.f32 %v2242, %v2327
      %v2388 = vsub.f32 %v2246, %v2290
      %v2389 = vsub.f32 %v2248, %v2327
      %v2390 = vsub.f32 %v2250, %v2290
      %v2391 = vsub.f32 %v2252, %v2327
      %v2392 = vmul.f32 %v2328, 1.442695
      %v2393 = vpow.pop %v2392
      %v2394 = vmul.f32 %v2329, 1.442695
      %v2395 = vpow.pop %v2394
      %v2396 = vmul.f32 %v2330, 1.442695
      %v2397 = vpow.pop %v2396
      %v2398 = vmul.f32 %v2331, 1.442695
      %v2399 = vpow.pop %v2398
      %v2400 = vmul.f32 %v2332, 1.442695
      %v2401 = vpow.pop %v2400
      %v2402 = vmul.f32 %v2333, 1.442695
      %v2403 = vpow.pop %v2402
      %v2404 = vmul.f32 %v2334, 1.442695
      %v2405 = vpow.pop %v2404
      %v2406 = vmul.f32 %v2335, 1.442695
      %v2407 = vpow.pop %v2406
      %v2408 = vmul.f32 %v2336, 1.442695
      %v2409 = vpow.pop %v2408
      %v2410 = vmul.f32 %v2337, 1.442695
      %v2411 = vpow.pop %v2410
      %v2412 = vmul.f32 %v2338, 1.442695
      %v2413 = vpow.pop %v2412
      %v2414 = vmul.f32 %v2339, 1.442695
      %v2415 = vpow.pop %v2414
      %v2416 = vmul.f32 %v2340, 1.442695
      %v2417 = vpow.pop %v2416
      %v2418 = vmul.f32 %v2341, 1.442695
      %v2419 = vpow.pop %v2418
      %v2420 = vmul.f32 %v2342, 1.442695
      %v2421 = vpow.pop %v2420
      %v2422 = vmul.f32 %v2343, 1.442695
      %v2423 = vpow.pop %v2422
      %v2424 = vmul.f32 %v2344, 1.442695
      %v2425 = vpow.pop %v2424
      %v2426 = vmul.f32 %v2345, 1.442695
      %v2427 = vpow.pop %v2426
      %v2428 = vmul.f32 %v2346, 1.442695
      %v2429 = vpow.pop %v2428
      %v2430 = vmul.f32 %v2347, 1.442695
      %v2431 = vpow.pop %v2430
      %v2432 = vmul.f32 %v2348, 1.442695
      %v2433 = vpow.pop %v2432
      %v2434 = vmul.f32 %v2349, 1.442695
      %v2435 = vpow.pop %v2434
      %v2436 = vmul.f32 %v2350, 1.442695
      %v2437 = vpow.pop %v2436
      %v2438 = vmul.f32 %v2351, 1.442695
      %v2439 = vpow.pop %v2438
      %v2440 = vmul.f32 %v2352, 1.442695
      %v2441 = vpow.pop %v2440
      %v2442 = vmul.f32 %v2353, 1.442695
      %v2443 = vpow.pop %v2442
      %v2444 = vmul.f32 %v2354, 1.442695
      %v2445 = vpow.pop %v2444
      %v2446 = vmul.f32 %v2355, 1.442695
      %v2447 = vpow.pop %v2446
      %v2448 = vmul.f32 %v2356, 1.442695
      %v2449 = vpow.pop %v2448
      %v2450 = vmul.f32 %v2357, 1.442695
      %v2451 = vpow.pop %v2450
      %v2452 = vmul.f32 %v2358, 1.442695
      %v2453 = vpow.pop %v2452
      %v2454 = vmul.f32 %v2359, 1.442695
      %v2455 = vpow.pop %v2454
      %v2456 = vmul.f32 %v2360, 1.442695
      %v2457 = vpow.pop %v2456
      %v2458 = vmul.f32 %v2361, 1.442695
      %v2459 = vpow.pop %v2458
      %v2460 = vmul.f32 %v2362, 1.442695
      %v2461 = vpow.pop %v2460
      %v2462 = vmul.f32 %v2363, 1.442695
      %v2463 = vpow.pop %v2462
      %v2464 = vmul.f32 %v2364, 1.442695
      %v2465 = vpow.pop %v2464
      %v2466 = vmul.f32 %v2365, 1.442695
      %v2467 = vpow.pop %v2466
      %v2468 = vmul.f32 %v2366, 1.442695
      %v2469 = vpow.pop %v2468
      %v2470 = vmul.f32 %v2367, 1.442695
      %v2471 = vpow.pop %v2470
      %v2472 = vmul.f32 %v2368, 1.442695
      %v2473 = vpow.pop %v2472
      %v2474 = vmul.f32 %v2369, 1.442695
      %v2475 = vpow.pop %v2474
      %v2476 = vmul.f32 %v2370, 1.442695
      %v2477 = vpow.pop %v2476
      %v2478 = vmul.f32 %v2371, 1.442695
      %v2479 = vpow.pop %v2478
      %v2480 = vmul.f32 %v2372, 1.442695
      %v2481 = vpow.pop %v2480
      %v2482 = vmul.f32 %v2373, 1.442695
      %v2483 = vpow.pop %v2482
      %v2484 = vmul.f32 %v2374, 1.442695
      %v2485 = vpow.pop %v2484
      %v2486 = vmul.f32 %v2375, 1.442695
      %v2487 = vpow.pop %v2486
      %v2488 = vmul.f32 %v2376, 1.442695
      %v2489 = vpow.pop %v2488
      %v2490 = vmul.f32 %v2377, 1.442695
      %v2491 = vpow.pop %v2490
      %v2492 = vmul.f32 %v2378, 1.442695
      %v2493 = vpow.pop %v2492
      %v2494 = vmul.f32 %v2379, 1.442695
      %v2495 = vpow.pop %v2494
      %v2496 = vmul.f32 %v2380, 1.442695
      %v2497 = vpow.pop %v2496
      %v2498 = vmul.f32 %v2381, 1.442695
      %v2499 = vpow.pop %v2498
      %v2500 = vmul.f32 %v2382, 1.442695
      %v2501 = vpow.pop %v2500
      %v2502 = vmul.f32 %v2383, 1.442695
      %v2503 = vpow.pop %v2502
      %v2504 = vmul.f32 %v2384, 1.442695
      %v2505 = vpow.pop %v2504
      %v2506 = vmul.f32 %v2385, 1.442695
      %v2507 = vpow.pop %v2506
      %v2508 = vmul.f32 %v2386, 1.442695
      %v2509 = vpow.pop %v2508
      %v2510 = vmul.f32 %v2387, 1.442695
      %v2511 = vpow.pop %v2510
      %v2512 = vmul.f32 %v2388, 1.442695
      %v2513 = vpow.pop %v2512
      %v2514 = vmul.f32 %v2389, 1.442695
      %v2515 = vpow.pop %v2514
      %v2516 = vmul.f32 %v2390, 1.442695
      %v2517 = vpow.pop %v2516
      %v2518 = vmul.f32 %v2391, 1.442695
      %v2519 = vpow.pop %v2518
      %v2520 = vadd.f32 %v2393, %v2397
      %v2521 = vadd.f32 %v2520, %v2401
      %v2522 = vadd.f32 %v2521, %v2405
      %v2523 = vadd.f32 %v2522, %v2409
      %v2524 = vadd.f32 %v2523, %v2413
      %v2525 = vadd.f32 %v2524, %v2417
      %v2526 = vadd.f32 %v2525, %v2421
      %v2527 = vadd.f32 %v2526, %v2425
      %v2528 = vadd.f32 %v2527, %v2429
      %v2529 = vadd.f32 %v2528, %v2433
      %v2530 = vadd.f32 %v2529, %v2437
      %v2531 = vadd.f32 %v2530, %v2441
      %v2532 = vadd.f32 %v2531, %v2445
      %v2533 = vadd.f32 %v2532, %v2449
      %v2534 = vadd.f32 %v2533, %v2453
      %v2535 = vadd.f32 %v2534, %v2457
      %v2536 = vadd.f32 %v2535, %v2461
      %v2537 = vadd.f32 %v2536, %v2465
      %v2538 = vadd.f32 %v2537, %v2469
      %v2539 = vadd.f32 %v2538, %v2473
      %v2540 = vadd.f32 %v2539, %v2477
      %v2541 = vadd.f32 %v2540, %v2481
      %v2542 = vadd.f32 %v2541, %v2485
      %v2543 = vadd.f32 %v2542, %v2489
      %v2544 = vadd.f32 %v2543, %v2493
      %v2545 = vadd.f32 %v2544, %v2497
      %v2546 = vadd.f32 %v2545, %v2501
      %v2547 = vadd.f32 %v2546, %v2505
      %v2548 = vadd.f32 %v2547, %v2509
      %v2549 = vadd.f32 %v2548, %v2513
      %v2550 = vadd.f32 %v2549, %v2517
      %v2551 = vrot.slane %v2550, 4
      %v2552 = vadd.f32 %v2550, %v2551
      %v2553 = vrot.slane %v2552, 2
      %v2554 = vadd.f32 %v2552, %v2553
      %v2555 = vrot.slane %v2554, 1
      %v2556 = vadd.f32 %v2554, %v2555
      %v2557 = vadd.f32 %v2395, %v2399
      %v2558 = vadd.f32 %v2557, %v2403
      %v2559 = vadd.f32 %v2558, %v2407
      %v2560 = vadd.f32 %v2559, %v2411
      %v2561 = vadd.f32 %v2560, %v2415
      %v2562 = vadd.f32 %v2561, %v2419
      %v2563 = vadd.f32 %v2562, %v2423
      %v2564 = vadd.f32 %v2563, %v2427
      %v2565 = vadd.f32 %v2564, %v2431
      %v2566 = vadd.f32 %v2565, %v2435
      %v2567 = vadd.f32 %v2566, %v2439
      %v2568 = vadd.f32 %v2567, %v2443
      %v2569 = vadd.f32 %v2568, %v2447
      %v2570 = vadd.f32 %v2569, %v2451
      %v2571 = vadd.f32 %v2570, %v2455
      %v2572 = vadd.f32 %v2571, %v2459
      %v2573 = vadd.f32 %v2572, %v2463
      %v2574 = vadd.f32 %v2573, %v2467
      %v2575 = vadd.f32 %v2574, %v2471
      %v2576 = vadd.f32 %v2575, %v2475
      %v2577 = vadd.f32 %v2576, %v2479
      %v2578 = vadd.f32 %v2577, %v2483
      %v2579 = vadd.f32 %v2578, %v2487
      %v2580 = vadd.f32 %v2579, %v2491
      %v2581 = vadd.f32 %v2580, %v2495
      %v2582 = vadd.f32 %v2581, %v2499
      %v2583 = vadd.f32 %v2582, %v2503
      %v2584 = vadd.f32 %v2583, %v2507
      %v2585 = vadd.f32 %v2584, %v2511
      %v2586 = vadd.f32 %v2585, %v2515
      %v2587 = vadd.f32 %v2586, %v2519
      %v2588 = vrot.slane %v2587, 4
      %v2589 = vadd.f32 %v2587, %v2588
      %v2590 = vrot.slane %v2589, 2
      %v2591 = vadd.f32 %v2589, %v2590
      %v2592 = vrot.slane %v2591, 1
      %v2593 = vadd.f32 %v2591, %v2592
      %v2594 = vpack.c.bf16 %v2397, %v2393
      %v2595 = vpack.c.bf16 %v2399, %v2395
      %v2596 = vpack.c.bf16 %v2405, %v2401
      %v2597 = vpack.c.bf16 %v2407, %v2403
      %v2598 = vpack.c.bf16 %v2413, %v2409
      %v2599 = vpack.c.bf16 %v2415, %v2411
      %v2600 = vpack.c.bf16 %v2421, %v2417
      %v2601 = vpack.c.bf16 %v2423, %v2419
      %v2602 = vpack.c.bf16 %v2429, %v2425
      %v2603 = vpack.c.bf16 %v2431, %v2427
      %v2604 = vpack.c.bf16 %v2437, %v2433
      %v2605 = vpack.c.bf16 %v2439, %v2435
      %v2606 = vpack.c.bf16 %v2445, %v2441
      %v2607 = vpack.c.bf16 %v2447, %v2443
      %v2608 = vpack.c.bf16 %v2453, %v2449
      %v2609 = vpack.c.bf16 %v2455, %v2451
      %v2610 = vpack.c.bf16 %v2461, %v2457
      %v2611 = vpack.c.bf16 %v2463, %v2459
      %v2612 = vpack.c.bf16 %v2469, %v2465
      %v2613 = vpack.c.bf16 %v2471, %v2467
      %v2614 = vpack.c.bf16 %v2477, %v2473
      %v2615 = vpack.c.bf16 %v2479, %v2475
      %v2616 = vpack.c.bf16 %v2485, %v2481
      %v2617 = vpack.c.bf16 %v2487, %v2483
      %v2618 = vpack.c.bf16 %v2493, %v2489
      %v2619 = vpack.c.bf16 %v2495, %v2491
      %v2620 = vpack.c.bf16 %v2501, %v2497
      %v2621 = vpack.c.bf16 %v2503, %v2499
      %v2622 = vpack.c.bf16 %v2509, %v2505
      %v2623 = vpack.c.bf16 %v2511, %v2507
      %v2624 = vpack.c.bf16 %v2517, %v2513
      %v2625 = vpack.c.bf16 %v2519, %v2515
      %2626 = vmatprep.subr.bf16.mxu0 %v2595
      %2627 = vmatpush1.bf16.msra.mxu0 %v2594
      %2628 = vmatprep.subr.bf16.mxu0 %v2597
      %2629 = vmatpush1.bf16.msra.mxu0 %v2596
      %2630 = vmatprep.subr.bf16.mxu0 %v2599
      %2631 = vmatpush1.bf16.msra.mxu0 %v2598
      %2632 = vmatprep.subr.bf16.mxu0 %v2601
      %2633 = vmatpush1.bf16.msra.mxu0 %v2600
      %2634 = vmatprep.subr.bf16.mxu0 %v2603
      %2635 = vmatpush1.bf16.msra.mxu0 %v2602
      %2636 = vmatprep.subr.bf16.mxu0 %v2605
      %2637 = vmatpush1.bf16.msra.mxu0 %v2604
      %2638 = vmatprep.subr.bf16.mxu0 %v2607
      %2639 = vmatpush1.bf16.msra.mxu0 %v2606
      %2640 = vmatprep.subr.bf16.mxu0 %v2609
      %2641 = vmatpush1.bf16.msra.mxu0 %v2608
      %2642 = vmatprep.subr.bf16.mxu0 %v2611
      %2643 = vmatpush1.bf16.msra.mxu0 %v2610
      %2644 = vmatprep.subr.bf16.mxu0 %v2613
      %2645 = vmatpush1.bf16.msra.mxu0 %v2612
      %2646 = vmatprep.subr.bf16.mxu0 %v2615
      %2647 = vmatpush1.bf16.msra.mxu0 %v2614
      %2648 = vmatprep.subr.bf16.mxu0 %v2617
      %2649 = vmatpush1.bf16.msra.mxu0 %v2616
      %2650 = vmatprep.subr.bf16.mxu0 %v2619
      %2651 = vmatpush1.bf16.msra.mxu0 %v2618
      %2652 = vmatprep.subr.bf16.mxu0 %v2621
      %2653 = vmatpush1.bf16.msra.mxu0 %v2620
      %2654 = vmatprep.subr.bf16.mxu0 %v2623
      %2655 = vmatpush1.bf16.msra.mxu0 %v2622
      %2656 = vmatprep.subr.bf16.mxu0 %v2625
      %2657 = vmatpush1.bf16.msra.mxu0 %v2624
      %2658 = vmatprep.mubr.bf16.mxu0 %v1974
      %2659 = vmatmul.mubr.bf16.gmra.mrb[0].mxu0 %v1973
      %v2660 = vpop.f32.mrb[0].mxu0
      %v2661 = vadd.f32 0.0, %v2660
      %v2662 = vpop.f32.mrb[0].mxu0
      %v2663 = vadd.f32 0.0, %v2662
      %v2664 = vpop.f32.mrb[0].mxu0
      %v2665 = vpop.f32.mrb[0].mxu0
      %2666 = vdwg.mxu0
      %v2667 = vrcp.pop %v2556
      %v2668 = vrcp.pop %v2593
      %v2669 = vmul.f32 %v2661, %v2667
      %v2670 = vmul.f32 %v2663, %v2668
      %2671 = vst [vmem:[#allocation2 + $0x20] sm:$0xff] %v2669
      %2672 = vst [vmem:[#allocation2 + $0x28] sm:$0xff] %v2670
      %v2673 = vpack.c.bf16 %v499, %v499
      %v2674 = vpack.c.bf16 %v500, %v500
      %v2675 = vpack.c.bf16 %v489, %v489
      %v2676 = vpack.c.bf16 %v491, %v491
      %2677 = vrot.lane.b32.xlu0 %v565, 104
      %v2678 = vpop.permute.xlu0 %2677
      %2679 = vrot.lane.b32.xlu0 %v566, 104
      %v2680 = vpop.permute.xlu0 %2679
      %2681 = vrot.lane.b32.xlu0 %v567, 104
      %v2682 = vpop.permute.xlu0 %2681
      %2683 = vrot.lane.b32.xlu0 %v568, 104
      %v2684 = vpop.permute.xlu0 %2683
      %2685 = vrot.lane.b32.xlu0 %v569, 104
      %v2686 = vpop.permute.xlu0 %2685
      %2687 = vrot.lane.b32.xlu0 %v570, 104
      %v2688 = vpop.permute.xlu0 %2687
      %2689 = vrot.lane.b32.xlu0 %v571, 104
      %v2690 = vpop.permute.xlu0 %2689
      %2691 = vrot.lane.b32.xlu0 %v572, 104
      %v2692 = vpop.permute.xlu0 %2691
      %2693 = vrot.lane.b32.xlu0 %v573, 104
      %v2694 = vpop.permute.xlu0 %2693
      %2695 = vrot.lane.b32.xlu0 %v574, 104
      %v2696 = vpop.permute.xlu0 %2695
      %2697 = vrot.lane.b32.xlu0 %v575, 104
      %v2698 = vpop.permute.xlu0 %2697
      %2699 = vrot.lane.b32.xlu0 %v576, 104
      %v2700 = vpop.permute.xlu0 %2699
      %2701 = vrot.lane.b32.xlu0 %v577, 104
      %v2702 = vpop.permute.xlu0 %2701
      %2703 = vrot.lane.b32.xlu0 %v578, 104
      %v2704 = vpop.permute.xlu0 %2703
      %2705 = vrot.lane.b32.xlu0 %v579, 104
      %v2706 = vpop.permute.xlu0 %2705
      %2707 = vrot.lane.b32.xlu0 %v580, 104
      %v2708 = vpop.permute.xlu0 %2707
      %v2710 = vsel %vm585, %v2678, 0
      %v2713 = vsel %vm585, %v2680, 0
      %v2716 = vsel %vm585, %v2682, 0
      %v2719 = vsel %vm585, %v2684, 0
      %v2722 = vsel %vm585, %v2686, 0
      %v2725 = vsel %vm585, %v2688, 0
      %v2728 = vsel %vm585, %v2690, 0
      %v2731 = vsel %vm585, %v2692, 0
      %v2734 = vsel %vm585, %v2694, 0
      %v2737 = vsel %vm585, %v2696, 0
      %v2740 = vsel %vm585, %v2698, 0
      %v2743 = vsel %vm585, %v2700, 0
      %v2746 = vsel %vm585, %v2702, 0
      %v2749 = vsel %vm585, %v2704, 0
      %v2752 = vsel %vm585, %v2706, 0
      %v2755 = vsel %vm585, %v2708, 0
      %v2758 = vsel %vm634, %v2673, 0
      %v2761 = vsel %vm634, %v2674, 0
      %2763 = vmatprep.subr.bf16.mxu0 %v2761
      %2764 = vmatpush1.bf16.msra.mxu0 %v2758
      %2765 = vmatprep.subr.bf16.mxu0 0
      %2766 = vmatpush1.bf16.msra.mxu0 0
      %2767 = vmatprep.subr.bf16.mxu0 0
      %2768 = vmatpush1.bf16.msra.mxu0 0
      %2769 = vmatprep.subr.bf16.mxu0 0
      %2770 = vmatpush1.bf16.msra.mxu0 0
      %2771 = vmatprep.subr.bf16.mxu0 0
      %2772 = vmatpush1.bf16.msra.mxu0 0
      %2773 = vmatprep.subr.bf16.mxu0 0
      %2774 = vmatpush1.bf16.msra.mxu0 0
      %2775 = vmatprep.subr.bf16.mxu0 0
      %2776 = vmatpush1.bf16.msra.mxu0 0
      %2777 = vmatprep.subr.bf16.mxu0 0
      %2778 = vmatpush1.bf16.msra.mxu0 0
      %2779 = vmatprep.subr.bf16.mxu0 0
      %2780 = vmatpush1.bf16.msra.mxu0 0
      %2781 = vmatprep.subr.bf16.mxu0 0
      %2782 = vmatpush1.bf16.msra.mxu0 0
      %2783 = vmatprep.subr.bf16.mxu0 0
      %2784 = vmatpush1.bf16.msra.mxu0 0
      %2785 = vmatprep.subr.bf16.mxu0 0
      %2786 = vmatpush1.bf16.msra.mxu0 0
      %2787 = vmatprep.subr.bf16.mxu0 0
      %2788 = vmatpush1.bf16.msra.mxu0 0
      %2789 = vmatprep.subr.bf16.mxu0 0
      %2790 = vmatpush1.bf16.msra.mxu0 0
      %2791 = vmatprep.subr.bf16.mxu0 0
      %2792 = vmatpush1.bf16.msra.mxu0 0
      %2793 = vmatprep.subr.bf16.mxu0 0
      %2794 = vmatpush1.bf16.msra.mxu0 0
      %2795 = vmatprep.mubr.bf16.mxu0 0
      %2796 = vmatmul.mubr.bf16.gmra.mrb[0].mxu0 %v2710
      %v2797 = vpop.f32.mrb[0].mxu0
      %v2798 = vadd.f32 0.0, %v2797
      %v2799 = vpop.f32.mrb[0].mxu0
      %v2800 = vadd.f32 0.0, %v2799
      %v2801 = vpop.f32.mrb[0].mxu0
      %v2802 = vadd.f32 0.0, %v2801
      %v2803 = vpop.f32.mrb[0].mxu0
      %v2804 = vadd.f32 0.0, %v2803
      %2805 = vmatprep.mubr.bf16.mxu0 0
      %2806 = vmatmul.mubr.bf16.gmra.mrb[0].mxu0 %v2713
      %v2807 = vpop.f32.mrb[0].mxu0
      %v2808 = vadd.f32 0.0, %v2807
      %v2809 = vpop.f32.mrb[0].mxu0
      %v2810 = vadd.f32 0.0, %v2809
      %v2811 = vpop.f32.mrb[0].mxu0
      %v2812 = vadd.f32 0.0, %v2811
      %v2813 = vpop.f32.mrb[0].mxu0
      %v2814 = vadd.f32 0.0, %v2813
      %2815 = vmatprep.mubr.bf16.mxu0 0
      %2816 = vmatmul.mubr.bf16.gmra.mrb[0].mxu0 %v2716
      %v2817 = vpop.f32.mrb[0].mxu0
      %v2818 = vadd.f32 0.0, %v2817
      %v2819 = vpop.f32.mrb[0].mxu0
      %v2820 = vadd.f32 0.0, %v2819
      %v2821 = vpop.f32.mrb[0].mxu0
      %v2822 = vadd.f32 0.0, %v2821
      %v2823 = vpop.f32.mrb[0].mxu0
      %v2824 = vadd.f32 0.0, %v2823
      %2825 = vmatprep.mubr.bf16.mxu0 0
      %2826 = vmatmul.mubr.bf16.gmra.mrb[0].mxu0 %v2719
      %v2827 = vpop.f32.mrb[0].mxu0
      %v2828 = vadd.f32 0.0, %v2827
      %v2829 = vpop.f32.mrb[0].mxu0
      %v2830 = vadd.f32 0.0, %v2829
      %v2831 = vpop.f32.mrb[0].mxu0
      %v2832 = vadd.f32 0.0, %v2831
      %v2833 = vpop.f32.mrb[0].mxu0
      %v2834 = vadd.f32 0.0, %v2833
      %2835 = vmatprep.mubr.bf16.mxu0 0
      %2836 = vmatmul.mubr.bf16.gmra.mrb[0].mxu0 %v2722
      %v2837 = vpop.f32.mrb[0].mxu0
      %v2838 = vadd.f32 0.0, %v2837
      %v2839 = vpop.f32.mrb[0].mxu0
      %v2840 = vadd.f32 0.0, %v2839
      %v2841 = vpop.f32.mrb[0].mxu0
      %v2842 = vadd.f32 0.0, %v2841
      %v2843 = vpop.f32.mrb[0].mxu0
      %v2844 = vadd.f32 0.0, %v2843
      %2845 = vmatprep.mubr.bf16.mxu0 0
      %2846 = vmatmul.mubr.bf16.gmra.mrb[0].mxu0 %v2725
      %v2847 = vpop.f32.mrb[0].mxu0
      %v2848 = vadd.f32 0.0, %v2847
      %v2849 = vpop.f32.mrb[0].mxu0
      %v2850 = vadd.f32 0.0, %v2849
      %v2851 = vpop.f32.mrb[0].mxu0
      %v2852 = vadd.f32 0.0, %v2851
      %v2853 = vpop.f32.mrb[0].mxu0
      %v2854 = vadd.f32 0.0, %v2853
      %2855 = vmatprep.mubr.bf16.mxu0 0
      %2856 = vmatmul.mubr.bf16.gmra.mrb[0].mxu0 %v2728
      %v2857 = vpop.f32.mrb[0].mxu0
      %v2858 = vadd.f32 0.0, %v2857
      %v2859 = vpop.f32.mrb[0].mxu0
      %v2860 = vadd.f32 0.0, %v2859
      %v2861 = vpop.f32.mrb[0].mxu0
      %v2862 = vadd.f32 0.0, %v2861
      %v2863 = vpop.f32.mrb[0].mxu0
      %v2864 = vadd.f32 0.0, %v2863
      %2865 = vmatprep.mubr.bf16.mxu0 0
      %2866 = vmatmul.mubr.bf16.gmra.mrb[0].mxu0 %v2731
      %v2867 = vpop.f32.mrb[0].mxu0
      %v2868 = vadd.f32 0.0, %v2867
      %v2869 = vpop.f32.mrb[0].mxu0
      %v2870 = vadd.f32 0.0, %v2869
      %v2871 = vpop.f32.mrb[0].mxu0
      %v2872 = vadd.f32 0.0, %v2871
      %v2873 = vpop.f32.mrb[0].mxu0
      %v2874 = vadd.f32 0.0, %v2873
      %2875 = vmatprep.mubr.bf16.mxu0 0
      %2876 = vmatmul.mubr.bf16.gmra.mrb[0].mxu0 %v2734
      %v2877 = vpop.f32.mrb[0].mxu0
      %v2878 = vadd.f32 0.0, %v2877
      %v2879 = vpop.f32.mrb[0].mxu0
      %v2880 = vadd.f32 0.0, %v2879
      %v2881 = vpop.f32.mrb[0].mxu0
      %v2882 = vadd.f32 0.0, %v2881
      %v2883 = vpop.f32.mrb[0].mxu0
      %v2884 = vadd.f32 0.0, %v2883
      %2885 = vmatprep.mubr.bf16.mxu0 0
      %2886 = vmatmul.mubr.bf16.gmra.mrb[0].mxu0 %v2737
      %v2887 = vpop.f32.mrb[0].mxu0
      %v2888 = vadd.f32 0.0, %v2887
      %v2889 = vpop.f32.mrb[0].mxu0
      %v2890 = vadd.f32 0.0, %v2889
      %v2891 = vpop.f32.mrb[0].mxu0
      %v2892 = vadd.f32 0.0, %v2891
      %v2893 = vpop.f32.mrb[0].mxu0
      %v2894 = vadd.f32 0.0, %v2893
      %2895 = vmatprep.mubr.bf16.mxu0 0
      %2896 = vmatmul.mubr.bf16.gmra.mrb[0].mxu0 %v2740
      %v2897 = vpop.f32.mrb[0].mxu0
      %v2898 = vadd.f32 0.0, %v2897
      %v2899 = vpop.f32.mrb[0].mxu0
      %v2900 = vadd.f32 0.0, %v2899
      %v2901 = vpop.f32.mrb[0].mxu0
      %v2902 = vadd.f32 0.0, %v2901
      %v2903 = vpop.f32.mrb[0].mxu0
      %v2904 = vadd.f32 0.0, %v2903
      %2905 = vmatprep.mubr.bf16.mxu0 0
      %2906 = vmatmul.mubr.bf16.gmra.mrb[0].mxu0 %v2743
      %v2907 = vpop.f32.mrb[0].mxu0
      %v2908 = vadd.f32 0.0, %v2907
      %v2909 = vpop.f32.mrb[0].mxu0
      %v2910 = vadd.f32 0.0, %v2909
      %v2911 = vpop.f32.mrb[0].mxu0
      %v2912 = vadd.f32 0.0, %v2911
      %v2913 = vpop.f32.mrb[0].mxu0
      %v2914 = vadd.f32 0.0, %v2913
      %2915 = vmatprep.mubr.bf16.mxu0 0
      %2916 = vmatmul.mubr.bf16.gmra.mrb[0].mxu0 %v2746
      %v2917 = vpop.f32.mrb[0].mxu0
      %v2918 = vadd.f32 0.0, %v2917
      %v2919 = vpop.f32.mrb[0].mxu0
      %v2920 = vadd.f32 0.0, %v2919
      %v2921 = vpop.f32.mrb[0].mxu0
      %v2922 = vadd.f32 0.0, %v2921
      %v2923 = vpop.f32.mrb[0].mxu0
      %v2924 = vadd.f32 0.0, %v2923
      %2925 = vmatprep.mubr.bf16.mxu0 0
      %2926 = vmatmul.mubr.bf16.gmra.mrb[0].mxu0 %v2749
      %v2927 = vpop.f32.mrb[0].mxu0
      %v2928 = vadd.f32 0.0, %v2927
      %v2929 = vpop.f32.mrb[0].mxu0
      %v2930 = vadd.f32 0.0, %v2929
      %v2931 = vpop.f32.mrb[0].mxu0
      %v2932 = vadd.f32 0.0, %v2931
      %v2933 = vpop.f32.mrb[0].mxu0
      %v2934 = vadd.f32 0.0, %v2933
      %2935 = vmatprep.mubr.bf16.mxu0 0
      %2936 = vmatmul.mubr.bf16.gmra.mrb[0].mxu0 %v2752
      %v2937 = vpop.f32.mrb[0].mxu0
      %v2938 = vadd.f32 0.0, %v2937
      %v2939 = vpop.f32.mrb[0].mxu0
      %v2940 = vadd.f32 0.0, %v2939
      %v2941 = vpop.f32.mrb[0].mxu0
      %v2942 = vadd.f32 0.0, %v2941
      %v2943 = vpop.f32.mrb[0].mxu0
      %v2944 = vadd.f32 0.0, %v2943
      %2945 = vmatprep.mubr.bf16.mxu0 0
      %2946 = vmatmul.mubr.bf16.gmra.mrb[0].mxu0 %v2755
      %v2947 = vpop.f32.mrb[0].mxu0
      %v2948 = vadd.f32 0.0, %v2947
      %v2949 = vpop.f32.mrb[0].mxu0
      %v2950 = vadd.f32 0.0, %v2949
      %v2951 = vpop.f32.mrb[0].mxu0
      %v2952 = vadd.f32 0.0, %v2951
      %v2953 = vpop.f32.mrb[0].mxu0
      %v2954 = vadd.f32 0.0, %v2953
      %2955 = vdwg.mxu0
      %v2956 = vmax.f32 %v2798, %v2808
      %v2957 = vmax.f32 %v2802, %v2812
      %v2958 = vmax.f32 %v2956, %v2818
      %v2959 = vmax.f32 %v2957, %v2822
      %v2960 = vmax.f32 %v2958, %v2828
      %v2961 = vmax.f32 %v2959, %v2832
      %v2962 = vmax.f32 %v2960, %v2838
      %v2963 = vmax.f32 %v2961, %v2842
      %v2964 = vmax.f32 %v2962, %v2848
      %v2965 = vmax.f32 %v2963, %v2852
      %v2966 = vmax.f32 %v2964, %v2858
      %v2967 = vmax.f32 %v2965, %v2862
      %v2968 = vmax.f32 %v2966, %v2868
      %v2969 = vmax.f32 %v2967, %v2872
      %v2970 = vmax.f32 %v2968, %v2878
      %v2971 = vmax.f32 %v2969, %v2882
      %v2972 = vmax.f32 %v2970, %v2888
      %v2973 = vmax.f32 %v2971, %v2892
      %v2974 = vmax.f32 %v2972, %v2898
      %v2975 = vmax.f32 %v2973, %v2902
      %v2976 = vmax.f32 %v2974, %v2908
      %v2977 = vmax.f32 %v2975, %v2912
      %v2978 = vmax.f32 %v2976, %v2918
      %v2979 = vmax.f32 %v2977, %v2922
      %v2980 = vmax.f32 %v2978, %v2928
      %v2981 = vmax.f32 %v2979, %v2932
      %v2982 = vmax.f32 %v2980, %v2938
      %v2983 = vmax.f32 %v2981, %v2942
      %v2984 = vmax.f32 %v2982, %v2948
      %v2985 = vmax.f32 %v2983, %v2952
      %v2986 = vmax.f32 %v2984, %v2985
      %v2987 = vrot.slane %v2986, 4
      %v2988 = vmax.f32 %v2986, %v2987
      %v2989 = vrot.slane %v2988, 2
      %v2990 = vmax.f32 %v2988, %v2989
      %v2991 = vrot.slane %v2990, 1
      %v2992 = vmax.f32 %v2990, %v2991
      %v2993 = vmax.f32 %v2800, %v2810
      %v2994 = vmax.f32 %v2804, %v2814
      %v2995 = vmax.f32 %v2993, %v2820
      %v2996 = vmax.f32 %v2994, %v2824
      %v2997 = vmax.f32 %v2995, %v2830
      %v2998 = vmax.f32 %v2996, %v2834
      %v2999 = vmax.f32 %v2997, %v2840
      %v3000 = vmax.f32 %v2998, %v2844
      %v3001 = vmax.f32 %v2999, %v2850
      %v3002 = vmax.f32 %v3000, %v2854
      %v3003 = vmax.f32 %v3001, %v2860
      %v3004 = vmax.f32 %v3002, %v2864
      %v3005 = vmax.f32 %v3003, %v2870
      %v3006 = vmax.f32 %v3004, %v2874
      %v3007 = vmax.f32 %v3005, %v2880
      %v3008 = vmax.f32 %v3006, %v2884
      %v3009 = vmax.f32 %v3007, %v2890
      %v3010 = vmax.f32 %v3008, %v2894
      %v3011 = vmax.f32 %v3009, %v2900
      %v3012 = vmax.f32 %v3010, %v2904
      %v3013 = vmax.f32 %v3011, %v2910
      %v3014 = vmax.f32 %v3012, %v2914
      %v3015 = vmax.f32 %v3013, %v2920
      %v3016 = vmax.f32 %v3014, %v2924
      %v3017 = vmax.f32 %v3015, %v2930
      %v3018 = vmax.f32 %v3016, %v2934
      %v3019 = vmax.f32 %v3017, %v2940
      %v3020 = vmax.f32 %v3018, %v2944
      %v3021 = vmax.f32 %v3019, %v2950
      %v3022 = vmax.f32 %v3020, %v2954
      %v3023 = vmax.f32 %v3021, %v3022
      %v3024 = vrot.slane %v3023, 4
      %v3025 = vmax.f32 %v3023, %v3024
      %v3026 = vrot.slane %v3025, 2
      %v3027 = vmax.f32 %v3025, %v3026
      %v3028 = vrot.slane %v3027, 1
      %v3029 = vmax.f32 %v3027, %v3028
      %v3030 = vsub.f32 %v2798, %v2992
      %v3031 = vsub.f32 %v2800, %v3029
      %v3032 = vsub.f32 %v2802, %v2992
      %v3033 = vsub.f32 %v2804, %v3029
      %v3034 = vsub.f32 %v2808, %v2992
      %v3035 = vsub.f32 %v2810, %v3029
      %v3036 = vsub.f32 %v2812, %v2992
      %v3037 = vsub.f32 %v2814, %v3029
      %v3038 = vsub.f32 %v2818, %v2992
      %v3039 = vsub.f32 %v2820, %v3029
      %v3040 = vsub.f32 %v2822, %v2992
      %v3041 = vsub.f32 %v2824, %v3029
      %v3042 = vsub.f32 %v2828, %v2992
      %v3043 = vsub.f32 %v2830, %v3029
      %v3044 = vsub.f32 %v2832, %v2992
      %v3045 = vsub.f32 %v2834, %v3029
      %v3046 = vsub.f32 %v2838, %v2992
      %v3047 = vsub.f32 %v2840, %v3029
      %v3048 = vsub.f32 %v2842, %v2992
      %v3049 = vsub.f32 %v2844, %v3029
      %v3050 = vsub.f32 %v2848, %v2992
      %v3051 = vsub.f32 %v2850, %v3029
      %v3052 = vsub.f32 %v2852, %v2992
      %v3053 = vsub.f32 %v2854, %v3029
      %v3054 = vsub.f32 %v2858, %v2992
      %v3055 = vsub.f32 %v2860, %v3029
      %v3056 = vsub.f32 %v2862, %v2992
      %v3057 = vsub.f32 %v2864, %v3029
      %v3058 = vsub.f32 %v2868, %v2992
      %v3059 = vsub.f32 %v2870, %v3029
      %v3060 = vsub.f32 %v2872, %v2992
      %v3061 = vsub.f32 %v2874, %v3029
      %v3062 = vsub.f32 %v2878, %v2992
      %v3063 = vsub.f32 %v2880, %v3029
      %v3064 = vsub.f32 %v2882, %v2992
      %v3065 = vsub.f32 %v2884, %v3029
      %v3066 = vsub.f32 %v2888, %v2992
      %v3067 = vsub.f32 %v2890, %v3029
      %v3068 = vsub.f32 %v2892, %v2992
      %v3069 = vsub.f32 %v2894, %v3029
      %v3070 = vsub.f32 %v2898, %v2992
      %v3071 = vsub.f32 %v2900, %v3029
      %v3072 = vsub.f32 %v2902, %v2992
      %v3073 = vsub.f32 %v2904, %v3029
      %v3074 = vsub.f32 %v2908, %v2992
      %v3075 = vsub.f32 %v2910, %v3029
      %v3076 = vsub.f32 %v2912, %v2992
      %v3077 = vsub.f32 %v2914, %v3029
      %v3078 = vsub.f32 %v2918, %v2992
      %v3079 = vsub.f32 %v2920, %v3029
      %v3080 = vsub.f32 %v2922, %v2992
      %v3081 = vsub.f32 %v2924, %v3029
      %v3082 = vsub.f32 %v2928, %v2992
      %v3083 = vsub.f32 %v2930, %v3029
      %v3084 = vsub.f32 %v2932, %v2992
      %v3085 = vsub.f32 %v2934, %v3029
      %v3086 = vsub.f32 %v2938, %v2992
      %v3087 = vsub.f32 %v2940, %v3029
      %v3088 = vsub.f32 %v2942, %v2992
      %v3089 = vsub.f32 %v2944, %v3029
      %v3090 = vsub.f32 %v2948, %v2992
      %v3091 = vsub.f32 %v2950, %v3029
      %v3092 = vsub.f32 %v2952, %v2992
      %v3093 = vsub.f32 %v2954, %v3029
      %v3094 = vmul.f32 %v3030, 1.442695
      %v3095 = vpow.pop %v3094
      %v3096 = vmul.f32 %v3031, 1.442695
      %v3097 = vpow.pop %v3096
      %v3098 = vmul.f32 %v3032, 1.442695
      %v3099 = vpow.pop %v3098
      %v3100 = vmul.f32 %v3033, 1.442695
      %v3101 = vpow.pop %v3100
      %v3102 = vmul.f32 %v3034, 1.442695
      %v3103 = vpow.pop %v3102
      %v3104 = vmul.f32 %v3035, 1.442695
      %v3105 = vpow.pop %v3104
      %v3106 = vmul.f32 %v3036, 1.442695
      %v3107 = vpow.pop %v3106
      %v3108 = vmul.f32 %v3037, 1.442695
      %v3109 = vpow.pop %v3108
      %v3110 = vmul.f32 %v3038, 1.442695
      %v3111 = vpow.pop %v3110
      %v3112 = vmul.f32 %v3039, 1.442695
      %v3113 = vpow.pop %v3112
      %v3114 = vmul.f32 %v3040, 1.442695
      %v3115 = vpow.pop %v3114
      %v3116 = vmul.f32 %v3041, 1.442695
      %v3117 = vpow.pop %v3116
      %v3118 = vmul.f32 %v3042, 1.442695
      %v3119 = vpow.pop %v3118
      %v3120 = vmul.f32 %v3043, 1.442695
      %v3121 = vpow.pop %v3120
      %v3122 = vmul.f32 %v3044, 1.442695
      %v3123 = vpow.pop %v3122
      %v3124 = vmul.f32 %v3045, 1.442695
      %v3125 = vpow.pop %v3124
      %v3126 = vmul.f32 %v3046, 1.442695
      %v3127 = vpow.pop %v3126
      %v3128 = vmul.f32 %v3047, 1.442695
      %v3129 = vpow.pop %v3128
      %v3130 = vmul.f32 %v3048, 1.442695
      %v3131 = vpow.pop %v3130
      %v3132 = vmul.f32 %v3049, 1.442695
      %v3133 = vpow.pop %v3132
      %v3134 = vmul.f32 %v3050, 1.442695
      %v3135 = vpow.pop %v3134
      %v3136 = vmul.f32 %v3051, 1.442695
      %v3137 = vpow.pop %v3136
      %v3138 = vmul.f32 %v3052, 1.442695
      %v3139 = vpow.pop %v3138
      %v3140 = vmul.f32 %v3053, 1.442695
      %v3141 = vpow.pop %v3140
      %v3142 = vmul.f32 %v3054, 1.442695
      %v3143 = vpow.pop %v3142
      %v3144 = vmul.f32 %v3055, 1.442695
      %v3145 = vpow.pop %v3144
      %v3146 = vmul.f32 %v3056, 1.442695
      %v3147 = vpow.pop %v3146
      %v3148 = vmul.f32 %v3057, 1.442695
      %v3149 = vpow.pop %v3148
      %v3150 = vmul.f32 %v3058, 1.442695
      %v3151 = vpow.pop %v3150
      %v3152 = vmul.f32 %v3059, 1.442695
      %v3153 = vpow.pop %v3152
      %v3154 = vmul.f32 %v3060, 1.442695
      %v3155 = vpow.pop %v3154
      %v3156 = vmul.f32 %v3061, 1.442695
      %v3157 = vpow.pop %v3156
      %v3158 = vmul.f32 %v3062, 1.442695
      %v3159 = vpow.pop %v3158
      %v3160 = vmul.f32 %v3063, 1.442695
      %v3161 = vpow.pop %v3160
      %v3162 = vmul.f32 %v3064, 1.442695
      %v3163 = vpow.pop %v3162
      %v3164 = vmul.f32 %v3065, 1.442695
      %v3165 = vpow.pop %v3164
      %v3166 = vmul.f32 %v3066, 1.442695
      %v3167 = vpow.pop %v3166
      %v3168 = vmul.f32 %v3067, 1.442695
      %v3169 = vpow.pop %v3168
      %v3170 = vmul.f32 %v3068, 1.442695
      %v3171 = vpow.pop %v3170
      %v3172 = vmul.f32 %v3069, 1.442695
      %v3173 = vpow.pop %v3172
      %v3174 = vmul.f32 %v3070, 1.442695
      %v3175 = vpow.pop %v3174
      %v3176 = vmul.f32 %v3071, 1.442695
      %v3177 = vpow.pop %v3176
      %v3178 = vmul.f32 %v3072, 1.442695
      %v3179 = vpow.pop %v3178
      %v3180 = vmul.f32 %v3073, 1.442695
      %v3181 = vpow.pop %v3180
      %v3182 = vmul.f32 %v3074, 1.442695
      %v3183 = vpow.pop %v3182
      %v3184 = vmul.f32 %v3075, 1.442695
      %v3185 = vpow.pop %v3184
      %v3186 = vmul.f32 %v3076, 1.442695
      %v3187 = vpow.pop %v3186
      %v3188 = vmul.f32 %v3077, 1.442695
      %v3189 = vpow.pop %v3188
      %v3190 = vmul.f32 %v3078, 1.442695
      %v3191 = vpow.pop %v3190
      %v3192 = vmul.f32 %v3079, 1.442695
      %v3193 = vpow.pop %v3192
      %v3194 = vmul.f32 %v3080, 1.442695
      %v3195 = vpow.pop %v3194
      %v3196 = vmul.f32 %v3081, 1.442695
      %v3197 = vpow.pop %v3196
      %v3198 = vmul.f32 %v3082, 1.442695
      %v3199 = vpow.pop %v3198
      %v3200 = vmul.f32 %v3083, 1.442695
      %v3201 = vpow.pop %v3200
      %v3202 = vmul.f32 %v3084, 1.442695
      %v3203 = vpow.pop %v3202
      %v3204 = vmul.f32 %v3085, 1.442695
      %v3205 = vpow.pop %v3204
      %v3206 = vmul.f32 %v3086, 1.442695
      %v3207 = vpow.pop %v3206
      %v3208 = vmul.f32 %v3087, 1.442695
      %v3209 = vpow.pop %v3208
      %v3210 = vmul.f32 %v3088, 1.442695
      %v3211 = vpow.pop %v3210
      %v3212 = vmul.f32 %v3089, 1.442695
      %v3213 = vpow.pop %v3212
      %v3214 = vmul.f32 %v3090, 1.442695
      %v3215 = vpow.pop %v3214
      %v3216 = vmul.f32 %v3091, 1.442695
      %v3217 = vpow.pop %v3216
      %v3218 = vmul.f32 %v3092, 1.442695
      %v3219 = vpow.pop %v3218
      %v3220 = vmul.f32 %v3093, 1.442695
      %v3221 = vpow.pop %v3220
      %v3222 = vadd.f32 %v3095, %v3099
      %v3223 = vadd.f32 %v3222, %v3103
      %v3224 = vadd.f32 %v3223, %v3107
      %v3225 = vadd.f32 %v3224, %v3111
      %v3226 = vadd.f32 %v3225, %v3115
      %v3227 = vadd.f32 %v3226, %v3119
      %v3228 = vadd.f32 %v3227, %v3123
      %v3229 = vadd.f32 %v3228, %v3127
      %v3230 = vadd.f32 %v3229, %v3131
      %v3231 = vadd.f32 %v3230, %v3135
      %v3232 = vadd.f32 %v3231, %v3139
      %v3233 = vadd.f32 %v3232, %v3143
      %v3234 = vadd.f32 %v3233, %v3147
      %v3235 = vadd.f32 %v3234, %v3151
      %v3236 = vadd.f32 %v3235, %v3155
      %v3237 = vadd.f32 %v3236, %v3159
      %v3238 = vadd.f32 %v3237, %v3163
      %v3239 = vadd.f32 %v3238, %v3167
      %v3240 = vadd.f32 %v3239, %v3171
      %v3241 = vadd.f32 %v3240, %v3175
      %v3242 = vadd.f32 %v3241, %v3179
      %v3243 = vadd.f32 %v3242, %v3183
      %v3244 = vadd.f32 %v3243, %v3187
      %v3245 = vadd.f32 %v3244, %v3191
      %v3246 = vadd.f32 %v3245, %v3195
      %v3247 = vadd.f32 %v3246, %v3199
      %v3248 = vadd.f32 %v3247, %v3203
      %v3249 = vadd.f32 %v3248, %v3207
      %v3250 = vadd.f32 %v3249, %v3211
      %v3251 = vadd.f32 %v3250, %v3215
      %v3252 = vadd.f32 %v3251, %v3219
      %v3253 = vrot.slane %v3252, 4
      %v3254 = vadd.f32 %v3252, %v3253
      %v3255 = vrot.slane %v3254, 2
      %v3256 = vadd.f32 %v3254, %v3255
      %v3257 = vrot.slane %v3256, 1
      %v3258 = vadd.f32 %v3256, %v3257
      %v3259 = vadd.f32 %v3097, %v3101
      %v3260 = vadd.f32 %v3259, %v3105
      %v3261 = vadd.f32 %v3260, %v3109
      %v3262 = vadd.f32 %v3261, %v3113
      %v3263 = vadd.f32 %v3262, %v3117
      %v3264 = vadd.f32 %v3263, %v3121
      %v3265 = vadd.f32 %v3264, %v3125
      %v3266 = vadd.f32 %v3265, %v3129
      %v3267 = vadd.f32 %v3266, %v3133
      %v3268 = vadd.f32 %v3267, %v3137
      %v3269 = vadd.f32 %v3268, %v3141
      %v3270 = vadd.f32 %v3269, %v3145
      %v3271 = vadd.f32 %v3270, %v3149
      %v3272 = vadd.f32 %v3271, %v3153
      %v3273 = vadd.f32 %v3272, %v3157
      %v3274 = vadd.f32 %v3273, %v3161
      %v3275 = vadd.f32 %v3274, %v3165
      %v3276 = vadd.f32 %v3275, %v3169
      %v3277 = vadd.f32 %v3276, %v3173
      %v3278 = vadd.f32 %v3277, %v3177
      %v3279 = vadd.f32 %v3278, %v3181
      %v3280 = vadd.f32 %v3279, %v3185
      %v3281 = vadd.f32 %v3280, %v3189
      %v3282 = vadd.f32 %v3281, %v3193
      %v3283 = vadd.f32 %v3282, %v3197
      %v3284 = vadd.f32 %v3283, %v3201
      %v3285 = vadd.f32 %v3284, %v3205
      %v3286 = vadd.f32 %v3285, %v3209
      %v3287 = vadd.f32 %v3286, %v3213
      %v3288 = vadd.f32 %v3287, %v3217
      %v3289 = vadd.f32 %v3288, %v3221
      %v3290 = vrot.slane %v3289, 4
      %v3291 = vadd.f32 %v3289, %v3290
      %v3292 = vrot.slane %v3291, 2
      %v3293 = vadd.f32 %v3291, %v3292
      %v3294 = vrot.slane %v3293, 1
      %v3295 = vadd.f32 %v3293, %v3294
      %v3296 = vpack.c.bf16 %v3099, %v3095
      %v3297 = vpack.c.bf16 %v3101, %v3097
      %v3298 = vpack.c.bf16 %v3107, %v3103
      %v3299 = vpack.c.bf16 %v3109, %v3105
      %v3300 = vpack.c.bf16 %v3115, %v3111
      %v3301 = vpack.c.bf16 %v3117, %v3113
      %v3302 = vpack.c.bf16 %v3123, %v3119
      %v3303 = vpack.c.bf16 %v3125, %v3121
      %v3304 = vpack.c.bf16 %v3131, %v3127
      %v3305 = vpack.c.bf16 %v3133, %v3129
      %v3306 = vpack.c.bf16 %v3139, %v3135
      %v3307 = vpack.c.bf16 %v3141, %v3137
      %v3308 = vpack.c.bf16 %v3147, %v3143
      %v3309 = vpack.c.bf16 %v3149, %v3145
      %v3310 = vpack.c.bf16 %v3155, %v3151
      %v3311 = vpack.c.bf16 %v3157, %v3153
      %v3312 = vpack.c.bf16 %v3163, %v3159
      %v3313 = vpack.c.bf16 %v3165, %v3161
      %v3314 = vpack.c.bf16 %v3171, %v3167
      %v3315 = vpack.c.bf16 %v3173, %v3169
      %v3316 = vpack.c.bf16 %v3179, %v3175
      %v3317 = vpack.c.bf16 %v3181, %v3177
      %v3318 = vpack.c.bf16 %v3187, %v3183
      %v3319 = vpack.c.bf16 %v3189, %v3185
      %v3320 = vpack.c.bf16 %v3195, %v3191
      %v3321 = vpack.c.bf16 %v3197, %v3193
      %v3322 = vpack.c.bf16 %v3203, %v3199
      %v3323 = vpack.c.bf16 %v3205, %v3201
      %v3324 = vpack.c.bf16 %v3211, %v3207
      %v3325 = vpack.c.bf16 %v3213, %v3209
      %v3326 = vpack.c.bf16 %v3219, %v3215
      %v3327 = vpack.c.bf16 %v3221, %v3217
      %3328 = vmatprep.subr.bf16.mxu0 %v3297
      %3329 = vmatpush1.bf16.msra.mxu0 %v3296
      %3330 = vmatprep.subr.bf16.mxu0 %v3299
      %3331 = vmatpush1.bf16.msra.mxu0 %v3298
      %3332 = vmatprep.subr.bf16.mxu0 %v3301
      %3333 = vmatpush1.bf16.msra.mxu0 %v3300
      %3334 = vmatprep.subr.bf16.mxu0 %v3303
      %3335 = vmatpush1.bf16.msra.mxu0 %v3302
      %3336 = vmatprep.subr.bf16.mxu0 %v3305
      %3337 = vmatpush1.bf16.msra.mxu0 %v3304
      %3338 = vmatprep.subr.bf16.mxu0 %v3307
      %3339 = vmatpush1.bf16.msra.mxu0 %v3306
      %3340 = vmatprep.subr.bf16.mxu0 %v3309
      %3341 = vmatpush1.bf16.msra.mxu0 %v3308
      %3342 = vmatprep.subr.bf16.mxu0 %v3311
      %3343 = vmatpush1.bf16.msra.mxu0 %v3310
      %3344 = vmatprep.subr.bf16.mxu0 %v3313
      %3345 = vmatpush1.bf16.msra.mxu0 %v3312
      %3346 = vmatprep.subr.bf16.mxu0 %v3315
      %3347 = vmatpush1.bf16.msra.mxu0 %v3314
      %3348 = vmatprep.subr.bf16.mxu0 %v3317
      %3349 = vmatpush1.bf16.msra.mxu0 %v3316
      %3350 = vmatprep.subr.bf16.mxu0 %v3319
      %3351 = vmatpush1.bf16.msra.mxu0 %v3318
      %3352 = vmatprep.subr.bf16.mxu0 %v3321
      %3353 = vmatpush1.bf16.msra.mxu0 %v3320
      %3354 = vmatprep.subr.bf16.mxu0 %v3323
      %3355 = vmatpush1.bf16.msra.mxu0 %v3322
      %3356 = vmatprep.subr.bf16.mxu0 %v3325
      %3357 = vmatpush1.bf16.msra.mxu0 %v3324
      %3358 = vmatprep.subr.bf16.mxu0 %v3327
      %3359 = vmatpush1.bf16.msra.mxu0 %v3326
      %3360 = vmatprep.mubr.bf16.mxu0 %v2676
      %3361 = vmatmul.mubr.bf16.gmra.mrb[0].mxu0 %v2675
      %v3362 = vpop.f32.mrb[0].mxu0
      %v3363 = vadd.f32 0.0, %v3362
      %v3364 = vpop.f32.mrb[0].mxu0
      %v3365 = vadd.f32 0.0, %v3364
      %v3366 = vpop.f32.mrb[0].mxu0
      %v3367 = vpop.f32.mrb[0].mxu0
      %3368 = vdwg.mxu0
      %v3369 = vrcp.pop %v3258
      %v3370 = vrcp.pop %v3295
      %v3371 = vmul.f32 %v3363, %v3369
      %v3372 = vmul.f32 %v3365, %v3370
      %3373 = vst [vmem:[#allocation2 + $0x30] sm:$0xff] %v3371
      %3374 = vst [vmem:[#allocation2 + $0x38] sm:$0xff] %v3372
      %v3375 = vld [vmem:[#allocation2] sm:$0xff]
      %v3376 = vld [vmem:[#allocation2 + $0x8] sm:$0xff]
      %v3377 = vld [vmem:[#allocation2 + $0x10] sm:$0xff]
      %v3378 = vld [vmem:[#allocation2 + $0x18] sm:$0xff]
      %v3379 = vld [vmem:[#allocation2 + $0x20] sm:$0xff]
      %v3380 = vld [vmem:[#allocation2 + $0x28] sm:$0xff]
      %v3381 = vld [vmem:[#allocation2 + $0x30] sm:$0xff]
      %v3382 = vld [vmem:[#allocation2 + $0x38] sm:$0xff]
      %v3383 = vpack.c.bf16 %v3377, %v3375
      %v3384 = vpack.c.bf16 %v3378, %v3376
      %v3385 = vpack.c.bf16 %v3381, %v3379
      %v3386 = vpack.c.bf16 %v3382, %v3380
      %3388 = vset.pattern.permute.xlu0 0
      %3389 = vperm.xlu0 %3388, %v289
      %v3390 = vpop.permute.xlu0 %3389
      %3393 = vset.pattern.permute.xlu0 0
      %3394 = vperm.xlu0 %3393, %v290
      %v3395 = vpop.permute.xlu0 %3394
      %3398 = vset.pattern.permute.xlu0 0
      %3399 = vperm.xlu0 %3398, %v291
      %v3400 = vpop.permute.xlu0 %3399
      %3403 = vset.pattern.permute.xlu0 0
      %3404 = vperm.xlu0 %3403, %v292
      %v3405 = vpop.permute.xlu0 %3404
      %v3408 = vsel %vm381, %v275, 0
      %v3411 = vsel %vm381, %v276, 0
      %3413 = vmatprep.subr.bf16.mxu0 %v3384
      %3414 = vmatpush1.bf16.msra.mxu0 %v3383
      %3415 = vmatprep.subr.bf16.mxu0 %v3386
      %3416 = vmatpush1.bf16.msra.mxu0 %v3385
      %3417 = vmatprep.subr.bf16.mxu0 0
      %3418 = vmatpush1.bf16.msra.mxu0 0
      %3419 = vmatprep.subr.bf16.mxu0 0
      %3420 = vmatpush1.bf16.msra.mxu0 0
      %3421 = vmatprep.subr.bf16.mxu0 0
      %3422 = vmatpush1.bf16.msra.mxu0 0
      %3423 = vmatprep.subr.bf16.mxu0 0
      %3424 = vmatpush1.bf16.msra.mxu0 0
      %3425 = vmatprep.subr.bf16.mxu0 0
      %3426 = vmatpush1.bf16.msra.mxu0 0
      %3427 = vmatprep.subr.bf16.mxu0 0
      %3428 = vmatpush1.bf16.msra.mxu0 0
      %3429 = vmatprep.subr.bf16.mxu0 0
      %3430 = vmatpush1.bf16.msra.mxu0 0
      %3431 = vmatprep.subr.bf16.mxu0 0
      %3432 = vmatpush1.bf16.msra.mxu0 0
      %3433 = vmatprep.subr.bf16.mxu0 0
      %3434 = vmatpush1.bf16.msra.mxu0 0
      %3435 = vmatprep.subr.bf16.mxu0 0
      %3436 = vmatpush1.bf16.msra.mxu0 0
      %3437 = vmatprep.subr.bf16.mxu0 0
      %3438 = vmatpush1.bf16.msra.mxu0 0
      %3439 = vmatprep.subr.bf16.mxu0 0
      %3440 = vmatpush1.bf16.msra.mxu0 0
      %3441 = vmatprep.subr.bf16.mxu0 0
      %3442 = vmatpush1.bf16.msra.mxu0 0
      %3443 = vmatprep.subr.bf16.mxu0 0
      %3444 = vmatpush1.bf16.msra.mxu0 0
      %3445 = vmatprep.mubr.bf16.mxu0 0
      %3446 = vmatmul.mubr.bf16.gmra.mrb[0].mxu0 %v3408
      %v3447 = vpop.f32.mrb[0].mxu0
      %v3448 = vadd.f32 %v3390, %v3447
      %v3449 = vpop.f32.mrb[0].mxu0
      %v3450 = vadd.f32 %v3390, %v3449
      %v3451 = vpop.f32.mrb[0].mxu0
      %v3452 = vadd.f32 %v3395, %v3451
      %v3453 = vpop.f32.mrb[0].mxu0
      %v3454 = vadd.f32 %v3395, %v3453
      %3455 = vmatprep.mubr.bf16.mxu0 0
      %3456 = vmatmul.mubr.bf16.gmra.mrb[0].mxu0 %v3411
      %v3457 = vpop.f32.mrb[0].mxu0
      %v3458 = vadd.f32 %v3400, %v3457
      %v3459 = vpop.f32.mrb[0].mxu0
      %v3460 = vadd.f32 %v3400, %v3459
      %v3461 = vpop.f32.mrb[0].mxu0
      %v3462 = vadd.f32 %v3405, %v3461
      %v3463 = vpop.f32.mrb[0].mxu0
      %v3464 = vadd.f32 %v3405, %v3463
      %3465 = vdwg.mxu0
      %3466 = vst [vmem:[%s251] sm:$0xff] %v3448
      %3467 = vst [vmem:[%s251 + $0x8] sm:$0xff] %v3450
      %3468 = vst [vmem:[%s251 + $0x10] sm:$0xff] %v3452
      %3469 = vst [vmem:[%s251 + $0x18] sm:$0xff] %v3454
      %3470 = vst [vmem:[%s251 + $0x20] sm:$0xff] %v3458
      %3471 = vst [vmem:[%s251 + $0x28] sm:$0xff] %v3460
      %3472 = vst [vmem:[%s251 + $0x30] sm:$0xff] %v3462
      %3473 = vst [vmem:[%s251 + $0x38] sm:$0xff] %v3464
      %p3474 = scmp.lt.s32.totalorder %s17, 1
      %s3475 = scalar_select %p3474, %s17, 1
      %s3476 = smul.addr %s3475, 8
      %s3477 = smul.addr %s3476, 8
      %s3478 = scalar_lea.vmem %s6, %s3477
      // Predicated region
      $region45: #{mhsa_block_forward.1} parent=43 // pred_check
        %p3479 = pneg %p166
      $region46: #{mhsa_block_forward.1} parent=43 // pred_check_branch
        %3481 = sbr.rel (%p3479) target = $region48
      $region47: #{mhsa_block_forward.1} parent=43 // pred_region
        _
      $region48: #{mhsa_block_forward.1} parent=43 // pred_fallthru
        _
    $region44: #{mhsa_block_forward.1} parent=5 // pred_fallthru
      _
    %p3482 = scmp.le.s32.totalorder 2, %s12
    // Predicated region
    $region49: #{mhsa_block_forward.1} parent=5 // pred_check
      %p3483 = pneg %p3482
    $region50: #{mhsa_block_forward.1} parent=5 // pred_check_branch
      %3485 = sbr.rel (%p3483) target = $region52
    $region51: #{mhsa_block_forward.1} parent=5 // pred_region
      %s3486 = ssub.s32 %s12, 2
      // Predicated region
      $region53: #{mhsa_block_forward.1} parent=51 // pred_check
        %p3487 = pneg %p172
      $region54: #{mhsa_block_forward.1} parent=51 // pred_check_branch
        %3489 = sbr.rel (%p3487) target = $region56
      $region55: #{mhsa_block_forward.1} parent=51 // pred_region
        %p3490 = scmp.lt.s32.totalorder %s18, 1
        %s3491 = scalar_select %p3490, %s18, 1
        %s3492 = smul.addr %s3491, 8
        %s3493 = smul.addr %s3492, 8
        %s3494 = scalar_lea.vmem %s6, %s3493
      $region56: #{mhsa_block_forward.1} parent=51 // pred_fallthru
        _
    $region52: #{mhsa_block_forward.1} parent=5 // pred_fallthru
      _
  $region6: #{mhsa_block_forward.1} parent=0 // loop_footer
    %s16 = sadd.s32 1, %s12
  $region7: #{mhsa_block_forward.1} parent=0 // loop_footer_branch
    %11 = sbr.rel target = $region3
  $region8: #{mhsa_block_forward.1} parent=0 // loop_exit
    _

</llo_original>
